<compile_context>
chip_gen: v7x
topology: tpu7x:2x2x1
jax: 0.10.0
libtpu: 0.0.40
codegen_flags: <defaults>
</compile_context>

<pallas_src>
import math

import jax
import jax.numpy as jnp
from jax import lax
from jax.experimental import pallas as pl
from jax.experimental.pallas import tpu as pltpu


def _relu(x):
    return jnp.maximum(x, 0.0)


def inception_kernel(x_ref,             # (1, H+2, W+2, Cin) bf16, (-1e30)-padded
                     wf_ref, bf_ref,    # fused 1x1: (Cin, c1+c2m+c3m) bf16, (1, .) f32
                     w2b_ref, b2b_ref,  # (3, 3*c2m, c2o) bf16, (1, c2o) f32
                     w3b_ref, b3b_ref,  # (5, 5*c3m, c3o) bf16, (1, c3o) f32
                     w4_ref, b4_ref,    # (Cin, c4) bf16, (1, c4) f32
                     out_ref,           # (1, H, W, Cpad) bf16  (Cpad % 128 == 0)
                     h2_ref, h3_ref):   # bf16 scratch: (H+2,W+2,c2m), (H+4,W+4,c3m)
    H = out_ref.shape[1]
    W = out_ref.shape[2]
    x = x_ref[0]                                   # (H+2, W+2, Cin) bf16
    Cin = x.shape[-1]

    c2m = h2_ref.shape[-1]
    c3m = h3_ref.shape[-1]
    c1 = wf_ref.shape[1] - c2m - c3m
    c2o = w2b_ref.shape[-1]
    c3o = w3b_ref.shape[-1]
    c4 = w4_ref.shape[-1]

    # ---------- fused 1x1 convs (branches 1 / 2a / 3a), single MXU pass ------
    xi = x[1:1 + H, 1:1 + W, :].reshape(H * W, Cin)          # interior only
    f = _relu(jnp.dot(xi, wf_ref[...],
                      preferred_element_type=jnp.float32) + bf_ref[...])

    p1 = f[:, :c1]                                            # (H*W, c1) f32

    # ---------- zero only the never-written scratch halos ---------------------
    # Invariant: the interior is fully overwritten every grid step; the halo
    # is never written by any step, so these small stores keep it zero.
    h2_ref[0:1, :, :] = jnp.zeros((1, W + 2, c2m), h2_ref.dtype)
    h2_ref[H + 1:H + 2, :, :] = jnp.zeros((1, W + 2, c2m), h2_ref.dtype)
    h2_ref[:, 0:1, :] = jnp.zeros((H + 2, 1, c2m), h2_ref.dtype)
    h2_ref[:, W + 1:W + 2, :] = jnp.zeros((H + 2, 1, c2m), h2_ref.dtype)

    h3_ref[0:2, :, :] = jnp.zeros((2, W + 4, c3m), h3_ref.dtype)
    h3_ref[H + 2:H + 4, :, :] = jnp.zeros((2, W + 4, c3m), h3_ref.dtype)
    h3_ref[:, 0:2, :] = jnp.zeros((H + 4, 2, c3m), h3_ref.dtype)
    h3_ref[:, W + 2:W + 4, :] = jnp.zeros((H + 4, 2, c3m), h3_ref.dtype)

    # ---------- branch 2: 3x3 "same" conv via row-grouped im2col --------------
    h2_ref[1:1 + H, 1:1 + W, :] = (
        f[:, c1:c1 + c2m].reshape(H, W, c2m).astype(h2_ref.dtype))
    h2 = h2_ref[...]                                          # (H+2, W+2, c2m) bf16
    acc2 = None
    for dy in range(3):
        rowp = jnp.concatenate(
            [h2[dy:dy + H, dx:dx + W, :] for dx in range(3)],
            axis=-1).reshape(H * W, 3 * c2m)
        part = jnp.dot(rowp, w2b_ref[dy],
                       preferred_element_type=jnp.float32)
        acc2 = part if acc2 is None else acc2 + part
    p2 = _relu(acc2 + b2b_ref[...])                           # (H*W, c2o) f32

    # ---------- branch 3: 5x5 "same" conv via row-grouped im2col --------------
    h3_ref[2:2 + H, 2:2 + W, :] = (
        f[:, c1 + c2m:].reshape(H, W, c3m).astype(h3_ref.dtype))
    h3 = h3_ref[...]                                          # (H+4, W+4, c3m) bf16
    acc3 = None
    for dy in range(5):
        rowp = jnp.concatenate(
            [h3[dy:dy + H, dx:dx + W, :] for dx in range(5)],
            axis=-1).reshape(H * W, 5 * c3m)
        part = jnp.dot(rowp, w3b_ref[dy],
                       preferred_element_type=jnp.float32)
        acc3 = part if acc3 is None else acc3 + part
    p3 = _relu(acc3 + b3b_ref[...])                           # (H*W, c3o) f32

    # ---------- branch 4: separable 3x3 max-pool (stride 1) -> 1x1 conv -------
    # x's halo holds ~-1e30, so it behaves as -inf for the max.
    rmax = jnp.maximum(jnp.maximum(x[:, 0:W, :], x[:, 1:1 + W, :]),
                       x[:, 2:2 + W, :])                      # (H+2, W, Cin)
    mp = jnp.maximum(jnp.maximum(rmax[0:H], rmax[1:1 + H]),
                     rmax[2:2 + H])                           # (H, W, Cin)
    p4 = _relu(jnp.dot(mp.reshape(H * W, Cin), w4_ref[...],
                       preferred_element_type=jnp.float32) + b4_ref[...])

    # ---------- lane-dense bf16 output write ----------------------------------
    Cpad = out_ref.shape[-1]
    Ctot = c1 + c2o + c3o + c4
    parts = [p1.astype(out_ref.dtype), p2.astype(out_ref.dtype),
             p3.astype(out_ref.dtype), p4.astype(out_ref.dtype)]
    if Cpad > Ctot:
        parts.append(jnp.zeros((H * W, Cpad - Ctot), out_ref.dtype))
    out_ref[0] = jnp.concatenate(parts, axis=-1).reshape(H, W, Cpad)


def inception_block(x_nchw, params):
    (w1, b1, w2a, b2a, w2b, b2b, w3a, b3a, w3b, b3b, w4, b4) = params
    N, Cin, H, W = x_nchw.shape

    c1 = w1.shape[1]
    c2m, c2o = w2b.shape[2], w2b.shape[3]
    c3m, c3o = w3b.shape[2], w3b.shape[3]
    c4 = w4.shape[1]
    Ctot = c1 + c2o + c3o + c4
    Cpad = ((Ctot + 127) // 128) * 128

    # NHWC, bf16 compute dtype.  Pad spatially by 1 with a huge negative value:
    # only the max-pool reads the halo, so this is its (approx) -inf padding.
    x = jnp.transpose(x_nchw, (0, 2, 3, 1)).astype(jnp.bfloat16)
    xpad = jnp.pad(x, ((0, 0), (1, 1), (1, 1), (0, 0)),
                   mode="constant", constant_values=-1e30)

    # Fused 1x1 weights (branches 1 / 2a / 3a); row-grouped im2col weights.
    wf = jnp.concatenate([w1, w2a, w3a], axis=1).astype(jnp.bfloat16)
    bf = jnp.concatenate([b1, b2a, b3a], axis=1).astype(jnp.float32)
    w2b_r = w2b.reshape(3, 3 * c2m, c2o).astype(jnp.bfloat16)
    w3b_r = w3b.reshape(5, 5 * c3m, c3o).astype(jnp.bfloat16)
    w4_b = w4.astype(jnp.bfloat16)
    b2b_f = b2b.astype(jnp.float32)
    b3b_f = b3b.astype(jnp.float32)
    b4_f = b4.astype(jnp.float32)

    def full_spec(shape):
        nd = len(shape)
        # TODO(synk): pipeline_mode=pl.Buffered(1) would single-buffer these
        # grid-invariant weights (VMEM headroom on v7x).
        return pl.BlockSpec(shape, lambda n, _nd=nd: (0,) * _nd)

    def nbytes(shape, dtype):
        return math.prod(shape) * jnp.dtype(dtype).itemsize

    # Per-step VMEM budget: double-buffered in/out blocks + weights, scratch,
    # and the main in-kernel temporaries; 2x headroom, clamped to [32, 128] MiB.
    est = (
        2 * nbytes((H + 2, W + 2, Cin), jnp.bfloat16)
        + 2 * nbytes((H, W, Cpad), jnp.bfloat16)
        + 2 * sum(nbytes(a.shape, a.dtype) for a in
                  (wf, bf, w2b_r, b2b_f, w3b_r, b3b_f, w4_b, b4_f))
        + nbytes((H + 2, W + 2, c2m), jnp.bfloat16)          # h2 scratch
        + nbytes((H + 4, W + 4, c3m), jnp.bfloat16)          # h3 scratch
        + nbytes((H * W, c1 + c2m + c3m), jnp.float32)       # fused 1x1 result
        + nbytes((H * W, 5 * c3m), jnp.bfloat16)             # largest row patch
        + nbytes((H * W, c2o + c3o), jnp.float32)            # branch accumulators
        + nbytes((H + 2, W, Cin), jnp.bfloat16)              # separable-pool temp
        + nbytes((H * W, Cpad), jnp.bfloat16)                # output concat temp
    )
    vmem_limit = int(min(128 * 1024 * 1024, max(32 * 1024 * 1024, 2 * est)))

    out_nhwc = pl.pallas_call(
        inception_kernel,
        out_shape=jax.ShapeDtypeStruct((N, H, W, Cpad), jnp.bfloat16),
        grid_spec=pltpu.PrefetchScalarGridSpec(
            num_scalar_prefetch=0,
            grid=(N,),
            in_specs=[
                pl.BlockSpec((1, H + 2, W + 2, Cin), lambda n: (n, 0, 0, 0)),
                full_spec(wf.shape), full_spec(bf.shape),
                full_spec(w2b_r.shape), full_spec(b2b_f.shape),
                full_spec(w3b_r.shape), full_spec(b3b_f.shape),
                full_spec(w4_b.shape), full_spec(b4_f.shape),
            ],
            out_specs=pl.BlockSpec((1, H, W, Cpad), lambda n: (n, 0, 0, 0)),
            scratch_shapes=[
                pltpu.VMEM((H + 2, W + 2, c2m), jnp.bfloat16),
                pltpu.VMEM((H + 4, W + 4, c3m), jnp.bfloat16),
            ],
        ),
        compiler_params=pltpu.CompilerParams(
            dimension_semantics=("parallel",),
            vmem_limit_bytes=vmem_limit),
    )(xpad, wf, bf, w2b_r, b2b_f, w3b_r, b3b_f, w4_b, b4_f)

    out = out_nhwc[..., :Ctot]                       # drop lane padding (bf16)
    return jnp.transpose(out, (0, 3, 1, 2)).astype(jnp.float32)   # -> NCHW f32


def init_params(key, in_channels, c1, c2, c3, c4):
    ks = jax.random.split(key, 12)
    s = 0.1

    def w(k, shape):
        return (s * jax.random.normal(k, shape)).astype(jnp.float32)

    return (
        w(ks[0], (in_channels, c1)),        w(ks[1], (1, c1)),
        w(ks[2], (in_channels, c2[0])),     w(ks[3], (1, c2[0])),
        w(ks[4], (3, 3, c2[0], c2[1])),     w(ks[5], (1, c2[1])),
        w(ks[6], (in_channels, c3[0])),     w(ks[7], (1, c3[0])),
        w(ks[8], (5, 5, c3[0], c3[1])),     w(ks[9], (1, c3[1])),
        w(ks[10], (in_channels, c4)),       w(ks[11], (1, c4)),
    )


def _reference(x_nchw, params):
    # pure-JAX f32 reference (XLA convs) used only to sanity-check the kernel
    (w1, b1, w2a, b2a, w2b, b2b, w3a, b3a, w3b, b3b, w4, b4) = params
    x = jnp.transpose(x_nchw, (0, 2, 3, 1)).astype(jnp.float32)  # NHWC
    dn = lax.conv_dimension_numbers(x.shape, (1, 1, x.shape[-1], 1),
                                    ("NHWC", "HWIO", "NHWC"))

    def conv(inp, w, b, pad):
        return lax.conv_general_dilated(
            inp, w, (1, 1), pad, dimension_numbers=dn) + b.reshape(1, 1, 1, -1)

    relu = lambda v: jnp.maximum(v, 0.0)
    w1_ = w1.reshape(1, 1, *w1.shape)
    w2a_ = w2a.reshape(1, 1, *w2a.shape)
    w3a_ = w3a.reshape(1, 1, *w3a.shape)
    w4_ = w4.reshape(1, 1, *w4.shape)

    p1 = relu(conv(x, w1_, b1, "VALID"))
    p2 = relu(conv(relu(conv(x, w2a_, b2a, "VALID")), w2b, b2b, "SAME"))
    p3 = relu(conv(relu(conv(x, w3a_, b3a, "VALID")), w3b, b3b, "SAME"))
    mp = lax.reduce_window(x, -jnp.inf, lax.max,
                           (1, 3, 3, 1), (1, 1, 1, 1), "SAME")
    p4 = relu(conv(mp, w4_, b4, "VALID"))
    out = jnp.concatenate([p1, p2, p3, p4], axis=-1)
    return jnp.transpose(out, (0, 3, 1, 2))                      # NCHW


if __name__ == "__main__":
    key = jax.random.PRNGKey(0)
    kx, kp = jax.random.split(key)

    N, Cin, H, W = 2, 4, 16, 16
    c1, c2, c3, c4 = 8, (8, 16), (4, 8), 8

    x = jax.random.normal(kx, (N, Cin, H, W), dtype=jnp.float32)
    params = init_params(kp, Cin, c1, c2, c3, c4)

    out = inception_block(x, params)
    out = jax.block_until_ready(out)

    ref = jax.block_until_ready(_reference(x, params))
    assert out.shape == (N, c1 + c2[1] + c3[1] + c4, H, W), out.shape
    # bf16 matmul inputs (f32 accumulation) + bf16 output store -> loosened tol.
    assert jnp.allclose(out, ref, atol=4e-2, rtol=3e-2), \
        float(jnp.max(jnp.abs(out - ref)))

    print("KERNEL_OK")
</pallas_src>

<mosaic_0001>
module attributes {stable_mosaic.version = 11 : i64} {
  func.func @inception_kernel(%arg0: i32, %arg1: memref<1x18x18x4xbf16, #tpu.memory_space<vmem>>, %arg2: memref<4x20xbf16, #tpu.memory_space<vmem>>, %arg3: memref<1x20xf32, #tpu.memory_space<vmem>>, %arg4: memref<3x24x16xbf16, #tpu.memory_space<vmem>>, %arg5: memref<1x16xf32, #tpu.memory_space<vmem>>, %arg6: memref<5x20x8xbf16, #tpu.memory_space<vmem>>, %arg7: memref<1x8xf32, #tpu.memory_space<vmem>>, %arg8: memref<4x8xbf16, #tpu.memory_space<vmem>>, %arg9: memref<1x8xf32, #tpu.memory_space<vmem>>, %arg10: memref<1x16x16x128xbf16, #tpu.memory_space<vmem>>, %arg11: memref<18x18x8xbf16, #tpu.memory_space<vmem>>, %arg12: memref<20x20x4xbf16, #tpu.memory_space<vmem>>) attributes {dimension_semantics = [#tpu.dimension_semantics<parallel>], iteration_bounds = array<i64: 2>, scalar_prefetch = 0 : i64, scratch_operands = 2 : i64, tpu.core_type = #tpu.core_type<tc>, window_params = [{transform_indices = @transform_0, window_bounds = array<i64: 1, 18, 18, 4>}, {pipeline_mode = #tpu.pipeline_mode<synchronous>, transform_indices = @transform_1, window_bounds = array<i64: 4, 20>}, {pipeline_mode = #tpu.pipeline_mode<synchronous>, transform_indices = @transform_2, window_bounds = array<i64: 1, 20>}, {pipeline_mode = #tpu.pipeline_mode<synchronous>, transform_indices = @transform_3, window_bounds = array<i64: 3, 24, 16>}, {pipeline_mode = #tpu.pipeline_mode<synchronous>, transform_indices = @transform_4, window_bounds = array<i64: 1, 16>}, {pipeline_mode = #tpu.pipeline_mode<synchronous>, transform_indices = @transform_5, window_bounds = array<i64: 5, 20, 8>}, {pipeline_mode = #tpu.pipeline_mode<synchronous>, transform_indices = @transform_6, window_bounds = array<i64: 1, 8>}, {pipeline_mode = #tpu.pipeline_mode<synchronous>, transform_indices = @transform_7, window_bounds = array<i64: 4, 8>}, {pipeline_mode = #tpu.pipeline_mode<synchronous>, transform_indices = @transform_8, window_bounds = array<i64: 1, 8>}, {transform_indices = @transform_9, window_bounds = array<i64: 1, 16, 16, 128>}]} {
    %c0 = arith.constant 0 : index
    %c0_0 = arith.constant 0 : index
    %c0_1 = arith.constant 0 : index
    %c0_2 = arith.constant 0 : index
    %0 = vector.load %arg1[%c0, %c0_0, %c0_1, %c0_2] : memref<1x18x18x4xbf16, #tpu.memory_space<vmem>>, vector<1x18x18x4xbf16>
    %1 = vector.shape_cast %0 : vector<1x18x18x4xbf16> to vector<18x18x4xbf16>
    %2 = vector.extract_strided_slice %1 {offsets = [1, 1, 0], sizes = [16, 16, 4], strides = [1, 1, 1]} : vector<18x18x4xbf16> to vector<16x16x4xbf16>
    %3 = vector.shape_cast %2 : vector<16x16x4xbf16> to vector<256x4xbf16>
    %c0_3 = arith.constant 0 : index
    %c0_4 = arith.constant 0 : index
    %4 = vector.load %arg2[%c0_3, %c0_4] : memref<4x20xbf16, #tpu.memory_space<vmem>>, vector<4x20xbf16>
    %cst = arith.constant dense<0.000000e+00> : vector<256x20xf32>
    %5 = tpu.matmul %3, %4, %cst {dimension_numbers = #tpu.dot_dimension_numbers<[1], [0], [0], [1], [0, 0, 1, 1], [], []>} : vector<256x4xbf16>, vector<4x20xbf16>, vector<256x20xf32> -> vector<256x20xf32>
    %c0_5 = arith.constant 0 : index
    %c0_6 = arith.constant 0 : index
    %6 = vector.load %arg3[%c0_5, %c0_6] : memref<1x20xf32, #tpu.memory_space<vmem>>, vector<1x20xf32>
    %7 = vector.broadcast %6 : vector<1x20xf32> to vector<256x20xf32>
    %8 = arith.addf %5, %7 : vector<256x20xf32>
    %cst_7 = arith.constant 0.000000e+00 : f32
    %9 = vector.broadcast %cst_7 : f32 to vector<256x20xf32>
    %10 = arith.maximumf %8, %9 : vector<256x20xf32>
    %11 = vector.extract_strided_slice %10 {offsets = [0, 0], sizes = [256, 8], strides = [1, 1]} : vector<256x20xf32> to vector<256x8xf32>
    %cst_8 = arith.constant 0.000000e+00 : bf16
    %12 = vector.broadcast %cst_8 : bf16 to vector<1x18x8xbf16>
    %c0_9 = arith.constant 0 : index
    %c0_10 = arith.constant 0 : index
    %c0_11 = arith.constant 0 : index
    %13 = vector.load %arg11[%c0_9, %c0_10, %c0_11] : memref<18x18x8xbf16, #tpu.memory_space<vmem>>, vector<1x18x8xbf16>
    tpu.vector_store %arg11[%c0_9, %c0_10, %c0_11], %12 {strides = array<i32>} : memref<18x18x8xbf16, #tpu.memory_space<vmem>>, vector<1x18x8xbf16>,
    %cst_12 = arith.constant 0.000000e+00 : bf16
    %14 = vector.broadcast %cst_12 : bf16 to vector<1x18x8xbf16>
    %c17 = arith.constant 17 : index
    %c0_13 = arith.constant 0 : index
    %c0_14 = arith.constant 0 : index
    %15 = vector.load %arg11[%c17, %c0_13, %c0_14] : memref<18x18x8xbf16, #tpu.memory_space<vmem>>, vector<1x18x8xbf16>
    tpu.vector_store %arg11[%c17, %c0_13, %c0_14], %14 {strides = array<i32>} : memref<18x18x8xbf16, #tpu.memory_space<vmem>>, vector<1x18x8xbf16>,
    %cst_15 = arith.constant 0.000000e+00 : bf16
    %16 = vector.broadcast %cst_15 : bf16 to vector<18x1x8xbf16>
    %c0_16 = arith.constant 0 : index
    %c0_17 = arith.constant 0 : index
    %c0_18 = arith.constant 0 : index
    %17 = vector.load %arg11[%c0_16, %c0_17, %c0_18] : memref<18x18x8xbf16, #tpu.memory_space<vmem>>, vector<18x1x8xbf16>
    tpu.vector_store %arg11[%c0_16, %c0_17, %c0_18], %16 {strides = array<i32>} : memref<18x18x8xbf16, #tpu.memory_space<vmem>>, vector<18x1x8xbf16>,
    %cst_19 = arith.constant 0.000000e+00 : bf16
    %18 = vector.broadcast %cst_19 : bf16 to vector<18x1x8xbf16>
    %c0_20 = arith.constant 0 : index
    %c17_21 = arith.constant 17 : index
    %c0_22 = arith.constant 0 : index
    %19 = vector.load %arg11[%c0_20, %c17_21, %c0_22] : memref<18x18x8xbf16, #tpu.memory_space<vmem>>, vector<18x1x8xbf16>
    tpu.vector_store %arg11[%c0_20, %c17_21, %c0_22], %18 {strides = array<i32>} : memref<18x18x8xbf16, #tpu.memory_space<vmem>>, vector<18x1x8xbf16>,
    %cst_23 = arith.constant 0.000000e+00 : bf16
    %20 = vector.broadcast %cst_23 : bf16 to vector<2x20x4xbf16>
    %c0_24 = arith.constant 0 : index
    %c0_25 = arith.constant 0 : index
    %c0_26 = arith.constant 0 : index
    %21 = vector.load %arg12[%c0_24, %c0_25, %c0_26] : memref<20x20x4xbf16, #tpu.memory_space<vmem>>, vector<2x20x4xbf16>
    tpu.vector_store %arg12[%c0_24, %c0_25, %c0_26], %20 {strides = array<i32>} : memref<20x20x4xbf16, #tpu.memory_space<vmem>>, vector<2x20x4xbf16>,
    %cst_27 = arith.constant 0.000000e+00 : bf16
    %22 = vector.broadcast %cst_27 : bf16 to vector<2x20x4xbf16>
    %c18 = arith.constant 18 : index
    %c0_28 = arith.constant 0 : index
    %c0_29 = arith.constant 0 : index
    %23 = vector.load %arg12[%c18, %c0_28, %c0_29] : memref<20x20x4xbf16, #tpu.memory_space<vmem>>, vector<2x20x4xbf16>
    tpu.vector_store %arg12[%c18, %c0_28, %c0_29], %22 {strides = array<i32>} : memref<20x20x4xbf16, #tpu.memory_space<vmem>>, vector<2x20x4xbf16>,
    %cst_30 = arith.constant 0.000000e+00 : bf16
    %24 = vector.broadcast %cst_30 : bf16 to vector<20x2x4xbf16>
    %c0_31 = arith.constant 0 : index
    %c0_32 = arith.constant 0 : index
    %c0_33 = arith.constant 0 : index
    %25 = vector.load %arg12[%c0_31, %c0_32, %c0_33] : memref<20x20x4xbf16, #tpu.memory_space<vmem>>, vector<20x2x4xbf16>
    tpu.vector_store %arg12[%c0_31, %c0_32, %c0_33], %24 {strides = array<i32>} : memref<20x20x4xbf16, #tpu.memory_space<vmem>>, vector<20x2x4xbf16>,
    %cst_34 = arith.constant 0.000000e+00 : bf16
    %26 = vector.broadcast %cst_34 : bf16 to vector<20x2x4xbf16>
    %c0_35 = arith.constant 0 : index
    %c18_36 = arith.constant 18 : index
    %c0_37 = arith.constant 0 : index
    %27 = vector.load %arg12[%c0_35, %c18_36, %c0_37] : memref<20x20x4xbf16, #tpu.memory_space<vmem>>, vector<20x2x4xbf16>
    tpu.vector_store %arg12[%c0_35, %c18_36, %c0_37], %26 {strides = array<i32>} : memref<20x20x4xbf16, #tpu.memory_space<vmem>>, vector<20x2x4xbf16>,
    %28 = vector.extract_strided_slice %10 {offsets = [0, 8], sizes = [256, 8], strides = [1, 1]} : vector<256x20xf32> to vector<256x8xf32>
    %29 = vector.shape_cast %28 : vector<256x8xf32> to vector<16x16x8xf32>
    %30 = arith.truncf %29 : vector<16x16x8xf32> to vector<16x16x8xbf16>
    %c1 = arith.constant 1 : index
    %c1_38 = arith.constant 1 : index
    %c0_39 = arith.constant 0 : index
    %31 = vector.load %arg11[%c1, %c1_38, %c0_39] : memref<18x18x8xbf16, #tpu.memory_space<vmem>>, vector<16x16x8xbf16>
    tpu.vector_store %arg11[%c1, %c1_38, %c0_39], %30 {strides = array<i32>} : memref<18x18x8xbf16, #tpu.memory_space<vmem>>, vector<16x16x8xbf16>,
    %c0_40 = arith.constant 0 : index
    %c0_41 = arith.constant 0 : index
    %c0_42 = arith.constant 0 : index
    %32 = vector.load %arg11[%c0_40, %c0_41, %c0_42] : memref<18x18x8xbf16, #tpu.memory_space<vmem>>, vector<18x18x8xbf16>
    %33 = vector.extract_strided_slice %32 {offsets = [0, 0, 0], sizes = [16, 16, 8], strides = [1, 1, 1]} : vector<18x18x8xbf16> to vector<16x16x8xbf16>
    %34 = vector.extract_strided_slice %32 {offsets = [0, 1, 0], sizes = [16, 16, 8], strides = [1, 1, 1]} : vector<18x18x8xbf16> to vector<16x16x8xbf16>
    %35 = vector.extract_strided_slice %32 {offsets = [0, 2, 0], sizes = [16, 16, 8], strides = [1, 1, 1]} : vector<18x18x8xbf16> to vector<16x16x8xbf16>
    %36 = tpu.concatenate %33, %34, %35 in 2 : vector<16x16x8xbf16>, vector<16x16x8xbf16>, vector<16x16x8xbf16> -> vector<16x16x24xbf16>
    %37 = vector.shape_cast %36 : vector<16x16x24xbf16> to vector<256x24xbf16>
    %c0_43 = arith.constant 0 : index
    %c0_44 = arith.constant 0 : index
    %c0_45 = arith.constant 0 : index
    %38 = vector.load %arg4[%c0_43, %c0_44, %c0_45] : memref<3x24x16xbf16, #tpu.memory_space<vmem>>, vector<1x24x16xbf16>
    %39 = vector.shape_cast %38 : vector<1x24x16xbf16> to vector<24x16xbf16>
    %cst_46 = arith.constant dense<0.000000e+00> : vector<256x16xf32>
    %40 = tpu.matmul %37, %39, %cst_46 {dimension_numbers = #tpu.dot_dimension_numbers<[1], [0], [0], [1], [0, 0, 1, 1], [], []>} : vector<256x24xbf16>, vector<24x16xbf16>, vector<256x16xf32> -> vector<256x16xf32>
    %41 = vector.extract_strided_slice %32 {offsets = [1, 0, 0], sizes = [16, 16, 8], strides = [1, 1, 1]} : vector<18x18x8xbf16> to vector<16x16x8xbf16>
    %42 = vector.extract_strided_slice %32 {offsets = [1, 1, 0], sizes = [16, 16, 8], strides = [1, 1, 1]} : vector<18x18x8xbf16> to vector<16x16x8xbf16>
    %43 = vector.extract_strided_slice %32 {offsets = [1, 2, 0], sizes = [16, 16, 8], strides = [1, 1, 1]} : vector<18x18x8xbf16> to vector<16x16x8xbf16>
    %44 = tpu.concatenate %41, %42, %43 in 2 : vector<16x16x8xbf16>, vector<16x16x8xbf16>, vector<16x16x8xbf16> -> vector<16x16x24xbf16>
    %45 = vector.shape_cast %44 : vector<16x16x24xbf16> to vector<256x24xbf16>
    %c1_47 = arith.constant 1 : index
    %c0_48 = arith.constant 0 : index
    %c0_49 = arith.constant 0 : index
    %46 = vector.load %arg4[%c1_47, %c0_48, %c0_49] : memref<3x24x16xbf16, #tpu.memory_space<vmem>>, vector<1x24x16xbf16>
    %47 = vector.shape_cast %46 : vector<1x24x16xbf16> to vector<24x16xbf16>
    %cst_50 = arith.constant dense<0.000000e+00> : vector<256x16xf32>
    %48 = tpu.matmul %45, %47, %cst_50 {dimension_numbers = #tpu.dot_dimension_numbers<[1], [0], [0], [1], [0, 0, 1, 1], [], []>} : vector<256x24xbf16>, vector<24x16xbf16>, vector<256x16xf32> -> vector<256x16xf32>
    %49 = arith.addf %40, %48 : vector<256x16xf32>
    %50 = vector.extract_strided_slice %32 {offsets = [2, 0, 0], sizes = [16, 16, 8], strides = [1, 1, 1]} : vector<18x18x8xbf16> to vector<16x16x8xbf16>
    %51 = vector.extract_strided_slice %32 {offsets = [2, 1, 0], sizes = [16, 16, 8], strides = [1, 1, 1]} : vector<18x18x8xbf16> to vector<16x16x8xbf16>
    %52 = vector.extract_strided_slice %32 {offsets = [2, 2, 0], sizes = [16, 16, 8], strides = [1, 1, 1]} : vector<18x18x8xbf16> to vector<16x16x8xbf16>
    %53 = tpu.concatenate %50, %51, %52 in 2 : vector<16x16x8xbf16>, vector<16x16x8xbf16>, vector<16x16x8xbf16> -> vector<16x16x24xbf16>
    %54 = vector.shape_cast %53 : vector<16x16x24xbf16> to vector<256x24xbf16>
    %c2 = arith.constant 2 : index
    %c0_51 = arith.constant 0 : index
    %c0_52 = arith.constant 0 : index
    %55 = vector.load %arg4[%c2, %c0_51, %c0_52] : memref<3x24x16xbf16, #tpu.memory_space<vmem>>, vector<1x24x16xbf16>
    %56 = vector.shape_cast %55 : vector<1x24x16xbf16> to vector<24x16xbf16>
    %cst_53 = arith.constant dense<0.000000e+00> : vector<256x16xf32>
    %57 = tpu.matmul %54, %56, %cst_53 {dimension_numbers = #tpu.dot_dimension_numbers<[1], [0], [0], [1], [0, 0, 1, 1], [], []>} : vector<256x24xbf16>, vector<24x16xbf16>, vector<256x16xf32> -> vector<256x16xf32>
    %58 = arith.addf %49, %57 : vector<256x16xf32>
    %c0_54 = arith.constant 0 : index
    %c0_55 = arith.constant 0 : index
    %59 = vector.load %arg5[%c0_54, %c0_55] : memref<1x16xf32, #tpu.memory_space<vmem>>, vector<1x16xf32>
    %60 = vector.broadcast %59 : vector<1x16xf32> to vector<256x16xf32>
    %61 = arith.addf %58, %60 : vector<256x16xf32>
    %cst_56 = arith.constant 0.000000e+00 : f32
    %62 = vector.broadcast %cst_56 : f32 to vector<256x16xf32>
    %63 = arith.maximumf %61, %62 : vector<256x16xf32>
    %64 = vector.extract_strided_slice %10 {offsets = [0, 16], sizes = [256, 4], strides = [1, 1]} : vector<256x20xf32> to vector<256x4xf32>
    %65 = vector.shape_cast %64 : vector<256x4xf32> to vector<16x16x4xf32>
    %66 = arith.truncf %65 : vector<16x16x4xf32> to vector<16x16x4xbf16>
    %c2_57 = arith.constant 2 : index
    %c2_58 = arith.constant 2 : index
    %c0_59 = arith.constant 0 : index
    %67 = vector.load %arg12[%c2_57, %c2_58, %c0_59] : memref<20x20x4xbf16, #tpu.memory_space<vmem>>, vector<16x16x4xbf16>
    tpu.vector_store %arg12[%c2_57, %c2_58, %c0_59], %66 {strides = array<i32>} : memref<20x20x4xbf16, #tpu.memory_space<vmem>>, vector<16x16x4xbf16>,
    %c0_60 = arith.constant 0 : index
    %c0_61 = arith.constant 0 : index
    %c0_62 = arith.constant 0 : index
    %68 = vector.load %arg12[%c0_60, %c0_61, %c0_62] : memref<20x20x4xbf16, #tpu.memory_space<vmem>>, vector<20x20x4xbf16>
    %69 = vector.extract_strided_slice %68 {offsets = [0, 0, 0], sizes = [16, 16, 4], strides = [1, 1, 1]} : vector<20x20x4xbf16> to vector<16x16x4xbf16>
    %70 = vector.extract_strided_slice %68 {offsets = [0, 1, 0], sizes = [16, 16, 4], strides = [1, 1, 1]} : vector<20x20x4xbf16> to vector<16x16x4xbf16>
    %71 = vector.extract_strided_slice %68 {offsets = [0, 2, 0], sizes = [16, 16, 4], strides = [1, 1, 1]} : vector<20x20x4xbf16> to vector<16x16x4xbf16>
    %72 = vector.extract_strided_slice %68 {offsets = [0, 3, 0], sizes = [16, 16, 4], strides = [1, 1, 1]} : vector<20x20x4xbf16> to vector<16x16x4xbf16>
    %73 = vector.extract_strided_slice %68 {offsets = [0, 4, 0], sizes = [16, 16, 4], strides = [1, 1, 1]} : vector<20x20x4xbf16> to vector<16x16x4xbf16>
    %74 = tpu.concatenate %69, %70, %71, %72, %73 in 2 : vector<16x16x4xbf16>, vector<16x16x4xbf16>, vector<16x16x4xbf16>, vector<16x16x4xbf16>, vector<16x16x4xbf16> -> vector<16x16x20xbf16>
    %75 = vector.shape_cast %74 : vector<16x16x20xbf16> to vector<256x20xbf16>
    %c0_63 = arith.constant 0 : index
    %c0_64 = arith.constant 0 : index
    %c0_65 = arith.constant 0 : index
    %76 = vector.load %arg6[%c0_63, %c0_64, %c0_65] : memref<5x20x8xbf16, #tpu.memory_space<vmem>>, vector<1x20x8xbf16>
    %77 = vector.shape_cast %76 : vector<1x20x8xbf16> to vector<20x8xbf16>
    %cst_66 = arith.constant dense<0.000000e+00> : vector<256x8xf32>
    %78 = tpu.matmul %75, %77, %cst_66 {dimension_numbers = #tpu.dot_dimension_numbers<[1], [0], [0], [1], [0, 0, 1, 1], [], []>} : vector<256x20xbf16>, vector<20x8xbf16>, vector<256x8xf32> -> vector<256x8xf32>
    %79 = vector.extract_strided_slice %68 {offsets = [1, 0, 0], sizes = [16, 16, 4], strides = [1, 1, 1]} : vector<20x20x4xbf16> to vector<16x16x4xbf16>
    %80 = vector.extract_strided_slice %68 {offsets = [1, 1, 0], sizes = [16, 16, 4], strides = [1, 1, 1]} : vector<20x20x4xbf16> to vector<16x16x4xbf16>
    %81 = vector.extract_strided_slice %68 {offsets = [1, 2, 0], sizes = [16, 16, 4], strides = [1, 1, 1]} : vector<20x20x4xbf16> to vector<16x16x4xbf16>
    %82 = vector.extract_strided_slice %68 {offsets = [1, 3, 0], sizes = [16, 16, 4], strides = [1, 1, 1]} : vector<20x20x4xbf16> to vector<16x16x4xbf16>
    %83 = vector.extract_strided_slice %68 {offsets = [1, 4, 0], sizes = [16, 16, 4], strides = [1, 1, 1]} : vector<20x20x4xbf16> to vector<16x16x4xbf16>
    %84 = tpu.concatenate %79, %80, %81, %82, %83 in 2 : vector<16x16x4xbf16>, vector<16x16x4xbf16>, vector<16x16x4xbf16>, vector<16x16x4xbf16>, vector<16x16x4xbf16> -> vector<16x16x20xbf16>
    %85 = vector.shape_cast %84 : vector<16x16x20xbf16> to vector<256x20xbf16>
    %c1_67 = arith.constant 1 : index
    %c0_68 = arith.constant 0 : index
    %c0_69 = arith.constant 0 : index
    %86 = vector.load %arg6[%c1_67, %c0_68, %c0_69] : memref<5x20x8xbf16, #tpu.memory_space<vmem>>, vector<1x20x8xbf16>
    %87 = vector.shape_cast %86 : vector<1x20x8xbf16> to vector<20x8xbf16>
    %cst_70 = arith.constant dense<0.000000e+00> : vector<256x8xf32>
    %88 = tpu.matmul %85, %87, %cst_70 {dimension_numbers = #tpu.dot_dimension_numbers<[1], [0], [0], [1], [0, 0, 1, 1], [], []>} : vector<256x20xbf16>, vector<20x8xbf16>, vector<256x8xf32> -> vector<256x8xf32>
    %89 = arith.addf %78, %88 : vector<256x8xf32>
    %90 = vector.extract_strided_slice %68 {offsets = [2, 0, 0], sizes = [16, 16, 4], strides = [1, 1, 1]} : vector<20x20x4xbf16> to vector<16x16x4xbf16>
    %91 = vector.extract_strided_slice %68 {offsets = [2, 1, 0], sizes = [16, 16, 4], strides = [1, 1, 1]} : vector<20x20x4xbf16> to vector<16x16x4xbf16>
    %92 = vector.extract_strided_slice %68 {offsets = [2, 2, 0], sizes = [16, 16, 4], strides = [1, 1, 1]} : vector<20x20x4xbf16> to vector<16x16x4xbf16>
    %93 = vector.extract_strided_slice %68 {offsets = [2, 3, 0], sizes = [16, 16, 4], strides = [1, 1, 1]} : vector<20x20x4xbf16> to vector<16x16x4xbf16>
    %94 = vector.extract_strided_slice %68 {offsets = [2, 4, 0], sizes = [16, 16, 4], strides = [1, 1, 1]} : vector<20x20x4xbf16> to vector<16x16x4xbf16>
    %95 = tpu.concatenate %90, %91, %92, %93, %94 in 2 : vector<16x16x4xbf16>, vector<16x16x4xbf16>, vector<16x16x4xbf16>, vector<16x16x4xbf16>, vector<16x16x4xbf16> -> vector<16x16x20xbf16>
    %96 = vector.shape_cast %95 : vector<16x16x20xbf16> to vector<256x20xbf16>
    %c2_71 = arith.constant 2 : index
    %c0_72 = arith.constant 0 : index
    %c0_73 = arith.constant 0 : index
    %97 = vector.load %arg6[%c2_71, %c0_72, %c0_73] : memref<5x20x8xbf16, #tpu.memory_space<vmem>>, vector<1x20x8xbf16>
    %98 = vector.shape_cast %97 : vector<1x20x8xbf16> to vector<20x8xbf16>
    %cst_74 = arith.constant dense<0.000000e+00> : vector<256x8xf32>
    %99 = tpu.matmul %96, %98, %cst_74 {dimension_numbers = #tpu.dot_dimension_numbers<[1], [0], [0], [1], [0, 0, 1, 1], [], []>} : vector<256x20xbf16>, vector<20x8xbf16>, vector<256x8xf32> -> vector<256x8xf32>
    %100 = arith.addf %89, %99 : vector<256x8xf32>
    %101 = vector.extract_strided_slice %68 {offsets = [3, 0, 0], sizes = [16, 16, 4], strides = [1, 1, 1]} : vector<20x20x4xbf16> to vector<16x16x4xbf16>
    %102 = vector.extract_strided_slice %68 {offsets = [3, 1, 0], sizes = [16, 16, 4], strides = [1, 1, 1]} : vector<20x20x4xbf16> to vector<16x16x4xbf16>
    %103 = vector.extract_strided_slice %68 {offsets = [3, 2, 0], sizes = [16, 16, 4], strides = [1, 1, 1]} : vector<20x20x4xbf16> to vector<16x16x4xbf16>
    %104 = vector.extract_strided_slice %68 {offsets = [3, 3, 0], sizes = [16, 16, 4], strides = [1, 1, 1]} : vector<20x20x4xbf16> to vector<16x16x4xbf16>
    %105 = vector.extract_strided_slice %68 {offsets = [3, 4, 0], sizes = [16, 16, 4], strides = [1, 1, 1]} : vector<20x20x4xbf16> to vector<16x16x4xbf16>
    %106 = tpu.concatenate %101, %102, %103, %104, %105 in 2 : vector<16x16x4xbf16>, vector<16x16x4xbf16>, vector<16x16x4xbf16>, vector<16x16x4xbf16>, vector<16x16x4xbf16> -> vector<16x16x20xbf16>
    %107 = vector.shape_cast %106 : vector<16x16x20xbf16> to vector<256x20xbf16>
    %c3 = arith.constant 3 : index
    %c0_75 = arith.constant 0 : index
    %c0_76 = arith.constant 0 : index
    %108 = vector.load %arg6[%c3, %c0_75, %c0_76] : memref<5x20x8xbf16, #tpu.memory_space<vmem>>, vector<1x20x8xbf16>
    %109 = vector.shape_cast %108 : vector<1x20x8xbf16> to vector<20x8xbf16>
    %cst_77 = arith.constant dense<0.000000e+00> : vector<256x8xf32>
    %110 = tpu.matmul %107, %109, %cst_77 {dimension_numbers = #tpu.dot_dimension_numbers<[1], [0], [0], [1], [0, 0, 1, 1], [], []>} : vector<256x20xbf16>, vector<20x8xbf16>, vector<256x8xf32> -> vector<256x8xf32>
    %111 = arith.addf %100, %110 : vector<256x8xf32>
    %112 = vector.extract_strided_slice %68 {offsets = [4, 0, 0], sizes = [16, 16, 4], strides = [1, 1, 1]} : vector<20x20x4xbf16> to vector<16x16x4xbf16>
    %113 = vector.extract_strided_slice %68 {offsets = [4, 1, 0], sizes = [16, 16, 4], strides = [1, 1, 1]} : vector<20x20x4xbf16> to vector<16x16x4xbf16>
    %114 = vector.extract_strided_slice %68 {offsets = [4, 2, 0], sizes = [16, 16, 4], strides = [1, 1, 1]} : vector<20x20x4xbf16> to vector<16x16x4xbf16>
    %115 = vector.extract_strided_slice %68 {offsets = [4, 3, 0], sizes = [16, 16, 4], strides = [1, 1, 1]} : vector<20x20x4xbf16> to vector<16x16x4xbf16>
    %116 = vector.extract_strided_slice %68 {offsets = [4, 4, 0], sizes = [16, 16, 4], strides = [1, 1, 1]} : vector<20x20x4xbf16> to vector<16x16x4xbf16>
    %117 = tpu.concatenate %112, %113, %114, %115, %116 in 2 : vector<16x16x4xbf16>, vector<16x16x4xbf16>, vector<16x16x4xbf16>, vector<16x16x4xbf16>, vector<16x16x4xbf16> -> vector<16x16x20xbf16>
    %118 = vector.shape_cast %117 : vector<16x16x20xbf16> to vector<256x20xbf16>
    %c4 = arith.constant 4 : index
    %c0_78 = arith.constant 0 : index
    %c0_79 = arith.constant 0 : index
    %119 = vector.load %arg6[%c4, %c0_78, %c0_79] : memref<5x20x8xbf16, #tpu.memory_space<vmem>>, vector<1x20x8xbf16>
    %120 = vector.shape_cast %119 : vector<1x20x8xbf16> to vector<20x8xbf16>
    %cst_80 = arith.constant dense<0.000000e+00> : vector<256x8xf32>
    %121 = tpu.matmul %118, %120, %cst_80 {dimension_numbers = #tpu.dot_dimension_numbers<[1], [0], [0], [1], [0, 0, 1, 1], [], []>} : vector<256x20xbf16>, vector<20x8xbf16>, vector<256x8xf32> -> vector<256x8xf32>
    %122 = arith.addf %111, %121 : vector<256x8xf32>
    %c0_81 = arith.constant 0 : index
    %c0_82 = arith.constant 0 : index
    %123 = vector.load %arg7[%c0_81, %c0_82] : memref<1x8xf32, #tpu.memory_space<vmem>>, vector<1x8xf32>
    %124 = vector.broadcast %123 : vector<1x8xf32> to vector<256x8xf32>
    %125 = arith.addf %122, %124 : vector<256x8xf32>
    %cst_83 = arith.constant 0.000000e+00 : f32
    %126 = vector.broadcast %cst_83 : f32 to vector<256x8xf32>
    %127 = arith.maximumf %125, %126 : vector<256x8xf32>
    %128 = vector.extract_strided_slice %1 {offsets = [0, 0, 0], sizes = [18, 16, 4], strides = [1, 1, 1]} : vector<18x18x4xbf16> to vector<18x16x4xbf16>
    %129 = vector.extract_strided_slice %1 {offsets = [0, 1, 0], sizes = [18, 16, 4], strides = [1, 1, 1]} : vector<18x18x4xbf16> to vector<18x16x4xbf16>
    %130 = arith.maximumf %128, %129 : vector<18x16x4xbf16>
    %131 = vector.extract_strided_slice %1 {offsets = [0, 2, 0], sizes = [18, 16, 4], strides = [1, 1, 1]} : vector<18x18x4xbf16> to vector<18x16x4xbf16>
    %132 = arith.maximumf %130, %131 : vector<18x16x4xbf16>
    %133 = vector.extract_strided_slice %132 {offsets = [0, 0, 0], sizes = [16, 16, 4], strides = [1, 1, 1]} : vector<18x16x4xbf16> to vector<16x16x4xbf16>
    %134 = vector.extract_strided_slice %132 {offsets = [1, 0, 0], sizes = [16, 16, 4], strides = [1, 1, 1]} : vector<18x16x4xbf16> to vector<16x16x4xbf16>
    %135 = arith.maximumf %133, %134 : vector<16x16x4xbf16>
    %136 = vector.extract_strided_slice %132 {offsets = [2, 0, 0], sizes = [16, 16, 4], strides = [1, 1, 1]} : vector<18x16x4xbf16> to vector<16x16x4xbf16>
    %137 = arith.maximumf %135, %136 : vector<16x16x4xbf16>
    %138 = vector.shape_cast %137 : vector<16x16x4xbf16> to vector<256x4xbf16>
    %c0_84 = arith.constant 0 : index
    %c0_85 = arith.constant 0 : index
    %139 = vector.load %arg8[%c0_84, %c0_85] : memref<4x8xbf16, #tpu.memory_space<vmem>>, vector<4x8xbf16>
    %cst_86 = arith.constant dense<0.000000e+00> : vector<256x8xf32>
    %140 = tpu.matmul %138, %139, %cst_86 {dimension_numbers = #tpu.dot_dimension_numbers<[1], [0], [0], [1], [0, 0, 1, 1], [], []>} : vector<256x4xbf16>, vector<4x8xbf16>, vector<256x8xf32> -> vector<256x8xf32>
    %c0_87 = arith.constant 0 : index
    %c0_88 = arith.constant 0 : index
    %141 = vector.load %arg9[%c0_87, %c0_88] : memref<1x8xf32, #tpu.memory_space<vmem>>, vector<1x8xf32>
    %142 = vector.broadcast %141 : vector<1x8xf32> to vector<256x8xf32>
    %143 = arith.addf %140, %142 : vector<256x8xf32>
    %cst_89 = arith.constant 0.000000e+00 : f32
    %144 = vector.broadcast %cst_89 : f32 to vector<256x8xf32>
    %145 = arith.maximumf %143, %144 : vector<256x8xf32>
    %146 = arith.truncf %11 : vector<256x8xf32> to vector<256x8xbf16>
    %147 = arith.truncf %63 : vector<256x16xf32> to vector<256x16xbf16>
    %148 = arith.truncf %127 : vector<256x8xf32> to vector<256x8xbf16>
    %149 = arith.truncf %145 : vector<256x8xf32> to vector<256x8xbf16>
    %cst_90 = arith.constant 0.000000e+00 : bf16
    %150 = vector.broadcast %cst_90 : bf16 to vector<256x88xbf16>
    %151 = tpu.concatenate %146, %147, %148, %149, %150 in 1 : vector<256x8xbf16>, vector<256x16xbf16>, vector<256x8xbf16>, vector<256x8xbf16>, vector<256x88xbf16> -> vector<256x128xbf16>
    %152 = vector.shape_cast %151 : vector<256x128xbf16> to vector<16x16x128xbf16>
    %c0_91 = arith.constant 0 : index
    %c0_92 = arith.constant 0 : index
    %c0_93 = arith.constant 0 : index
    %c0_94 = arith.constant 0 : index
    %153 = vector.load %arg10[%c0_91, %c0_92, %c0_93, %c0_94] : memref<1x16x16x128xbf16, #tpu.memory_space<vmem>>, vector<1x16x16x128xbf16>
    %154 = vector.shape_cast %153 : vector<1x16x16x128xbf16> to vector<16x16x128xbf16>
    %155 = vector.shape_cast %152 : vector<16x16x128xbf16> to vector<1x16x16x128xbf16>
    tpu.vector_store %arg10[%c0_91, %c0_92, %c0_93, %c0_94], %155 {strides = array<i32>} : memref<1x16x16x128xbf16, #tpu.memory_space<vmem>>, vector<1x16x16x128xbf16>,
    return
  }
  func.func @transform_0(%arg0: i32) -> (i32, i32, i32, i32) {
    %c0_i32 = arith.constant 0 : i32
    %c0_i32_0 = arith.constant 0 : i32
    %c0_i32_1 = arith.constant 0 : i32
    %c0_i32_2 = arith.constant 0 : i32
    return %arg0, %c0_i32, %c0_i32_0, %c0_i32_1 : i32, i32, i32, i32
  }
  func.func @transform_1(%arg0: i32) -> (i32, i32) {
    %c0_i32 = arith.constant 0 : i32
    %c0_i32_0 = arith.constant 0 : i32
    %c0_i32_1 = arith.constant 0 : i32
    return %c0_i32, %c0_i32_0 : i32, i32
  }
  func.func @transform_2(%arg0: i32) -> (i32, i32) {
    %c0_i32 = arith.constant 0 : i32
    %c0_i32_0 = arith.constant 0 : i32
    %c0_i32_1 = arith.constant 0 : i32
    return %c0_i32, %c0_i32_0 : i32, i32
  }
  func.func @transform_3(%arg0: i32) -> (i32, i32, i32) {
    %c0_i32 = arith.constant 0 : i32
    %c0_i32_0 = arith.constant 0 : i32
    %c0_i32_1 = arith.constant 0 : i32
    %c0_i32_2 = arith.constant 0 : i32
    return %c0_i32, %c0_i32_0, %c0_i32_1 : i32, i32, i32
  }
  func.func @transform_4(%arg0: i32) -> (i32, i32) {
    %c0_i32 = arith.constant 0 : i32
    %c0_i32_0 = arith.constant 0 : i32
    %c0_i32_1 = arith.constant 0 : i32
    return %c0_i32, %c0_i32_0 : i32, i32
  }
  func.func @transform_5(%arg0: i32) -> (i32, i32, i32) {
    %c0_i32 = arith.constant 0 : i32
    %c0_i32_0 = arith.constant 0 : i32
    %c0_i32_1 = arith.constant 0 : i32
    %c0_i32_2 = arith.constant 0 : i32
    return %c0_i32, %c0_i32_0, %c0_i32_1 : i32, i32, i32
  }
  func.func @transform_6(%arg0: i32) -> (i32, i32) {
    %c0_i32 = arith.constant 0 : i32
    %c0_i32_0 = arith.constant 0 : i32
    %c0_i32_1 = arith.constant 0 : i32
    return %c0_i32, %c0_i32_0 : i32, i32
  }
  func.func @transform_7(%arg0: i32) -> (i32, i32) {
    %c0_i32 = arith.constant 0 : i32
    %c0_i32_0 = arith.constant 0 : i32
    %c0_i32_1 = arith.constant 0 : i32
    return %c0_i32, %c0_i32_0 : i32, i32
  }
  func.func @transform_8(%arg0: i32) -> (i32, i32) {
    %c0_i32 = arith.constant 0 : i32
    %c0_i32_0 = arith.constant 0 : i32
    %c0_i32_1 = arith.constant 0 : i32
    return %c0_i32, %c0_i32_0 : i32, i32
  }
  func.func @transform_9(%arg0: i32) -> (i32, i32, i32, i32) {
    %c0_i32 = arith.constant 0 : i32
    %c0_i32_0 = arith.constant 0 : i32
    %c0_i32_1 = arith.constant 0 : i32
    %c0_i32_2 = arith.constant 0 : i32
    return %arg0, %c0_i32, %c0_i32_0, %c0_i32_1 : i32, i32, i32, i32
  }
}

</mosaic_0001>

<llo_original>
// kernel: tpu_custom_call.1
$region0: #{tpu_custom_call.1}
  #allocation0 [shape = 'u32[]', space=smem, size = 0x4, offset = 0x4, fixed_abs, tag = 'smem constant byte address 0x4 - core index']
  #allocation1 [shape = 'u32[144,128]{1,0:T(1,128)}', space=vmem, size = 0x12000, scoped, tag = 'internal scratch']
  #allocation2 [shape = 'bf16[18,18,8]{2,1,0:T(8,128)(2,1)}', space=vmem, size = 0x1b000, scoped, tag = 'scratch operand']
  #allocation3 [shape = 'bf16[20,20,4]{2,1,0:T(8,128)(2,1)}', space=vmem, size = 0x1e000, scoped, tag = 'scratch operand']
  %s0 = inlined_call_operand.vmem [shape: bf16[2,18,18,4], index: 0, kind: input, shape index: {}]
  %s1 = inlined_call_operand.vmem [shape: bf16[4,20], index: 1, kind: input, shape index: {}]
  %s2 = inlined_call_operand.vmem [shape: f32[1,20], index: 2, kind: input, shape index: {}]
  %s3 = inlined_call_operand.vmem [shape: bf16[3,24,16], index: 3, kind: input, shape index: {}]
  %s4 = inlined_call_operand.vmem [shape: f32[1,16], index: 4, kind: input, shape index: {}]
  %s5 = inlined_call_operand.vmem [shape: bf16[5,20,8], index: 5, kind: input, shape index: {}]
  %s6 = inlined_call_operand.vmem [shape: f32[1,8], index: 6, kind: input, shape index: {}]
  %s7 = inlined_call_operand.vmem [shape: bf16[4,8], index: 7, kind: input, shape index: {}]
  %s8 = inlined_call_operand.vmem [shape: f32[1,8], index: 8, kind: input, shape index: {}]
  %s9 = inlined_call_operand.hbm [shape: bf16[2,16,16,128], index: 9, kind: output, shape index: {}]
  %s10 = sld [smem:[#allocation0]]
  $region69: #{tpu_custom_call.1} parent=0
    _
  %s12 = ssub.s32 1, %s10
  %s13 = scalar_select 0, %s12, %s10
  $region1: #{tpu_custom_call.1} parent=0
    #allocation4 [shape = 'u8[131072]{0}', space=vmem, size = 0x20000, scoped, tag = 'output window, operand 0']
    #allocation5 [shape = 's32[2]{0}', space=sflag, size = 0x8, scoped, tag = 'scoped memory for tpu_custom_call.1']
    %14 = vsyncpa [#allocation5], 0
    %s15 = scalar_lea.sflag [#allocation5], 1
    %16 = vsyncpa %s15, 0
    loop: start=0, step=1, limit=4
    $region2: #{tpu_custom_call.1} parent=1 // loop_pre_header
      _
    $region3: #{tpu_custom_call.1} parent=1 // loop_header
      %s18 = sphi 0, %s22
      %p19 = scmp.ge.s32.totalorder %s18, 4
      %s28 = sphi 0, %s30
      %s31 = sphi 0, %s28
      %s32 = sphi 0, %s31
      %s48 = sphi 0, %s32
      %s52 = sphi 0, %s52
      %s54 = sphi 0, %s52
      %s55 = sphi 0, %s54
      %s69 = sphi 0, %s55
      %s73 = sphi 0, %s73
      %s75 = sphi 0, %s73
      %s76 = sphi 0, %s75
      %s90 = sphi 0, %s76
      %s94 = sphi 0, %s94
      %s96 = sphi 0, %s94
      %s97 = sphi 0, %s96
      %s111 = sphi 0, %s97
      %s115 = sphi 0, %s115
      %s117 = sphi 0, %s115
      %s118 = sphi 0, %s117
      %s132 = sphi 0, %s118
      %s136 = sphi 0, %s136
      %s138 = sphi 0, %s136
      %s139 = sphi 0, %s138
      %s153 = sphi 0, %s139
      %s157 = sphi 0, %s157
      %s159 = sphi 0, %s157
      %s160 = sphi 0, %s159
      %s174 = sphi 0, %s160
      %s178 = sphi 0, %s178
      %s180 = sphi 0, %s178
      %s181 = sphi 0, %s180
      %s195 = sphi 0, %s181
      %s199 = sphi 0, %s199
      %s201 = sphi 0, %s199
      %s202 = sphi 0, %s201
      %s216 = sphi 0, %s202
      %s222 = sphi 0, %s224
      %s225 = sphi 0, %s222
      %s226 = sphi 0, %s225
      %s242 = sphi 0, %s226
    $region4: #{tpu_custom_call.1} parent=1 // loop_header_branch
      %21 = sbr.rel (%p19) target = $region8
    $region5: #{tpu_custom_call.1} parent=1 // loop_body
      %s23 = ssub.s32 %s18, 1
      %s24 = ssub.s32 %s18, 2
      %s25 = sadd.s32 %s18, 1
      %s26 = ssub.s32 %s18, %s25
      %p27 = scmp.eq.s32.totalorder %s26, 0
      %s29 = sadd.s32 %s28, 1
      %s30 = scalar_select %p27, %s28, %s29
      %p33 = pneg %p27
      %p34 = scmp.eq.s32.totalorder %s18, 1
      %p35 = por %p33, %p34
      %p36 = scmp.ne.s32.totalorder %s28, %s31
      %p37 = scmp.eq.s32.totalorder %s18, 0
      %p38 = por %p36, %p37
      %p39 = scmp.ne.s32.totalorder %s28, %s31
      %p40 = scmp.eq.s32.totalorder %s23, 1
      %p41 = por %p39, %p40
      %p42 = scmp.ne.s32.totalorder %s31, %s32
      %p43 = scmp.eq.s32.totalorder %s23, 0
      %p44 = por %p42, %p43
      %p45 = scmp.ne.s32.totalorder %s31, %s32
      %p46 = scmp.eq.s32.totalorder %s24, 1
      %p47 = por %p45, %p46
      %p49 = scmp.ne.s32.totalorder %s32, %s48
      %p50 = scmp.eq.s32.totalorder %s24, 0
      %p51 = por %p49, %p50
      %s53 = sadd.s32 %s52, 1
      %p56 = scmp.eq.s32.totalorder %s18, 1
      %p57 = scmp.ne.s32.totalorder %s52, %s54
      %p58 = scmp.eq.s32.totalorder %s18, 0
      %p59 = por %p57, %p58
      %p60 = scmp.ne.s32.totalorder %s52, %s54
      %p61 = scmp.eq.s32.totalorder %s23, 1
      %p62 = por %p60, %p61
      %p63 = scmp.ne.s32.totalorder %s54, %s55
      %p64 = scmp.eq.s32.totalorder %s23, 0
      %p65 = por %p63, %p64
      %p66 = scmp.ne.s32.totalorder %s54, %s55
      %p67 = scmp.eq.s32.totalorder %s24, 1
      %p68 = por %p66, %p67
      %p70 = scmp.ne.s32.totalorder %s55, %s69
      %p71 = scmp.eq.s32.totalorder %s24, 0
      %p72 = por %p70, %p71
      %s74 = sadd.s32 %s73, 1
      %p77 = scmp.eq.s32.totalorder %s18, 1
      %p78 = scmp.ne.s32.totalorder %s73, %s75
      %p79 = scmp.eq.s32.totalorder %s18, 0
      %p80 = por %p78, %p79
      %p81 = scmp.ne.s32.totalorder %s73, %s75
      %p82 = scmp.eq.s32.totalorder %s23, 1
      %p83 = por %p81, %p82
      %p84 = scmp.ne.s32.totalorder %s75, %s76
      %p85 = scmp.eq.s32.totalorder %s23, 0
      %p86 = por %p84, %p85
      %p87 = scmp.ne.s32.totalorder %s75, %s76
      %p88 = scmp.eq.s32.totalorder %s24, 1
      %p89 = por %p87, %p88
      %p91 = scmp.ne.s32.totalorder %s76, %s90
      %p92 = scmp.eq.s32.totalorder %s24, 0
      %p93 = por %p91, %p92
      %s95 = sadd.s32 %s94, 1
      %p98 = scmp.eq.s32.totalorder %s18, 1
      %p99 = scmp.ne.s32.totalorder %s94, %s96
      %p100 = scmp.eq.s32.totalorder %s18, 0
      %p101 = por %p99, %p100
      %p102 = scmp.ne.s32.totalorder %s94, %s96
      %p103 = scmp.eq.s32.totalorder %s23, 1
      %p104 = por %p102, %p103
      %p105 = scmp.ne.s32.totalorder %s96, %s97
      %p106 = scmp.eq.s32.totalorder %s23, 0
      %p107 = por %p105, %p106
      %p108 = scmp.ne.s32.totalorder %s96, %s97
      %p109 = scmp.eq.s32.totalorder %s24, 1
      %p110 = por %p108, %p109
      %p112 = scmp.ne.s32.totalorder %s97, %s111
      %p113 = scmp.eq.s32.totalorder %s24, 0
      %p114 = por %p112, %p113
      %s116 = sadd.s32 %s115, 1
      %p119 = scmp.eq.s32.totalorder %s18, 1
      %p120 = scmp.ne.s32.totalorder %s115, %s117
      %p121 = scmp.eq.s32.totalorder %s18, 0
      %p122 = por %p120, %p121
      %p123 = scmp.ne.s32.totalorder %s115, %s117
      %p124 = scmp.eq.s32.totalorder %s23, 1
      %p125 = por %p123, %p124
      %p126 = scmp.ne.s32.totalorder %s117, %s118
      %p127 = scmp.eq.s32.totalorder %s23, 0
      %p128 = por %p126, %p127
      %p129 = scmp.ne.s32.totalorder %s117, %s118
      %p130 = scmp.eq.s32.totalorder %s24, 1
      %p131 = por %p129, %p130
      %p133 = scmp.ne.s32.totalorder %s118, %s132
      %p134 = scmp.eq.s32.totalorder %s24, 0
      %p135 = por %p133, %p134
      %s137 = sadd.s32 %s136, 1
      %p140 = scmp.eq.s32.totalorder %s18, 1
      %p141 = scmp.ne.s32.totalorder %s136, %s138
      %p142 = scmp.eq.s32.totalorder %s18, 0
      %p143 = por %p141, %p142
      %p144 = scmp.ne.s32.totalorder %s136, %s138
      %p145 = scmp.eq.s32.totalorder %s23, 1
      %p146 = por %p144, %p145
      %p147 = scmp.ne.s32.totalorder %s138, %s139
      %p148 = scmp.eq.s32.totalorder %s23, 0
      %p149 = por %p147, %p148
      %p150 = scmp.ne.s32.totalorder %s138, %s139
      %p151 = scmp.eq.s32.totalorder %s24, 1
      %p152 = por %p150, %p151
      %p154 = scmp.ne.s32.totalorder %s139, %s153
      %p155 = scmp.eq.s32.totalorder %s24, 0
      %p156 = por %p154, %p155
      %s158 = sadd.s32 %s157, 1
      %p161 = scmp.eq.s32.totalorder %s18, 1
      %p162 = scmp.ne.s32.totalorder %s157, %s159
      %p163 = scmp.eq.s32.totalorder %s18, 0
      %p164 = por %p162, %p163
      %p165 = scmp.ne.s32.totalorder %s157, %s159
      %p166 = scmp.eq.s32.totalorder %s23, 1
      %p167 = por %p165, %p166
      %p168 = scmp.ne.s32.totalorder %s159, %s160
      %p169 = scmp.eq.s32.totalorder %s23, 0
      %p170 = por %p168, %p169
      %p171 = scmp.ne.s32.totalorder %s159, %s160
      %p172 = scmp.eq.s32.totalorder %s24, 1
      %p173 = por %p171, %p172
      %p175 = scmp.ne.s32.totalorder %s160, %s174
      %p176 = scmp.eq.s32.totalorder %s24, 0
      %p177 = por %p175, %p176
      %s179 = sadd.s32 %s178, 1
      %p182 = scmp.eq.s32.totalorder %s18, 1
      %p183 = scmp.ne.s32.totalorder %s178, %s180
      %p184 = scmp.eq.s32.totalorder %s18, 0
      %p185 = por %p183, %p184
      %p186 = scmp.ne.s32.totalorder %s178, %s180
      %p187 = scmp.eq.s32.totalorder %s23, 1
      %p188 = por %p186, %p187
      %p189 = scmp.ne.s32.totalorder %s180, %s181
      %p190 = scmp.eq.s32.totalorder %s23, 0
      %p191 = por %p189, %p190
      %p192 = scmp.ne.s32.totalorder %s180, %s181
      %p193 = scmp.eq.s32.totalorder %s24, 1
      %p194 = por %p192, %p193
      %p196 = scmp.ne.s32.totalorder %s181, %s195
      %p197 = scmp.eq.s32.totalorder %s24, 0
      %p198 = por %p196, %p197
      %s200 = sadd.s32 %s199, 1
      %p203 = scmp.eq.s32.totalorder %s18, 1
      %p204 = scmp.ne.s32.totalorder %s199, %s201
      %p205 = scmp.eq.s32.totalorder %s18, 0
      %p206 = por %p204, %p205
      %p207 = scmp.ne.s32.totalorder %s199, %s201
      %p208 = scmp.eq.s32.totalorder %s23, 1
      %p209 = por %p207, %p208
      %p210 = scmp.ne.s32.totalorder %s201, %s202
      %p211 = scmp.eq.s32.totalorder %s23, 0
      %p212 = por %p210, %p211
      %p213 = scmp.ne.s32.totalorder %s201, %s202
      %p214 = scmp.eq.s32.totalorder %s24, 1
      %p215 = por %p213, %p214
      %p217 = scmp.ne.s32.totalorder %s202, %s216
      %p218 = scmp.eq.s32.totalorder %s24, 0
      %p219 = por %p217, %p218
      %s220 = ssub.s32 %s18, %s25
      %p221 = scmp.eq.s32.totalorder %s220, 0
      %s223 = sadd.s32 %s222, 1
      %s224 = scalar_select %p221, %s222, %s223
      %p227 = pneg %p221
      %p228 = scmp.eq.s32.totalorder %s18, 1
      %p229 = por %p227, %p228
      %p230 = scmp.ne.s32.totalorder %s222, %s225
      %p231 = scmp.eq.s32.totalorder %s18, 0
      %p232 = por %p230, %p231
      %p233 = scmp.ne.s32.totalorder %s222, %s225
      %p234 = scmp.eq.s32.totalorder %s23, 1
      %p235 = por %p233, %p234
      %p236 = scmp.ne.s32.totalorder %s225, %s226
      %p237 = scmp.eq.s32.totalorder %s23, 0
      %p238 = por %p236, %p237
      %p239 = scmp.ne.s32.totalorder %s225, %s226
      %p240 = scmp.eq.s32.totalorder %s24, 1
      %p241 = por %p239, %p240
      %p243 = scmp.ne.s32.totalorder %s226, %s242
      %p244 = scmp.eq.s32.totalorder %s24, 0
      %p245 = por %p243, %p244
      %p246 = scmp.le.s32.totalorder 1, %s18
      %p247 = scmp.lt.s32.totalorder %s18, 3
      %p248 = pnand %p246, %p247
      %p249 = pneg %p248
      // Predicated region
      $region9: #{tpu_custom_call.1} parent=5 // pred_check
        _
      $region10: #{tpu_custom_call.1} parent=5 // pred_check_branch
        %251 = sbr.rel (%p248) target = $region12
      $region11: #{tpu_custom_call.1} parent=5 // pred_region
        %s252 = ssub.s32 %s18, 1
        // Predicated region
        $region13: #{tpu_custom_call.1} parent=11 // pred_check
          %p253 = pneg %p65
        $region14: #{tpu_custom_call.1} parent=11 // pred_check_branch
          %255 = sbr.rel (%p253) target = $region16
        $region15: #{tpu_custom_call.1} parent=11 // pred_region
          _
        $region16: #{tpu_custom_call.1} parent=11 // pred_fallthru
          _
        // Predicated region
        $region17: #{tpu_custom_call.1} parent=11 // pred_check
          %p256 = pneg %p86
        $region18: #{tpu_custom_call.1} parent=11 // pred_check_branch
          %258 = sbr.rel (%p256) target = $region20
        $region19: #{tpu_custom_call.1} parent=11 // pred_region
          _
        $region20: #{tpu_custom_call.1} parent=11 // pred_fallthru
          _
        // Predicated region
        $region21: #{tpu_custom_call.1} parent=11 // pred_check
          %p259 = pneg %p107
        $region22: #{tpu_custom_call.1} parent=11 // pred_check_branch
          %261 = sbr.rel (%p259) target = $region24
        $region23: #{tpu_custom_call.1} parent=11 // pred_region
          _
        $region24: #{tpu_custom_call.1} parent=11 // pred_fallthru
          _
        // Predicated region
        $region25: #{tpu_custom_call.1} parent=11 // pred_check
          %p262 = pneg %p128
        $region26: #{tpu_custom_call.1} parent=11 // pred_check_branch
          %264 = sbr.rel (%p262) target = $region28
        $region27: #{tpu_custom_call.1} parent=11 // pred_region
          _
        $region28: #{tpu_custom_call.1} parent=11 // pred_fallthru
          _
        // Predicated region
        $region29: #{tpu_custom_call.1} parent=11 // pred_check
          %p265 = pneg %p149
        $region30: #{tpu_custom_call.1} parent=11 // pred_check_branch
          %267 = sbr.rel (%p265) target = $region32
        $region31: #{tpu_custom_call.1} parent=11 // pred_region
          _
        $region32: #{tpu_custom_call.1} parent=11 // pred_fallthru
          _
        // Predicated region
        $region33: #{tpu_custom_call.1} parent=11 // pred_check
          %p268 = pneg %p170
        $region34: #{tpu_custom_call.1} parent=11 // pred_check_branch
          %270 = sbr.rel (%p268) target = $region36
        $region35: #{tpu_custom_call.1} parent=11 // pred_region
          _
        $region36: #{tpu_custom_call.1} parent=11 // pred_fallthru
          _
        // Predicated region
        $region37: #{tpu_custom_call.1} parent=11 // pred_check
          %p271 = pneg %p191
        $region38: #{tpu_custom_call.1} parent=11 // pred_check_branch
          %273 = sbr.rel (%p271) target = $region40
        $region39: #{tpu_custom_call.1} parent=11 // pred_region
          _
        $region40: #{tpu_custom_call.1} parent=11 // pred_fallthru
          _
        // Predicated region
        $region41: #{tpu_custom_call.1} parent=11 // pred_check
          %p274 = pneg %p212
        $region42: #{tpu_custom_call.1} parent=11 // pred_check_branch
          %276 = sbr.rel (%p274) target = $region44
        $region43: #{tpu_custom_call.1} parent=11 // pred_region
          _
        $region44: #{tpu_custom_call.1} parent=11 // pred_fallthru
          _
      $region12: #{tpu_custom_call.1} parent=5 // pred_fallthru
        _
      %p277 = scmp.lt.s32.totalorder %s18, 2
      // Predicated region
      $region45: #{tpu_custom_call.1} parent=5 // pred_check
        %p278 = pneg %p277
      $region46: #{tpu_custom_call.1} parent=5 // pred_check_branch
        %280 = sbr.rel (%p278) target = $region48
      $region47: #{tpu_custom_call.1} parent=5 // pred_region
        // Predicated region
        $region49: #{tpu_custom_call.1} parent=47 // pred_check
          %p281 = pneg %p38
        $region50: #{tpu_custom_call.1} parent=47 // pred_check_branch
          %283 = sbr.rel (%p281) target = $region52
        $region51: #{tpu_custom_call.1} parent=47 // pred_region
          %p284 = scmp.lt.s32.totalorder %s18, 1
          %s285 = scalar_select %p284, %s18, 1
          %s286 = smul.addr %s285, 54
          %s287 = smul.addr %s286, 4
          %s288 = scalar_lea.vmem %s0, %s287
        $region52: #{tpu_custom_call.1} parent=47 // pred_fallthru
          _
      $region48: #{tpu_custom_call.1} parent=5 // pred_fallthru
        _
      %p289 = scmp.le.s32.totalorder 1, %s18
      %p290 = scmp.lt.s32.totalorder %s18, 3
      %p291 = pnand %p289, %p290
      %p292 = pneg %p291
      // Predicated region
      $region53: #{tpu_custom_call.1} parent=5 // pred_check
        _
      $region54: #{tpu_custom_call.1} parent=5 // pred_check_branch
        %294 = sbr.rel (%p291) target = $region56
      $region55: #{tpu_custom_call.1} parent=5 // pred_region
        %s295 = ssub.s32 %s18, 1
        %p296 = scmp.lt.s32.totalorder %s23, 1
        %s297 = scalar_select %p296, %s23, 1
        %s298 = smul.addr %s297, 54
        %s299 = smul.addr %s298, 4
        %s300 = scalar_lea.vmem %s0, %s299
        %p301 = pneg %p44
        %p302 = pneg %p41
        %p303 = pneg %p65
        %p304 = pneg %p62
        %p305 = pneg %p86
        %p306 = pneg %p83
        %p307 = pneg %p107
        %p308 = pneg %p104
        %p309 = pneg %p128
        %p310 = pneg %p125
        %p311 = pneg %p149
        %p312 = pneg %p146
        %p313 = pneg %p170
        %p314 = pneg %p167
        %p315 = pneg %p191
        %p316 = pneg %p188
        %p317 = pneg %p212
        %p318 = pneg %p209
        %p319 = pneg %p238
        %p320 = pneg %p235
        %s321 = sand.u32 %s225, 1
        %s322 = scalar_lea.sflag [#allocation5], %s321
        %s323 = sand.u32 %s225, 1
        %s324 = smul.addr %s323, 128
        %s325 = scalar_lea.vmem [#allocation4], %s324
        %p326 = scmp.lt.s32.totalorder %s23, 1
        %s327 = scalar_select %p326, %s23, 1
        %s328 = smul.addr %s327, 54
        %s329 = smul.addr %s328, 4
        %s330 = scalar_lea.vmem %s0, %s329
        %v332 = vld [vmem:[%s330] sm:$0xf]
        %v333 = vld [vmem:[%s330 + $0x4] sm:$0xf]
        %v334 = vld [vmem:[%s330 + $0x8] sm:$0x1]
        %v335 = vld [vmem:[%s330 + $0xc] sm:$0xf]
        %v336 = vld [vmem:[%s330 + $0x10] sm:$0xf]
        %v337 = vld [vmem:[%s330 + $0x14] sm:$0x1]
        %v338 = vld [vmem:[%s330 + $0x18] sm:$0xf]
        %v339 = vld [vmem:[%s330 + $0x1c] sm:$0xf]
        %v340 = vld [vmem:[%s330 + $0x20] sm:$0x1]
        %v341 = vld [vmem:[%s330 + $0x24] sm:$0xf]
        %v342 = vld [vmem:[%s330 + $0x28] sm:$0xf]
        %v343 = vld [vmem:[%s330 + $0x2c] sm:$0x1]
        %v344 = vld [vmem:[%s330 + $0x30] sm:$0xf]
        %v345 = vld [vmem:[%s330 + $0x34] sm:$0xf]
        %v346 = vld [vmem:[%s330 + $0x38] sm:$0x1]
        %v347 = vld [vmem:[%s330 + $0x3c] sm:$0xf]
        %v348 = vld [vmem:[%s330 + $0x40] sm:$0xf]
        %v349 = vld [vmem:[%s330 + $0x44] sm:$0x1]
        %v350 = vld [vmem:[%s330 + $0x48] sm:$0xf]
        %v351 = vld [vmem:[%s330 + $0x4c] sm:$0xf]
        %v352 = vld [vmem:[%s330 + $0x50] sm:$0x1]
        %v353 = vld [vmem:[%s330 + $0x54] sm:$0xf]
        %v354 = vld [vmem:[%s330 + $0x58] sm:$0xf]
        %v355 = vld [vmem:[%s330 + $0x5c] sm:$0x1]
        %v356 = vld [vmem:[%s330 + $0x60] sm:$0xf]
        %v357 = vld [vmem:[%s330 + $0x64] sm:$0xf]
        %v358 = vld [vmem:[%s330 + $0x68] sm:$0x1]
        %v359 = vld [vmem:[%s330 + $0x6c] sm:$0xf]
        %v360 = vld [vmem:[%s330 + $0x70] sm:$0xf]
        %v361 = vld [vmem:[%s330 + $0x74] sm:$0x1]
        %v362 = vld [vmem:[%s330 + $0x78] sm:$0xf]
        %v363 = vld [vmem:[%s330 + $0x7c] sm:$0xf]
        %v364 = vld [vmem:[%s330 + $0x80] sm:$0x1]
        %v365 = vld [vmem:[%s330 + $0x84] sm:$0xf]
        %v366 = vld [vmem:[%s330 + $0x88] sm:$0xf]
        %v367 = vld [vmem:[%s330 + $0x8c] sm:$0x1]
        %v368 = vld [vmem:[%s330 + $0x90] sm:$0xf]
        %v369 = vld [vmem:[%s330 + $0x94] sm:$0xf]
        %v370 = vld [vmem:[%s330 + $0x98] sm:$0x1]
        %v371 = vld [vmem:[%s330 + $0x9c] sm:$0xf]
        %v372 = vld [vmem:[%s330 + $0xa0] sm:$0xf]
        %v373 = vld [vmem:[%s330 + $0xa4] sm:$0x1]
        %v374 = vld [vmem:[%s330 + $0xa8] sm:$0xf]
        %v375 = vld [vmem:[%s330 + $0xac] sm:$0xf]
        %v376 = vld [vmem:[%s330 + $0xb0] sm:$0x1]
        %v377 = vld [vmem:[%s330 + $0xb4] sm:$0xf]
        %v378 = vld [vmem:[%s330 + $0xb8] sm:$0xf]
        %v379 = vld [vmem:[%s330 + $0xbc] sm:$0x1]
        %v380 = vld [vmem:[%s330 + $0xc0] sm:$0xf]
        %v381 = vld [vmem:[%s330 + $0xc4] sm:$0xf]
        %v382 = vld [vmem:[%s330 + $0xc8] sm:$0x1]
        %v383 = vld [vmem:[%s330 + $0xcc] sm:$0xf]
        %v384 = vld [vmem:[%s330 + $0xd0] sm:$0xf]
        %v385 = vld [vmem:[%s330 + $0xd4] sm:$0x1]
        %vm386 = vsmask.f32 3328
        %vm387 = vsmask.f32 7440
        %vm388 = vmor %vm386, %vm387
        %v390 = vshrl.u32 %v335, 16
        %v392 = vrot.slane %v390, 4
        %v393 = vshll.u32 %v335, 16
        %v395 = vrot.slane %v393, 5
        %v396 = vor.u32 %v392, %v395
        %v397 = vrot.slane %v396, 4
        %v399 = vshll.u32 %v336, 16
        %v401 = vrot.slane %v399, 5
        %v402 = vsel %vm388, %v397, %v401
        %v403 = vshrl.u32 %v336, 16
        %v405 = vrot.slane %v403, 4
        %v406 = vor.u32 %v405, %v401
        %v407 = vrot.slane %v406, 4
        %v409 = vshll.u32 %v337, 16
        %v411 = vrot.slane %v409, 5
        %v412 = vsel %vm388, %v407, %v411
        %v414 = vshrl.u32 %v338, 16
        %v416 = vrot.slane %v414, 4
        %v417 = vshll.u32 %v338, 16
        %v419 = vrot.slane %v417, 5
        %v420 = vor.u32 %v416, %v419
        %v421 = vrot.slane %v420, 4
        %v423 = vshll.u32 %v339, 16
        %v425 = vrot.slane %v423, 5
        %v426 = vsel %vm388, %v421, %v425
        %v427 = vshrl.u32 %v339, 16
        %v429 = vrot.slane %v427, 4
        %v430 = vor.u32 %v429, %v425
        %v431 = vrot.slane %v430, 4
        %v433 = vshll.u32 %v340, 16
        %v435 = vrot.slane %v433, 5
        %v436 = vsel %vm388, %v431, %v435
        %v438 = vshrl.u32 %v341, 16
        %v440 = vrot.slane %v438, 4
        %v441 = vshll.u32 %v341, 16
        %v443 = vrot.slane %v441, 5
        %v444 = vor.u32 %v440, %v443
        %v445 = vrot.slane %v444, 4
        %v447 = vshll.u32 %v342, 16
        %v449 = vrot.slane %v447, 5
        %v450 = vsel %vm388, %v445, %v449
        %v451 = vshrl.u32 %v342, 16
        %v453 = vrot.slane %v451, 4
        %v454 = vor.u32 %v453, %v449
        %v455 = vrot.slane %v454, 4
        %v457 = vshll.u32 %v343, 16
        %v459 = vrot.slane %v457, 5
        %v460 = vsel %vm388, %v455, %v459
        %v462 = vshrl.u32 %v344, 16
        %v464 = vrot.slane %v462, 4
        %v465 = vshll.u32 %v344, 16
        %v467 = vrot.slane %v465, 5
        %v468 = vor.u32 %v464, %v467
        %v469 = vrot.slane %v468, 4
        %v471 = vshll.u32 %v345, 16
        %v473 = vrot.slane %v471, 5
        %v474 = vsel %vm388, %v469, %v473
        %v475 = vshrl.u32 %v345, 16
        %v477 = vrot.slane %v475, 4
        %v478 = vor.u32 %v477, %v473
        %v479 = vrot.slane %v478, 4
        %v481 = vshll.u32 %v346, 16
        %v483 = vrot.slane %v481, 5
        %v484 = vsel %vm388, %v479, %v483
        %v486 = vshrl.u32 %v347, 16
        %v488 = vrot.slane %v486, 4
        %v489 = vshll.u32 %v347, 16
        %v491 = vrot.slane %v489, 5
        %v492 = vor.u32 %v488, %v491
        %v493 = vrot.slane %v492, 4
        %v495 = vshll.u32 %v348, 16
        %v497 = vrot.slane %v495, 5
        %v498 = vsel %vm388, %v493, %v497
        %v499 = vshrl.u32 %v348, 16
        %v501 = vrot.slane %v499, 4
        %v502 = vor.u32 %v501, %v497
        %v503 = vrot.slane %v502, 4
        %v505 = vshll.u32 %v349, 16
        %v507 = vrot.slane %v505, 5
        %v508 = vsel %vm388, %v503, %v507
        %v510 = vshrl.u32 %v350, 16
        %v512 = vrot.slane %v510, 4
        %v513 = vshll.u32 %v350, 16
        %v515 = vrot.slane %v513, 5
        %v516 = vor.u32 %v512, %v515
        %v517 = vrot.slane %v516, 4
        %v519 = vshll.u32 %v351, 16
        %v521 = vrot.slane %v519, 5
        %v522 = vsel %vm388, %v517, %v521
        %v523 = vshrl.u32 %v351, 16
        %v525 = vrot.slane %v523, 4
        %v526 = vor.u32 %v525, %v521
        %v527 = vrot.slane %v526, 4
        %v529 = vshll.u32 %v352, 16
        %v531 = vrot.slane %v529, 5
        %v532 = vsel %vm388, %v527, %v531
        %v534 = vshrl.u32 %v353, 16
        %v536 = vrot.slane %v534, 4
        %v537 = vshll.u32 %v353, 16
        %v539 = vrot.slane %v537, 5
        %v540 = vor.u32 %v536, %v539
        %v541 = vrot.slane %v540, 4
        %v543 = vshll.u32 %v354, 16
        %v545 = vrot.slane %v543, 5
        %v546 = vsel %vm388, %v541, %v545
        %v547 = vshrl.u32 %v354, 16
        %v549 = vrot.slane %v547, 4
        %v550 = vor.u32 %v549, %v545
        %v551 = vrot.slane %v550, 4
        %v553 = vshll.u32 %v355, 16
        %v555 = vrot.slane %v553, 5
        %v556 = vsel %vm388, %v551, %v555
        %v558 = vshrl.u32 %v356, 16
        %v560 = vrot.slane %v558, 4
        %v561 = vshll.u32 %v356, 16
        %v563 = vrot.slane %v561, 5
        %v564 = vor.u32 %v560, %v563
        %v565 = vrot.slane %v564, 4
        %v567 = vshll.u32 %v357, 16
        %v569 = vrot.slane %v567, 5
        %v570 = vsel %vm388, %v565, %v569
        %v571 = vshrl.u32 %v357, 16
        %v573 = vrot.slane %v571, 4
        %v574 = vor.u32 %v573, %v569
        %v575 = vrot.slane %v574, 4
        %v577 = vshll.u32 %v358, 16
        %v579 = vrot.slane %v577, 5
        %v580 = vsel %vm388, %v575, %v579
        %v582 = vshrl.u32 %v359, 16
        %v584 = vrot.slane %v582, 4
        %v585 = vshll.u32 %v359, 16
        %v587 = vrot.slane %v585, 5
        %v588 = vor.u32 %v584, %v587
        %v589 = vrot.slane %v588, 4
        %v591 = vshll.u32 %v360, 16
        %v593 = vrot.slane %v591, 5
        %v594 = vsel %vm388, %v589, %v593
        %v595 = vshrl.u32 %v360, 16
        %v597 = vrot.slane %v595, 4
        %v598 = vor.u32 %v597, %v593
        %v599 = vrot.slane %v598, 4
        %v601 = vshll.u32 %v361, 16
        %v603 = vrot.slane %v601, 5
        %v604 = vsel %vm388, %v599, %v603
        %v606 = vshrl.u32 %v362, 16
        %v608 = vrot.slane %v606, 4
        %v609 = vshll.u32 %v362, 16
        %v611 = vrot.slane %v609, 5
        %v612 = vor.u32 %v608, %v611
        %v613 = vrot.slane %v612, 4
        %v615 = vshll.u32 %v363, 16
        %v617 = vrot.slane %v615, 5
        %v618 = vsel %vm388, %v613, %v617
        %v619 = vshrl.u32 %v363, 16
        %v621 = vrot.slane %v619, 4
        %v622 = vor.u32 %v621, %v617
        %v623 = vrot.slane %v622, 4
        %v625 = vshll.u32 %v364, 16
        %v627 = vrot.slane %v625, 5
        %v628 = vsel %vm388, %v623, %v627
        %v630 = vshrl.u32 %v365, 16
        %v632 = vrot.slane %v630, 4
        %v633 = vshll.u32 %v365, 16
        %v635 = vrot.slane %v633, 5
        %v636 = vor.u32 %v632, %v635
        %v637 = vrot.slane %v636, 4
        %v639 = vshll.u32 %v366, 16
        %v641 = vrot.slane %v639, 5
        %v642 = vsel %vm388, %v637, %v641
        %v643 = vshrl.u32 %v366, 16
        %v645 = vrot.slane %v643, 4
        %v646 = vor.u32 %v645, %v641
        %v647 = vrot.slane %v646, 4
        %v649 = vshll.u32 %v367, 16
        %v651 = vrot.slane %v649, 5
        %v652 = vsel %vm388, %v647, %v651
        %v654 = vshrl.u32 %v368, 16
        %v656 = vrot.slane %v654, 4
        %v657 = vshll.u32 %v368, 16
        %v659 = vrot.slane %v657, 5
        %v660 = vor.u32 %v656, %v659
        %v661 = vrot.slane %v660, 4
        %v663 = vshll.u32 %v369, 16
        %v665 = vrot.slane %v663, 5
        %v666 = vsel %vm388, %v661, %v665
        %v667 = vshrl.u32 %v369, 16
        %v669 = vrot.slane %v667, 4
        %v670 = vor.u32 %v669, %v665
        %v671 = vrot.slane %v670, 4
        %v673 = vshll.u32 %v370, 16
        %v675 = vrot.slane %v673, 5
        %v676 = vsel %vm388, %v671, %v675
        %v678 = vshrl.u32 %v371, 16
        %v680 = vrot.slane %v678, 4
        %v681 = vshll.u32 %v371, 16
        %v683 = vrot.slane %v681, 5
        %v684 = vor.u32 %v680, %v683
        %v685 = vrot.slane %v684, 4
        %v687 = vshll.u32 %v372, 16
        %v689 = vrot.slane %v687, 5
        %v690 = vsel %vm388, %v685, %v689
        %v691 = vshrl.u32 %v372, 16
        %v693 = vrot.slane %v691, 4
        %v694 = vor.u32 %v693, %v689
        %v695 = vrot.slane %v694, 4
        %v697 = vshll.u32 %v373, 16
        %v699 = vrot.slane %v697, 5
        %v700 = vsel %vm388, %v695, %v699
        %v702 = vshrl.u32 %v374, 16
        %v704 = vrot.slane %v702, 4
        %v705 = vshll.u32 %v374, 16
        %v707 = vrot.slane %v705, 5
        %v708 = vor.u32 %v704, %v707
        %v709 = vrot.slane %v708, 4
        %v711 = vshll.u32 %v375, 16
        %v713 = vrot.slane %v711, 5
        %v714 = vsel %vm388, %v709, %v713
        %v715 = vshrl.u32 %v375, 16
        %v717 = vrot.slane %v715, 4
        %v718 = vor.u32 %v717, %v713
        %v719 = vrot.slane %v718, 4
        %v721 = vshll.u32 %v376, 16
        %v723 = vrot.slane %v721, 5
        %v724 = vsel %vm388, %v719, %v723
        %v726 = vshrl.u32 %v377, 16
        %v728 = vrot.slane %v726, 4
        %v729 = vshll.u32 %v377, 16
        %v731 = vrot.slane %v729, 5
        %v732 = vor.u32 %v728, %v731
        %v733 = vrot.slane %v732, 4
        %v735 = vshll.u32 %v378, 16
        %v737 = vrot.slane %v735, 5
        %v738 = vsel %vm388, %v733, %v737
        %v739 = vshrl.u32 %v378, 16
        %v741 = vrot.slane %v739, 4
        %v742 = vor.u32 %v741, %v737
        %v743 = vrot.slane %v742, 4
        %v745 = vshll.u32 %v379, 16
        %v747 = vrot.slane %v745, 5
        %v748 = vsel %vm388, %v743, %v747
        %v750 = vshrl.u32 %v380, 16
        %v752 = vrot.slane %v750, 4
        %v753 = vshll.u32 %v380, 16
        %v755 = vrot.slane %v753, 5
        %v756 = vor.u32 %v752, %v755
        %v757 = vrot.slane %v756, 4
        %v759 = vshll.u32 %v381, 16
        %v761 = vrot.slane %v759, 5
        %v762 = vsel %vm388, %v757, %v761
        %v763 = vshrl.u32 %v381, 16
        %v765 = vrot.slane %v763, 4
        %v766 = vor.u32 %v765, %v761
        %v767 = vrot.slane %v766, 4
        %v769 = vshll.u32 %v382, 16
        %v771 = vrot.slane %v769, 5
        %v772 = vsel %vm388, %v767, %v771
        %v773 = vld [vmem:[%s1] sm:$0x3]
        %v774 = vld [vmem:[%s2] sm:$0x1]
        %v776 = vlaneseq
        %v777 = vshrl.u32 %v776, 7
        %v778 = vsub.s32 0, %v777
        %v779 = vrot.slane %v774, %v778
        %v781 = vunpack.c.l.b16 %v402
        %v782 = vunpack.c.l.b16 %v412
        %v783 = vunpack.c.l.b16 %v426
        %v784 = vunpack.c.l.b16 %v436
        %v785 = vunpack.c.l.b16 %v450
        %v786 = vunpack.c.l.b16 %v460
        %v787 = vunpack.c.l.b16 %v474
        %v788 = vunpack.c.l.b16 %v484
        %v789 = vunpack.c.l.b16 %v498
        %v790 = vunpack.c.l.b16 %v508
        %v791 = vunpack.c.l.b16 %v522
        %v792 = vunpack.c.l.b16 %v532
        %v793 = vunpack.c.l.b16 %v546
        %v794 = vunpack.c.l.b16 %v556
        %v795 = vunpack.c.l.b16 %v570
        %v796 = vunpack.c.l.b16 %v580
        %v797 = vunpack.c.l.b16 %v594
        %v798 = vunpack.c.l.b16 %v604
        %v799 = vunpack.c.l.b16 %v618
        %v800 = vunpack.c.l.b16 %v628
        %v801 = vunpack.c.l.b16 %v642
        %v802 = vunpack.c.l.b16 %v652
        %v803 = vunpack.c.l.b16 %v666
        %v804 = vunpack.c.l.b16 %v676
        %v805 = vunpack.c.l.b16 %v690
        %v806 = vunpack.c.l.b16 %v700
        %v807 = vunpack.c.l.b16 %v714
        %v808 = vunpack.c.l.b16 %v724
        %v809 = vunpack.c.l.b16 %v738
        %v810 = vunpack.c.l.b16 %v748
        %v811 = vunpack.c.l.b16 %v762
        %v812 = vunpack.c.l.b16 %v772
        %v813 = vpack.c.b16 %v782, %v781
        %v814 = vpack.c.b16 %v784, %v783
        %v815 = vpack.c.b16 %v786, %v785
        %v816 = vpack.c.b16 %v788, %v787
        %v817 = vpack.c.b16 %v790, %v789
        %v818 = vpack.c.b16 %v792, %v791
        %v819 = vpack.c.b16 %v794, %v793
        %v820 = vpack.c.b16 %v796, %v795
        %v821 = vpack.c.b16 %v798, %v797
        %v822 = vpack.c.b16 %v800, %v799
        %v823 = vpack.c.b16 %v802, %v801
        %v824 = vpack.c.b16 %v804, %v803
        %v825 = vpack.c.b16 %v806, %v805
        %v826 = vpack.c.b16 %v808, %v807
        %v827 = vpack.c.b16 %v810, %v809
        %v828 = vpack.c.b16 %v812, %v811
        %vm829 = vcmask 31744
        %v831 = vsel %vm829, %v813, 0
        %v834 = vsel %vm829, %v814, 0
        %v837 = vsel %vm829, %v815, 0
        %v840 = vsel %vm829, %v816, 0
        %v843 = vsel %vm829, %v817, 0
        %v846 = vsel %vm829, %v818, 0
        %v849 = vsel %vm829, %v819, 0
        %v852 = vsel %vm829, %v820, 0
        %v855 = vsel %vm829, %v821, 0
        %v858 = vsel %vm829, %v822, 0
        %v861 = vsel %vm829, %v823, 0
        %v864 = vsel %vm829, %v824, 0
        %v867 = vsel %vm829, %v825, 0
        %v870 = vsel %vm829, %v826, 0
        %v873 = vsel %vm829, %v827, 0
        %v876 = vsel %vm829, %v828, 0
        %vm878 = vcmask 1041408
        %v880 = vsel %vm878, %v773, 0
        %882 = vmatprep.subr.bf16.mxu0 0
        %883 = vmatpush1.bf16.msra.mxu0 %v880
        %884 = vmatprep.subr.bf16.mxu0 0
        %885 = vmatpush1.bf16.msra.mxu0 0
        %886 = vmatprep.subr.bf16.mxu0 0
        %887 = vmatpush1.bf16.msra.mxu0 0
        %888 = vmatprep.subr.bf16.mxu0 0
        %889 = vmatpush1.bf16.msra.mxu0 0
        %890 = vmatprep.subr.bf16.mxu0 0
        %891 = vmatpush1.bf16.msra.mxu0 0
        %892 = vmatprep.subr.bf16.mxu0 0
        %893 = vmatpush1.bf16.msra.mxu0 0
        %894 = vmatprep.subr.bf16.mxu0 0
        %895 = vmatpush1.bf16.msra.mxu0 0
        %896 = vmatprep.subr.bf16.mxu0 0
        %897 = vmatpush1.bf16.msra.mxu0 0
        %898 = vmatprep.subr.bf16.mxu0 0
        %899 = vmatpush1.bf16.msra.mxu0 0
        %900 = vmatprep.subr.bf16.mxu0 0
        %901 = vmatpush1.bf16.msra.mxu0 0
        %902 = vmatprep.subr.bf16.mxu0 0
        %903 = vmatpush1.bf16.msra.mxu0 0
        %904 = vmatprep.subr.bf16.mxu0 0
        %905 = vmatpush1.bf16.msra.mxu0 0
        %906 = vmatprep.subr.bf16.mxu0 0
        %907 = vmatpush1.bf16.msra.mxu0 0
        %908 = vmatprep.subr.bf16.mxu0 0
        %909 = vmatpush1.bf16.msra.mxu0 0
        %910 = vmatprep.subr.bf16.mxu0 0
        %911 = vmatpush1.bf16.msra.mxu0 0
        %912 = vmatprep.subr.bf16.mxu0 0
        %913 = vmatpush1.bf16.msra.mxu0 0
        %914 = vmatprep.mubr.bf16.mxu0 0
        %915 = vmatmul.mubr.bf16.gmra.mrb[0].mxu0 %v831
        %v916 = vpop.f32.mrb[0].mxu0
        %v917 = vadd.f32 %v779, %v916
        %v918 = vpop.f32.mrb[0].mxu0
        %v919 = vpop.f32.mrb[0].mxu0
        %v920 = vadd.f32 %v779, %v919
        %v921 = vpop.f32.mrb[0].mxu0
        %922 = vmatprep.mubr.bf16.mxu0 0
        %923 = vmatmul.mubr.bf16.gmra.mrb[0].mxu0 %v834
        %v924 = vpop.f32.mrb[0].mxu0
        %v925 = vadd.f32 %v779, %v924
        %v926 = vpop.f32.mrb[0].mxu0
        %v927 = vpop.f32.mrb[0].mxu0
        %v928 = vadd.f32 %v779, %v927
        %v929 = vpop.f32.mrb[0].mxu0
        %930 = vmatprep.mubr.bf16.mxu0 0
        %931 = vmatmul.mubr.bf16.gmra.mrb[0].mxu0 %v837
        %v932 = vpop.f32.mrb[0].mxu0
        %v933 = vadd.f32 %v779, %v932
        %v934 = vpop.f32.mrb[0].mxu0
        %v935 = vpop.f32.mrb[0].mxu0
        %v936 = vadd.f32 %v779, %v935
        %v937 = vpop.f32.mrb[0].mxu0
        %938 = vmatprep.mubr.bf16.mxu0 0
        %939 = vmatmul.mubr.bf16.gmra.mrb[0].mxu0 %v840
        %v940 = vpop.f32.mrb[0].mxu0
        %v941 = vadd.f32 %v779, %v940
        %v942 = vpop.f32.mrb[0].mxu0
        %v943 = vpop.f32.mrb[0].mxu0
        %v944 = vadd.f32 %v779, %v943
        %v945 = vpop.f32.mrb[0].mxu0
        %946 = vmatprep.mubr.bf16.mxu0 0
        %947 = vmatmul.mubr.bf16.gmra.mrb[0].mxu0 %v843
        %v948 = vpop.f32.mrb[0].mxu0
        %v949 = vadd.f32 %v779, %v948
        %v950 = vpop.f32.mrb[0].mxu0
        %v951 = vpop.f32.mrb[0].mxu0
        %v952 = vadd.f32 %v779, %v951
        %v953 = vpop.f32.mrb[0].mxu0
        %954 = vmatprep.mubr.bf16.mxu0 0
        %955 = vmatmul.mubr.bf16.gmra.mrb[0].mxu0 %v846
        %v956 = vpop.f32.mrb[0].mxu0
        %v957 = vadd.f32 %v779, %v956
        %v958 = vpop.f32.mrb[0].mxu0
        %v959 = vpop.f32.mrb[0].mxu0
        %v960 = vadd.f32 %v779, %v959
        %v961 = vpop.f32.mrb[0].mxu0
        %962 = vmatprep.mubr.bf16.mxu0 0
        %963 = vmatmul.mubr.bf16.gmra.mrb[0].mxu0 %v849
        %v964 = vpop.f32.mrb[0].mxu0
        %v965 = vadd.f32 %v779, %v964
        %v966 = vpop.f32.mrb[0].mxu0
        %v967 = vpop.f32.mrb[0].mxu0
        %v968 = vadd.f32 %v779, %v967
        %v969 = vpop.f32.mrb[0].mxu0
        %970 = vmatprep.mubr.bf16.mxu0 0
        %971 = vmatmul.mubr.bf16.gmra.mrb[0].mxu0 %v852
        %v972 = vpop.f32.mrb[0].mxu0
        %v973 = vadd.f32 %v779, %v972
        %v974 = vpop.f32.mrb[0].mxu0
        %v975 = vpop.f32.mrb[0].mxu0
        %v976 = vadd.f32 %v779, %v975
        %v977 = vpop.f32.mrb[0].mxu0
        %978 = vmatprep.mubr.bf16.mxu0 0
        %979 = vmatmul.mubr.bf16.gmra.mrb[0].mxu0 %v855
        %v980 = vpop.f32.mrb[0].mxu0
        %v981 = vadd.f32 %v779, %v980
        %v982 = vpop.f32.mrb[0].mxu0
        %v983 = vpop.f32.mrb[0].mxu0
        %v984 = vadd.f32 %v779, %v983
        %v985 = vpop.f32.mrb[0].mxu0
        %986 = vmatprep.mubr.bf16.mxu0 0
        %987 = vmatmul.mubr.bf16.gmra.mrb[0].mxu0 %v858
        %v988 = vpop.f32.mrb[0].mxu0
        %v989 = vadd.f32 %v779, %v988
        %v990 = vpop.f32.mrb[0].mxu0
        %v991 = vpop.f32.mrb[0].mxu0
        %v992 = vadd.f32 %v779, %v991
        %v993 = vpop.f32.mrb[0].mxu0
        %994 = vmatprep.mubr.bf16.mxu0 0
        %995 = vmatmul.mubr.bf16.gmra.mrb[0].mxu0 %v861
        %v996 = vpop.f32.mrb[0].mxu0
        %v997 = vadd.f32 %v779, %v996
        %v998 = vpop.f32.mrb[0].mxu0
        %v999 = vpop.f32.mrb[0].mxu0
        %v1000 = vadd.f32 %v779, %v999
        %v1001 = vpop.f32.mrb[0].mxu0
        %1002 = vmatprep.mubr.bf16.mxu0 0
        %1003 = vmatmul.mubr.bf16.gmra.mrb[0].mxu0 %v864
        %v1004 = vpop.f32.mrb[0].mxu0
        %v1005 = vadd.f32 %v779, %v1004
        %v1006 = vpop.f32.mrb[0].mxu0
        %v1007 = vpop.f32.mrb[0].mxu0
        %v1008 = vadd.f32 %v779, %v1007
        %v1009 = vpop.f32.mrb[0].mxu0
        %1010 = vmatprep.mubr.bf16.mxu0 0
        %1011 = vmatmul.mubr.bf16.gmra.mrb[0].mxu0 %v867
        %v1012 = vpop.f32.mrb[0].mxu0
        %v1013 = vadd.f32 %v779, %v1012
        %v1014 = vpop.f32.mrb[0].mxu0
        %v1015 = vpop.f32.mrb[0].mxu0
        %v1016 = vadd.f32 %v779, %v1015
        %v1017 = vpop.f32.mrb[0].mxu0
        %1018 = vmatprep.mubr.bf16.mxu0 0
        %1019 = vmatmul.mubr.bf16.gmra.mrb[0].mxu0 %v870
        %v1020 = vpop.f32.mrb[0].mxu0
        %v1021 = vadd.f32 %v779, %v1020
        %v1022 = vpop.f32.mrb[0].mxu0
        %v1023 = vpop.f32.mrb[0].mxu0
        %v1024 = vadd.f32 %v779, %v1023
        %v1025 = vpop.f32.mrb[0].mxu0
        %1026 = vmatprep.mubr.bf16.mxu0 0
        %1027 = vmatmul.mubr.bf16.gmra.mrb[0].mxu0 %v873
        %v1028 = vpop.f32.mrb[0].mxu0
        %v1029 = vadd.f32 %v779, %v1028
        %v1030 = vpop.f32.mrb[0].mxu0
        %v1031 = vpop.f32.mrb[0].mxu0
        %v1032 = vadd.f32 %v779, %v1031
        %v1033 = vpop.f32.mrb[0].mxu0
        %1034 = vmatprep.mubr.bf16.mxu0 0
        %1035 = vmatmul.mubr.bf16.gmra.mrb[0].mxu0 %v876
        %v1036 = vpop.f32.mrb[0].mxu0
        %v1037 = vadd.f32 %v779, %v1036
        %v1038 = vpop.f32.mrb[0].mxu0
        %v1039 = vpop.f32.mrb[0].mxu0
        %v1040 = vadd.f32 %v779, %v1039
        %v1041 = vpop.f32.mrb[0].mxu0
        %1042 = vdwg.mxu0
        %v1043 = vmax.f32 %v917, 0.0
        %v1044 = vmax.f32 %v920, 0.0
        %v1045 = vmax.f32 %v925, 0.0
        %v1046 = vmax.f32 %v928, 0.0
        %v1047 = vmax.f32 %v933, 0.0
        %v1048 = vmax.f32 %v936, 0.0
        %v1049 = vmax.f32 %v941, 0.0
        %v1050 = vmax.f32 %v944, 0.0
        %v1051 = vmax.f32 %v949, 0.0
        %v1052 = vmax.f32 %v952, 0.0
        %v1053 = vmax.f32 %v957, 0.0
        %v1054 = vmax.f32 %v960, 0.0
        %v1055 = vmax.f32 %v965, 0.0
        %v1056 = vmax.f32 %v968, 0.0
        %v1057 = vmax.f32 %v973, 0.0
        %v1058 = vmax.f32 %v976, 0.0
        %v1059 = vmax.f32 %v981, 0.0
        %v1060 = vmax.f32 %v984, 0.0
        %v1061 = vmax.f32 %v989, 0.0
        %v1062 = vmax.f32 %v992, 0.0
        %v1063 = vmax.f32 %v997, 0.0
        %v1064 = vmax.f32 %v1000, 0.0
        %v1065 = vmax.f32 %v1005, 0.0
        %v1066 = vmax.f32 %v1008, 0.0
        %v1067 = vmax.f32 %v1013, 0.0
        %v1068 = vmax.f32 %v1016, 0.0
        %v1069 = vmax.f32 %v1021, 0.0
        %v1070 = vmax.f32 %v1024, 0.0
        %v1071 = vmax.f32 %v1029, 0.0
        %v1072 = vmax.f32 %v1032, 0.0
        %v1073 = vmax.f32 %v1037, 0.0
        %v1074 = vmax.f32 %v1040, 0.0
        %vm1075 = vcmask 60416
        %1076 = vst.msk [vmem:[#allocation2] sm:$0xf] %vm1075, 0
        %1077 = vst.msk [vmem:[#allocation2 + $0x4] sm:$0xf] %vm1075, 0
        %vm1078 = vcmask 57344
        %1079 = vst.msk [vmem:[#allocation2 + $0x8] sm:$0x1] %vm1078, 0
        %s1080 = scalar_lea.vmem [#allocation2], 204
        %1081 = vst.msk [vmem:[%s1080] sm:$0xf] %vm1075, 0
        %1082 = vst.msk [vmem:[%s1080 + $0x4] sm:$0xf] %vm1075, 0
        %1083 = vst.msk [vmem:[%s1080 + $0x8] sm:$0x1] %vm1078, 0
        %vm1084 = vcmask 57344
        %vm1085 = vsmask.f32 256
        %vm1086 = vmand %vm1084, %vm1085
        %v1087 = vld [vmem:[#allocation2] sm:$0x1]
        %v1088 = vsel %vm1086, 0, %v1087
        %1089 = vst [vmem:[#allocation2] sm:$0x1] %v1088
        %v1090 = vld [vmem:[#allocation2 + $0xc] sm:$0x1]
        %v1091 = vsel %vm1086, 0, %v1090
        %1092 = vst [vmem:[#allocation2 + $0xc] sm:$0x1] %v1091
        %v1093 = vld [vmem:[#allocation2 + $0x18] sm:$0x1]
        %v1094 = vsel %vm1086, 0, %v1093
        %1095 = vst [vmem:[#allocation2 + $0x18] sm:$0x1] %v1094
        %v1096 = vld [vmem:[#allocation2 + $0x24] sm:$0x1]
        %v1097 = vsel %vm1086, 0, %v1096
        %1098 = vst [vmem:[#allocation2 + $0x24] sm:$0x1] %v1097
        %v1099 = vld [vmem:[#allocation2 + $0x30] sm:$0x1]
        %v1100 = vsel %vm1086, 0, %v1099
        %1101 = vst [vmem:[#allocation2 + $0x30] sm:$0x1] %v1100
        %v1102 = vld [vmem:[#allocation2 + $0x3c] sm:$0x1]
        %v1103 = vsel %vm1086, 0, %v1102
        %1104 = vst [vmem:[#allocation2 + $0x3c] sm:$0x1] %v1103
        %v1105 = vld [vmem:[#allocation2 + $0x48] sm:$0x1]
        %v1106 = vsel %vm1086, 0, %v1105
        %1107 = vst [vmem:[#allocation2 + $0x48] sm:$0x1] %v1106
        %v1108 = vld [vmem:[#allocation2 + $0x54] sm:$0x1]
        %v1109 = vsel %vm1086, 0, %v1108
        %1110 = vst [vmem:[#allocation2 + $0x54] sm:$0x1] %v1109
        %v1111 = vld [vmem:[#allocation2 + $0x60] sm:$0x1]
        %v1112 = vsel %vm1086, 0, %v1111
        %1113 = vst [vmem:[#allocation2 + $0x60] sm:$0x1] %v1112
        %v1114 = vld [vmem:[#allocation2 + $0x6c] sm:$0x1]
        %v1115 = vsel %vm1086, 0, %v1114
        %1116 = vst [vmem:[#allocation2 + $0x6c] sm:$0x1] %v1115
        %v1117 = vld [vmem:[#allocation2 + $0x78] sm:$0x1]
        %v1118 = vsel %vm1086, 0, %v1117
        %1119 = vst [vmem:[#allocation2 + $0x78] sm:$0x1] %v1118
        %v1120 = vld [vmem:[#allocation2 + $0x84] sm:$0x1]
        %v1121 = vsel %vm1086, 0, %v1120
        %1122 = vst [vmem:[#allocation2 + $0x84] sm:$0x1] %v1121
        %v1123 = vld [vmem:[#allocation2 + $0x90] sm:$0x1]
        %v1124 = vsel %vm1086, 0, %v1123
        %1125 = vst [vmem:[#allocation2 + $0x90] sm:$0x1] %v1124
        %v1126 = vld [vmem:[#allocation2 + $0x9c] sm:$0x1]
        %v1127 = vsel %vm1086, 0, %v1126
        %1128 = vst [vmem:[#allocation2 + $0x9c] sm:$0x1] %v1127
        %v1129 = vld [vmem:[#allocation2 + $0xa8] sm:$0x1]
        %v1130 = vsel %vm1086, 0, %v1129
        %1131 = vst [vmem:[#allocation2 + $0xa8] sm:$0x1] %v1130
        %v1132 = vld [vmem:[#allocation2 + $0xb4] sm:$0x1]
        %v1133 = vsel %vm1086, 0, %v1132
        %1134 = vst [vmem:[#allocation2 + $0xb4] sm:$0x1] %v1133
        %v1135 = vld [vmem:[#allocation2 + $0xc0] sm:$0x1]
        %v1136 = vsel %vm1086, 0, %v1135
        %1137 = vst [vmem:[#allocation2 + $0xc0] sm:$0x1] %v1136
        %v1138 = vld [vmem:[#allocation2 + $0xcc] sm:$0x1]
        %v1139 = vsel %vm1086, 0, %v1138
        %1140 = vst [vmem:[#allocation2 + $0xcc] sm:$0x1] %v1139
        %vm1141 = vsmask.f32 7938
        %vm1142 = vmand %vm1084, %vm1141
        %v1143 = vld [vmem:[#allocation2 + $0x8] sm:$0x1]
        %v1144 = vsel %vm1142, 0, %v1143
        %1145 = vst [vmem:[#allocation2 + $0x8] sm:$0x1] %v1144
        %v1146 = vld [vmem:[#allocation2 + $0x14] sm:$0x1]
        %v1147 = vsel %vm1142, 0, %v1146
        %1148 = vst [vmem:[#allocation2 + $0x14] sm:$0x1] %v1147
        %v1149 = vld [vmem:[#allocation2 + $0x20] sm:$0x1]
        %v1150 = vsel %vm1142, 0, %v1149
        %1151 = vst [vmem:[#allocation2 + $0x20] sm:$0x1] %v1150
        %v1152 = vld [vmem:[#allocation2 + $0x2c] sm:$0x1]
        %v1153 = vsel %vm1142, 0, %v1152
        %1154 = vst [vmem:[#allocation2 + $0x2c] sm:$0x1] %v1153
        %v1155 = vld [vmem:[#allocation2 + $0x38] sm:$0x1]
        %v1156 = vsel %vm1142, 0, %v1155
        %1157 = vst [vmem:[#allocation2 + $0x38] sm:$0x1] %v1156
        %v1158 = vld [vmem:[#allocation2 + $0x44] sm:$0x1]
        %v1159 = vsel %vm1142, 0, %v1158
        %1160 = vst [vmem:[#allocation2 + $0x44] sm:$0x1] %v1159
        %v1161 = vld [vmem:[#allocation2 + $0x50] sm:$0x1]
        %v1162 = vsel %vm1142, 0, %v1161
        %1163 = vst [vmem:[#allocation2 + $0x50] sm:$0x1] %v1162
        %v1164 = vld [vmem:[#allocation2 + $0x5c] sm:$0x1]
        %v1165 = vsel %vm1142, 0, %v1164
        %1166 = vst [vmem:[#allocation2 + $0x5c] sm:$0x1] %v1165
        %v1167 = vld [vmem:[#allocation2 + $0x68] sm:$0x1]
        %v1168 = vsel %vm1142, 0, %v1167
        %1169 = vst [vmem:[#allocation2 + $0x68] sm:$0x1] %v1168
        %v1170 = vld [vmem:[#allocation2 + $0x74] sm:$0x1]
        %v1171 = vsel %vm1142, 0, %v1170
        %1172 = vst [vmem:[#allocation2 + $0x74] sm:$0x1] %v1171
        %v1173 = vld [vmem:[#allocation2 + $0x80] sm:$0x1]
        %v1174 = vsel %vm1142, 0, %v1173
        %1175 = vst [vmem:[#allocation2 + $0x80] sm:$0x1] %v1174
        %v1176 = vld [vmem:[#allocation2 + $0x8c] sm:$0x1]
        %v1177 = vsel %vm1142, 0, %v1176
        %1178 = vst [vmem:[#allocation2 + $0x8c] sm:$0x1] %v1177
        %v1179 = vld [vmem:[#allocation2 + $0x98] sm:$0x1]
        %v1180 = vsel %vm1142, 0, %v1179
        %1181 = vst [vmem:[#allocation2 + $0x98] sm:$0x1] %v1180
        %v1182 = vld [vmem:[#allocation2 + $0xa4] sm:$0x1]
        %v1183 = vsel %vm1142, 0, %v1182
        %1184 = vst [vmem:[#allocation2 + $0xa4] sm:$0x1] %v1183
        %v1185 = vld [vmem:[#allocation2 + $0xb0] sm:$0x1]
        %v1186 = vsel %vm1142, 0, %v1185
        %1187 = vst [vmem:[#allocation2 + $0xb0] sm:$0x1] %v1186
        %v1188 = vld [vmem:[#allocation2 + $0xbc] sm:$0x1]
        %v1189 = vsel %vm1142, 0, %v1188
        %1190 = vst [vmem:[#allocation2 + $0xbc] sm:$0x1] %v1189
        %v1191 = vld [vmem:[#allocation2 + $0xc8] sm:$0x1]
        %v1192 = vsel %vm1142, 0, %v1191
        %1193 = vst [vmem:[#allocation2 + $0xc8] sm:$0x1] %v1192
        %v1194 = vld [vmem:[#allocation2 + $0xd4] sm:$0x1]
        %v1195 = vsel %vm1142, 0, %v1194
        %1196 = vst [vmem:[#allocation2 + $0xd4] sm:$0x1] %v1195
        %vm1197 = vcmask 27648
        %1198 = vst.msk [vmem:[#allocation3] sm:$0xf] %vm1197, 0
        %1199 = vst.msk [vmem:[#allocation3 + $0x4] sm:$0xf] %vm1197, 0
        %vm1200 = vcmask 25600
        %1201 = vst.msk [vmem:[#allocation3 + $0x8] sm:$0x3] %vm1200, 0
        %1202 = vst.msk [vmem:[#allocation3 + $0xc] sm:$0xf] %vm1197, 0
        %1203 = vst.msk [vmem:[#allocation3 + $0x10] sm:$0xf] %vm1197, 0
        %1204 = vst.msk [vmem:[#allocation3 + $0x14] sm:$0x3] %vm1200, 0
        %s1205 = scalar_lea.vmem [#allocation3], 216
        %1206 = vst.msk [vmem:[%s1205] sm:$0xf] %vm1197, 0
        %1207 = vst.msk [vmem:[%s1205 + $0x4] sm:$0xf] %vm1197, 0
        %1208 = vst.msk [vmem:[%s1205 + $0x8] sm:$0x3] %vm1200, 0
        %1209 = vst.msk [vmem:[%s1205 + $0xc] sm:$0xf] %vm1197, 0
        %1210 = vst.msk [vmem:[%s1205 + $0x10] sm:$0xf] %vm1197, 0
        %1211 = vst.msk [vmem:[%s1205 + $0x14] sm:$0x3] %vm1200, 0
        %vm1212 = vcmask 24576
        %1213 = vst.msk [vmem:[#allocation3] sm:$0x1] %vm1212, 0
        %1214 = vst.msk [vmem:[#allocation3 + $0xc] sm:$0x1] %vm1212, 0
        %1215 = vst.msk [vmem:[#allocation3 + $0x18] sm:$0x1] %vm1212, 0
        %1216 = vst.msk [vmem:[#allocation3 + $0x24] sm:$0x1] %vm1212, 0
        %1217 = vst.msk [vmem:[#allocation3 + $0x30] sm:$0x1] %vm1212, 0
        %1218 = vst.msk [vmem:[#allocation3 + $0x3c] sm:$0x1] %vm1212, 0
        %1219 = vst.msk [vmem:[#allocation3 + $0x48] sm:$0x1] %vm1212, 0
        %1220 = vst.msk [vmem:[#allocation3 + $0x54] sm:$0x1] %vm1212, 0
        %1221 = vst.msk [vmem:[#allocation3 + $0x60] sm:$0x1] %vm1212, 0
        %1222 = vst.msk [vmem:[#allocation3 + $0x6c] sm:$0x1] %vm1212, 0
        %1223 = vst.msk [vmem:[#allocation3 + $0x78] sm:$0x1] %vm1212, 0
        %1224 = vst.msk [vmem:[#allocation3 + $0x84] sm:$0x1] %vm1212, 0
        %1225 = vst.msk [vmem:[#allocation3 + $0x90] sm:$0x1] %vm1212, 0
        %1226 = vst.msk [vmem:[#allocation3 + $0x9c] sm:$0x1] %vm1212, 0
        %1227 = vst.msk [vmem:[#allocation3 + $0xa8] sm:$0x1] %vm1212, 0
        %1228 = vst.msk [vmem:[#allocation3 + $0xb4] sm:$0x1] %vm1212, 0
        %1229 = vst.msk [vmem:[#allocation3 + $0xc0] sm:$0x1] %vm1212, 0
        %1230 = vst.msk [vmem:[#allocation3 + $0xcc] sm:$0x1] %vm1212, 0
        %1231 = vst.msk [vmem:[#allocation3 + $0xd8] sm:$0x1] %vm1212, 0
        %1232 = vst.msk [vmem:[#allocation3 + $0xe4] sm:$0x1] %vm1212, 0
        %vm1233 = vcmask 25601
        %1234 = vst.msk [vmem:[#allocation3 + $0x8] sm:$0x2] %vm1233, 0
        %1235 = vst.msk [vmem:[#allocation3 + $0x14] sm:$0x2] %vm1233, 0
        %1236 = vst.msk [vmem:[#allocation3 + $0x20] sm:$0x2] %vm1233, 0
        %1237 = vst.msk [vmem:[#allocation3 + $0x2c] sm:$0x2] %vm1233, 0
        %1238 = vst.msk [vmem:[#allocation3 + $0x38] sm:$0x2] %vm1233, 0
        %1239 = vst.msk [vmem:[#allocation3 + $0x44] sm:$0x2] %vm1233, 0
        %1240 = vst.msk [vmem:[#allocation3 + $0x50] sm:$0x2] %vm1233, 0
        %1241 = vst.msk [vmem:[#allocation3 + $0x5c] sm:$0x2] %vm1233, 0
        %1242 = vst.msk [vmem:[#allocation3 + $0x68] sm:$0x2] %vm1233, 0
        %1243 = vst.msk [vmem:[#allocation3 + $0x74] sm:$0x2] %vm1233, 0
        %1244 = vst.msk [vmem:[#allocation3 + $0x80] sm:$0x2] %vm1233, 0
        %1245 = vst.msk [vmem:[#allocation3 + $0x8c] sm:$0x2] %vm1233, 0
        %1246 = vst.msk [vmem:[#allocation3 + $0x98] sm:$0x2] %vm1233, 0
        %1247 = vst.msk [vmem:[#allocation3 + $0xa4] sm:$0x2] %vm1233, 0
        %1248 = vst.msk [vmem:[#allocation3 + $0xb0] sm:$0x2] %vm1233, 0
        %1249 = vst.msk [vmem:[#allocation3 + $0xbc] sm:$0x2] %vm1233, 0
        %1250 = vst.msk [vmem:[#allocation3 + $0xc8] sm:$0x2] %vm1233, 0
        %1251 = vst.msk [vmem:[#allocation3 + $0xd4] sm:$0x2] %vm1233, 0
        %1252 = vst.msk [vmem:[#allocation3 + $0xe0] sm:$0x2] %vm1233, 0
        %1253 = vst.msk [vmem:[#allocation3 + $0xec] sm:$0x2] %vm1233, 0
        %v1254 = vpack.c.bf16 %v1044, %v1043
        %v1255 = vpack.c.bf16 %v1046, %v1045
        %v1256 = vpack.c.bf16 %v1048, %v1047
        %v1257 = vpack.c.bf16 %v1050, %v1049
        %v1258 = vpack.c.bf16 %v1052, %v1051
        %v1259 = vpack.c.bf16 %v1054, %v1053
        %v1260 = vpack.c.bf16 %v1056, %v1055
        %v1261 = vpack.c.bf16 %v1058, %v1057
        %v1262 = vpack.c.bf16 %v1060, %v1059
        %v1263 = vpack.c.bf16 %v1062, %v1061
        %v1264 = vpack.c.bf16 %v1064, %v1063
        %v1265 = vpack.c.bf16 %v1066, %v1065
        %v1266 = vpack.c.bf16 %v1068, %v1067
        %v1267 = vpack.c.bf16 %v1070, %v1069
        %v1268 = vpack.c.bf16 %v1072, %v1071
        %v1269 = vpack.c.bf16 %v1074, %v1073
        %v1286 = vunpack.c.l.b16 %v1254
        %v1287 = vunpack.c.h.b16 %v1254
        %v1288 = vunpack.c.l.b16 %v1255
        %v1289 = vunpack.c.h.b16 %v1255
        %v1290 = vunpack.c.l.b16 %v1256
        %v1291 = vunpack.c.h.b16 %v1256
        %v1292 = vunpack.c.l.b16 %v1257
        %v1293 = vunpack.c.h.b16 %v1257
        %v1294 = vunpack.c.l.b16 %v1258
        %v1295 = vunpack.c.h.b16 %v1258
        %v1296 = vunpack.c.l.b16 %v1259
        %v1297 = vunpack.c.h.b16 %v1259
        %v1298 = vunpack.c.l.b16 %v1260
        %v1299 = vunpack.c.h.b16 %v1260
        %v1300 = vunpack.c.l.b16 %v1261
        %v1301 = vunpack.c.h.b16 %v1261
        %v1302 = vunpack.c.l.b16 %v1262
        %v1303 = vunpack.c.h.b16 %v1262
        %v1304 = vunpack.c.l.b16 %v1263
        %v1305 = vunpack.c.h.b16 %v1263
        %v1306 = vunpack.c.l.b16 %v1264
        %v1307 = vunpack.c.h.b16 %v1264
        %v1308 = vunpack.c.l.b16 %v1265
        %v1309 = vunpack.c.h.b16 %v1265
        %v1310 = vunpack.c.l.b16 %v1266
        %v1311 = vunpack.c.h.b16 %v1266
        %v1312 = vunpack.c.l.b16 %v1267
        %v1313 = vunpack.c.h.b16 %v1267
        %v1314 = vunpack.c.l.b16 %v1268
        %v1315 = vunpack.c.h.b16 %v1268
        %v1316 = vunpack.c.l.b16 %v1269
        %v1317 = vunpack.c.h.b16 %v1269
        %v1318 = vpack.c.b16 %v1286, %v1286
        %v1319 = vpack.c.b16 %v1287, %v1287
        %v1320 = vpack.c.b16 %v1288, %v1288
        %v1321 = vpack.c.b16 %v1289, %v1289
        %v1322 = vpack.c.b16 %v1290, %v1290
        %v1323 = vpack.c.b16 %v1291, %v1291
        %v1324 = vpack.c.b16 %v1292, %v1292
        %v1325 = vpack.c.b16 %v1293, %v1293
        %v1326 = vpack.c.b16 %v1294, %v1294
        %v1327 = vpack.c.b16 %v1295, %v1295
        %v1328 = vpack.c.b16 %v1296, %v1296
        %v1329 = vpack.c.b16 %v1297, %v1297
        %v1330 = vpack.c.b16 %v1298, %v1298
        %v1331 = vpack.c.b16 %v1299, %v1299
        %v1332 = vpack.c.b16 %v1300, %v1300
        %v1333 = vpack.c.b16 %v1301, %v1301
        %v1334 = vpack.c.b16 %v1302, %v1302
        %v1335 = vpack.c.b16 %v1303, %v1303
        %v1336 = vpack.c.b16 %v1304, %v1304
        %v1337 = vpack.c.b16 %v1305, %v1305
        %v1338 = vpack.c.b16 %v1306, %v1306
        %v1339 = vpack.c.b16 %v1307, %v1307
        %v1340 = vpack.c.b16 %v1308, %v1308
        %v1341 = vpack.c.b16 %v1309, %v1309
        %v1342 = vpack.c.b16 %v1310, %v1310
        %v1343 = vpack.c.b16 %v1311, %v1311
        %v1344 = vpack.c.b16 %v1312, %v1312
        %v1345 = vpack.c.b16 %v1313, %v1313
        %v1346 = vpack.c.b16 %v1314, %v1314
        %v1347 = vpack.c.b16 %v1315, %v1315
        %v1348 = vpack.c.b16 %v1316, %v1316
        %v1349 = vpack.c.b16 %v1317, %v1317
        %vm1350 = vsmask.f32 4368
        %vm1351 = vmor %vm1085, %vm1350
        %v1353 = vshrl.u32 %v1318, 16
        %v1355 = vrot.slane %v1353, 7
        %v1356 = vshll.u32 %v1318, 16
        %v1358 = vor.u32 %v1355, %v1356
        %v1359 = vrot.slane %v1355, 4
        %v1361 = vshrl.u32 %v1319, 16
        %v1363 = vrot.slane %v1361, 7
        %v1364 = vshll.u32 %v1319, 16
        %v1366 = vor.u32 %v1363, %v1364
        %v1367 = vsel %vm1351, %v1359, %v1366
        %v1368 = vrot.slane %v1363, 4
        %v1370 = vshrl.u32 %v1320, 16
        %v1372 = vrot.slane %v1370, 7
        %v1373 = vshll.u32 %v1320, 16
        %v1375 = vor.u32 %v1372, %v1373
        %v1376 = vrot.slane %v1372, 4
        %v1378 = vshrl.u32 %v1321, 16
        %v1380 = vrot.slane %v1378, 7
        %v1381 = vshll.u32 %v1321, 16
        %v1383 = vor.u32 %v1380, %v1381
        %v1384 = vsel %vm1351, %v1376, %v1383
        %v1385 = vrot.slane %v1380, 4
        %v1387 = vshrl.u32 %v1322, 16
        %v1389 = vrot.slane %v1387, 7
        %v1390 = vshll.u32 %v1322, 16
        %v1392 = vor.u32 %v1389, %v1390
        %v1393 = vrot.slane %v1389, 4
        %v1395 = vshrl.u32 %v1323, 16
        %v1397 = vrot.slane %v1395, 7
        %v1398 = vshll.u32 %v1323, 16
        %v1400 = vor.u32 %v1397, %v1398
        %v1401 = vsel %vm1351, %v1393, %v1400
        %v1402 = vrot.slane %v1397, 4
        %v1404 = vshrl.u32 %v1324, 16
        %v1406 = vrot.slane %v1404, 7
        %v1407 = vshll.u32 %v1324, 16
        %v1409 = vor.u32 %v1406, %v1407
        %v1410 = vrot.slane %v1406, 4
        %v1412 = vshrl.u32 %v1325, 16
        %v1414 = vrot.slane %v1412, 7
        %v1415 = vshll.u32 %v1325, 16
        %v1417 = vor.u32 %v1414, %v1415
        %v1418 = vsel %vm1351, %v1410, %v1417
        %v1419 = vrot.slane %v1414, 4
        %v1421 = vshrl.u32 %v1326, 16
        %v1423 = vrot.slane %v1421, 7
        %v1424 = vshll.u32 %v1326, 16
        %v1426 = vor.u32 %v1423, %v1424
        %v1427 = vrot.slane %v1423, 4
        %v1429 = vshrl.u32 %v1327, 16
        %v1431 = vrot.slane %v1429, 7
        %v1432 = vshll.u32 %v1327, 16
        %v1434 = vor.u32 %v1431, %v1432
        %v1435 = vsel %vm1351, %v1427, %v1434
        %v1436 = vrot.slane %v1431, 4
        %v1438 = vshrl.u32 %v1328, 16
        %v1440 = vrot.slane %v1438, 7
        %v1441 = vshll.u32 %v1328, 16
        %v1443 = vor.u32 %v1440, %v1441
        %v1444 = vrot.slane %v1440, 4
        %v1446 = vshrl.u32 %v1329, 16
        %v1448 = vrot.slane %v1446, 7
        %v1449 = vshll.u32 %v1329, 16
        %v1451 = vor.u32 %v1448, %v1449
        %v1452 = vsel %vm1351, %v1444, %v1451
        %v1453 = vrot.slane %v1448, 4
        %v1455 = vshrl.u32 %v1330, 16
        %v1457 = vrot.slane %v1455, 7
        %v1458 = vshll.u32 %v1330, 16
        %v1460 = vor.u32 %v1457, %v1458
        %v1461 = vrot.slane %v1457, 4
        %v1463 = vshrl.u32 %v1331, 16
        %v1465 = vrot.slane %v1463, 7
        %v1466 = vshll.u32 %v1331, 16
        %v1468 = vor.u32 %v1465, %v1466
        %v1469 = vsel %vm1351, %v1461, %v1468
        %v1470 = vrot.slane %v1465, 4
        %v1472 = vshrl.u32 %v1332, 16
        %v1474 = vrot.slane %v1472, 7
        %v1475 = vshll.u32 %v1332, 16
        %v1477 = vor.u32 %v1474, %v1475
        %v1478 = vrot.slane %v1474, 4
        %v1480 = vshrl.u32 %v1333, 16
        %v1482 = vrot.slane %v1480, 7
        %v1483 = vshll.u32 %v1333, 16
        %v1485 = vor.u32 %v1482, %v1483
        %v1486 = vsel %vm1351, %v1478, %v1485
        %v1487 = vrot.slane %v1482, 4
        %v1489 = vshrl.u32 %v1334, 16
        %v1491 = vrot.slane %v1489, 7
        %v1492 = vshll.u32 %v1334, 16
        %v1494 = vor.u32 %v1491, %v1492
        %v1495 = vrot.slane %v1491, 4
        %v1497 = vshrl.u32 %v1335, 16
        %v1499 = vrot.slane %v1497, 7
        %v1500 = vshll.u32 %v1335, 16
        %v1502 = vor.u32 %v1499, %v1500
        %v1503 = vsel %vm1351, %v1495, %v1502
        %v1504 = vrot.slane %v1499, 4
        %v1506 = vshrl.u32 %v1336, 16
        %v1508 = vrot.slane %v1506, 7
        %v1509 = vshll.u32 %v1336, 16
        %v1511 = vor.u32 %v1508, %v1509
        %v1512 = vrot.slane %v1508, 4
        %v1514 = vshrl.u32 %v1337, 16
        %v1516 = vrot.slane %v1514, 7
        %v1517 = vshll.u32 %v1337, 16
        %v1519 = vor.u32 %v1516, %v1517
        %v1520 = vsel %vm1351, %v1512, %v1519
        %v1521 = vrot.slane %v1516, 4
        %v1523 = vshrl.u32 %v1338, 16
        %v1525 = vrot.slane %v1523, 7
        %v1526 = vshll.u32 %v1338, 16
        %v1528 = vor.u32 %v1525, %v1526
        %v1529 = vrot.slane %v1525, 4
        %v1531 = vshrl.u32 %v1339, 16
        %v1533 = vrot.slane %v1531, 7
        %v1534 = vshll.u32 %v1339, 16
        %v1536 = vor.u32 %v1533, %v1534
        %v1537 = vsel %vm1351, %v1529, %v1536
        %v1538 = vrot.slane %v1533, 4
        %v1540 = vshrl.u32 %v1340, 16
        %v1542 = vrot.slane %v1540, 7
        %v1543 = vshll.u32 %v1340, 16
        %v1545 = vor.u32 %v1542, %v1543
        %v1546 = vrot.slane %v1542, 4
        %v1548 = vshrl.u32 %v1341, 16
        %v1550 = vrot.slane %v1548, 7
        %v1551 = vshll.u32 %v1341, 16
        %v1553 = vor.u32 %v1550, %v1551
        %v1554 = vsel %vm1351, %v1546, %v1553
        %v1555 = vrot.slane %v1550, 4
        %v1557 = vshrl.u32 %v1342, 16
        %v1559 = vrot.slane %v1557, 7
        %v1560 = vshll.u32 %v1342, 16
        %v1562 = vor.u32 %v1559, %v1560
        %v1563 = vrot.slane %v1559, 4
        %v1565 = vshrl.u32 %v1343, 16
        %v1567 = vrot.slane %v1565, 7
        %v1568 = vshll.u32 %v1343, 16
        %v1570 = vor.u32 %v1567, %v1568
        %v1571 = vsel %vm1351, %v1563, %v1570
        %v1572 = vrot.slane %v1567, 4
        %v1574 = vshrl.u32 %v1344, 16
        %v1576 = vrot.slane %v1574, 7
        %v1577 = vshll.u32 %v1344, 16
        %v1579 = vor.u32 %v1576, %v1577
        %v1580 = vrot.slane %v1576, 4
        %v1582 = vshrl.u32 %v1345, 16
        %v1584 = vrot.slane %v1582, 7
        %v1585 = vshll.u32 %v1345, 16
        %v1587 = vor.u32 %v1584, %v1585
        %v1588 = vsel %vm1351, %v1580, %v1587
        %v1589 = vrot.slane %v1584, 4
        %v1591 = vshrl.u32 %v1346, 16
        %v1593 = vrot.slane %v1591, 7
        %v1594 = vshll.u32 %v1346, 16
        %v1596 = vor.u32 %v1593, %v1594
        %v1597 = vrot.slane %v1593, 4
        %v1599 = vshrl.u32 %v1347, 16
        %v1601 = vrot.slane %v1599, 7
        %v1602 = vshll.u32 %v1347, 16
        %v1604 = vor.u32 %v1601, %v1602
        %v1605 = vsel %vm1351, %v1597, %v1604
        %v1606 = vrot.slane %v1601, 4
        %v1608 = vshrl.u32 %v1348, 16
        %v1610 = vrot.slane %v1608, 7
        %v1611 = vshll.u32 %v1348, 16
        %v1613 = vor.u32 %v1610, %v1611
        %v1614 = vrot.slane %v1610, 4
        %v1616 = vshrl.u32 %v1349, 16
        %v1618 = vrot.slane %v1616, 7
        %v1619 = vshll.u32 %v1349, 16
        %v1621 = vor.u32 %v1618, %v1619
        %v1622 = vsel %vm1351, %v1614, %v1621
        %v1623 = vrot.slane %v1618, 4
        %1624 = vrot.lane.b32.xlu0 %v1358, 120
        %v1625 = vpop.permute.xlu0 %1624
        %1626 = vrot.lane.b32.xlu0 %v1367, 120
        %v1627 = vpop.permute.xlu0 %1626
        %1628 = vrot.lane.b32.xlu0 %v1368, 120
        %v1629 = vpop.permute.xlu0 %1628
        %1630 = vrot.lane.b32.xlu0 %v1375, 120
        %v1631 = vpop.permute.xlu0 %1630
        %1632 = vrot.lane.b32.xlu0 %v1384, 120
        %v1633 = vpop.permute.xlu0 %1632
        %1634 = vrot.lane.b32.xlu0 %v1385, 120
        %v1635 = vpop.permute.xlu0 %1634
        %1636 = vrot.lane.b32.xlu0 %v1392, 120
        %v1637 = vpop.permute.xlu0 %1636
        %1638 = vrot.lane.b32.xlu0 %v1401, 120
        %v1639 = vpop.permute.xlu0 %1638
        %1640 = vrot.lane.b32.xlu0 %v1402, 120
        %v1641 = vpop.permute.xlu0 %1640
        %1642 = vrot.lane.b32.xlu0 %v1409, 120
        %v1643 = vpop.permute.xlu0 %1642
        %1644 = vrot.lane.b32.xlu0 %v1418, 120
        %v1645 = vpop.permute.xlu0 %1644
        %1646 = vrot.lane.b32.xlu0 %v1419, 120
        %v1647 = vpop.permute.xlu0 %1646
        %1648 = vrot.lane.b32.xlu0 %v1426, 120
        %v1649 = vpop.permute.xlu0 %1648
        %1650 = vrot.lane.b32.xlu0 %v1435, 120
        %v1651 = vpop.permute.xlu0 %1650
        %1652 = vrot.lane.b32.xlu0 %v1436, 120
        %v1653 = vpop.permute.xlu0 %1652
        %1654 = vrot.lane.b32.xlu0 %v1443, 120
        %v1655 = vpop.permute.xlu0 %1654
        %1656 = vrot.lane.b32.xlu0 %v1452, 120
        %v1657 = vpop.permute.xlu0 %1656
        %1658 = vrot.lane.b32.xlu0 %v1453, 120
        %v1659 = vpop.permute.xlu0 %1658
        %1660 = vrot.lane.b32.xlu0 %v1460, 120
        %v1661 = vpop.permute.xlu0 %1660
        %1662 = vrot.lane.b32.xlu0 %v1469, 120
        %v1663 = vpop.permute.xlu0 %1662
        %1664 = vrot.lane.b32.xlu0 %v1470, 120
        %v1665 = vpop.permute.xlu0 %1664
        %1666 = vrot.lane.b32.xlu0 %v1477, 120
        %v1667 = vpop.permute.xlu0 %1666
        %1668 = vrot.lane.b32.xlu0 %v1486, 120
        %v1669 = vpop.permute.xlu0 %1668
        %1670 = vrot.lane.b32.xlu0 %v1487, 120
        %v1671 = vpop.permute.xlu0 %1670
        %1672 = vrot.lane.b32.xlu0 %v1494, 120
        %v1673 = vpop.permute.xlu0 %1672
        %1674 = vrot.lane.b32.xlu0 %v1503, 120
        %v1675 = vpop.permute.xlu0 %1674
        %1676 = vrot.lane.b32.xlu0 %v1504, 120
        %v1677 = vpop.permute.xlu0 %1676
        %1678 = vrot.lane.b32.xlu0 %v1511, 120
        %v1679 = vpop.permute.xlu0 %1678
        %1680 = vrot.lane.b32.xlu0 %v1520, 120
        %v1681 = vpop.permute.xlu0 %1680
        %1682 = vrot.lane.b32.xlu0 %v1521, 120
        %v1683 = vpop.permute.xlu0 %1682
        %1684 = vrot.lane.b32.xlu0 %v1528, 120
        %v1685 = vpop.permute.xlu0 %1684
        %1686 = vrot.lane.b32.xlu0 %v1537, 120
        %v1687 = vpop.permute.xlu0 %1686
        %1688 = vrot.lane.b32.xlu0 %v1538, 120
        %v1689 = vpop.permute.xlu0 %1688
        %1690 = vrot.lane.b32.xlu0 %v1545, 120
        %v1691 = vpop.permute.xlu0 %1690
        %1692 = vrot.lane.b32.xlu0 %v1554, 120
        %v1693 = vpop.permute.xlu0 %1692
        %1694 = vrot.lane.b32.xlu0 %v1555, 120
        %v1695 = vpop.permute.xlu0 %1694
        %1696 = vrot.lane.b32.xlu0 %v1562, 120
        %v1697 = vpop.permute.xlu0 %1696
        %1698 = vrot.lane.b32.xlu0 %v1571, 120
        %v1699 = vpop.permute.xlu0 %1698
        %1700 = vrot.lane.b32.xlu0 %v1572, 120
        %v1701 = vpop.permute.xlu0 %1700
        %1702 = vrot.lane.b32.xlu0 %v1579, 120
        %v1703 = vpop.permute.xlu0 %1702
        %1704 = vrot.lane.b32.xlu0 %v1588, 120
        %v1705 = vpop.permute.xlu0 %1704
        %1706 = vrot.lane.b32.xlu0 %v1589, 120
        %v1707 = vpop.permute.xlu0 %1706
        %1708 = vrot.lane.b32.xlu0 %v1596, 120
        %v1709 = vpop.permute.xlu0 %1708
        %1710 = vrot.lane.b32.xlu0 %v1605, 120
        %v1711 = vpop.permute.xlu0 %1710
        %1712 = vrot.lane.b32.xlu0 %v1606, 120
        %v1713 = vpop.permute.xlu0 %1712
        %1714 = vrot.lane.b32.xlu0 %v1613, 120
        %v1715 = vpop.permute.xlu0 %1714
        %1716 = vrot.lane.b32.xlu0 %v1622, 120
        %v1717 = vpop.permute.xlu0 %1716
        %1718 = vrot.lane.b32.xlu0 %v1623, 120
        %v1719 = vpop.permute.xlu0 %1718
        %s1768 = scalar_lea.vmem [#allocation2], 12
        %vm1769 = vcmask 60416
        %vm1770 = vmand %vm1769, %vm1141
        %v1771 = vld [vmem:[%s1768] sm:$0xf]
        %v1772 = vsel %vm1770, %v1625, %v1771
        %1773 = vst [vmem:[%s1768] sm:$0xf] %v1772
        %1774 = vst.msk [vmem:[%s1768 + $0x4] sm:$0xf] %vm1075, %v1627
        %v1775 = vld [vmem:[%s1768 + $0x8] sm:$0x1]
        %v1776 = vsel %vm1086, %v1629, %v1775
        %1777 = vst [vmem:[%s1768 + $0x8] sm:$0x1] %v1776
        %v1778 = vld [vmem:[%s1768 + $0xc] sm:$0xf]
        %v1779 = vsel %vm1770, %v1631, %v1778
        %1780 = vst [vmem:[%s1768 + $0xc] sm:$0xf] %v1779
        %1781 = vst.msk [vmem:[%s1768 + $0x10] sm:$0xf] %vm1075, %v1633
        %v1782 = vld [vmem:[%s1768 + $0x14] sm:$0x1]
        %v1783 = vsel %vm1086, %v1635, %v1782
        %1784 = vst [vmem:[%s1768 + $0x14] sm:$0x1] %v1783
        %v1785 = vld [vmem:[%s1768 + $0x18] sm:$0xf]
        %v1786 = vsel %vm1770, %v1637, %v1785
        %1787 = vst [vmem:[%s1768 + $0x18] sm:$0xf] %v1786
        %1788 = vst.msk [vmem:[%s1768 + $0x1c] sm:$0xf] %vm1075, %v1639
        %v1789 = vld [vmem:[%s1768 + $0x20] sm:$0x1]
        %v1790 = vsel %vm1086, %v1641, %v1789
        %1791 = vst [vmem:[%s1768 + $0x20] sm:$0x1] %v1790
        %v1792 = vld [vmem:[%s1768 + $0x24] sm:$0xf]
        %v1793 = vsel %vm1770, %v1643, %v1792
        %1794 = vst [vmem:[%s1768 + $0x24] sm:$0xf] %v1793
        %1795 = vst.msk [vmem:[%s1768 + $0x28] sm:$0xf] %vm1075, %v1645
        %v1796 = vld [vmem:[%s1768 + $0x2c] sm:$0x1]
        %v1797 = vsel %vm1086, %v1647, %v1796
        %1798 = vst [vmem:[%s1768 + $0x2c] sm:$0x1] %v1797
        %v1799 = vld [vmem:[%s1768 + $0x30] sm:$0xf]
        %v1800 = vsel %vm1770, %v1649, %v1799
        %1801 = vst [vmem:[%s1768 + $0x30] sm:$0xf] %v1800
        %1802 = vst.msk [vmem:[%s1768 + $0x34] sm:$0xf] %vm1075, %v1651
        %v1803 = vld [vmem:[%s1768 + $0x38] sm:$0x1]
        %v1804 = vsel %vm1086, %v1653, %v1803
        %1805 = vst [vmem:[%s1768 + $0x38] sm:$0x1] %v1804
        %v1806 = vld [vmem:[%s1768 + $0x3c] sm:$0xf]
        %v1807 = vsel %vm1770, %v1655, %v1806
        %1808 = vst [vmem:[%s1768 + $0x3c] sm:$0xf] %v1807
        %1809 = vst.msk [vmem:[%s1768 + $0x40] sm:$0xf] %vm1075, %v1657
        %v1810 = vld [vmem:[%s1768 + $0x44] sm:$0x1]
        %v1811 = vsel %vm1086, %v1659, %v1810
        %1812 = vst [vmem:[%s1768 + $0x44] sm:$0x1] %v1811
        %v1813 = vld [vmem:[%s1768 + $0x48] sm:$0xf]
        %v1814 = vsel %vm1770, %v1661, %v1813
        %1815 = vst [vmem:[%s1768 + $0x48] sm:$0xf] %v1814
        %1816 = vst.msk [vmem:[%s1768 + $0x4c] sm:$0xf] %vm1075, %v1663
        %v1817 = vld [vmem:[%s1768 + $0x50] sm:$0x1]
        %v1818 = vsel %vm1086, %v1665, %v1817
        %1819 = vst [vmem:[%s1768 + $0x50] sm:$0x1] %v1818
        %v1820 = vld [vmem:[%s1768 + $0x54] sm:$0xf]
        %v1821 = vsel %vm1770, %v1667, %v1820
        %1822 = vst [vmem:[%s1768 + $0x54] sm:$0xf] %v1821
        %1823 = vst.msk [vmem:[%s1768 + $0x58] sm:$0xf] %vm1075, %v1669
        %v1824 = vld [vmem:[%s1768 + $0x5c] sm:$0x1]
        %v1825 = vsel %vm1086, %v1671, %v1824
        %1826 = vst [vmem:[%s1768 + $0x5c] sm:$0x1] %v1825
        %v1827 = vld [vmem:[%s1768 + $0x60] sm:$0xf]
        %v1828 = vsel %vm1770, %v1673, %v1827
        %1829 = vst [vmem:[%s1768 + $0x60] sm:$0xf] %v1828
        %1830 = vst.msk [vmem:[%s1768 + $0x64] sm:$0xf] %vm1075, %v1675
        %v1831 = vld [vmem:[%s1768 + $0x68] sm:$0x1]
        %v1832 = vsel %vm1086, %v1677, %v1831
        %1833 = vst [vmem:[%s1768 + $0x68] sm:$0x1] %v1832
        %v1834 = vld [vmem:[%s1768 + $0x6c] sm:$0xf]
        %v1835 = vsel %vm1770, %v1679, %v1834
        %1836 = vst [vmem:[%s1768 + $0x6c] sm:$0xf] %v1835
        %1837 = vst.msk [vmem:[%s1768 + $0x70] sm:$0xf] %vm1075, %v1681
        %v1838 = vld [vmem:[%s1768 + $0x74] sm:$0x1]
        %v1839 = vsel %vm1086, %v1683, %v1838
        %1840 = vst [vmem:[%s1768 + $0x74] sm:$0x1] %v1839
        %v1841 = vld [vmem:[%s1768 + $0x78] sm:$0xf]
        %v1842 = vsel %vm1770, %v1685, %v1841
        %1843 = vst [vmem:[%s1768 + $0x78] sm:$0xf] %v1842
        %1844 = vst.msk [vmem:[%s1768 + $0x7c] sm:$0xf] %vm1075, %v1687
        %v1845 = vld [vmem:[%s1768 + $0x80] sm:$0x1]
        %v1846 = vsel %vm1086, %v1689, %v1845
        %1847 = vst [vmem:[%s1768 + $0x80] sm:$0x1] %v1846
        %v1848 = vld [vmem:[%s1768 + $0x84] sm:$0xf]
        %v1849 = vsel %vm1770, %v1691, %v1848
        %1850 = vst [vmem:[%s1768 + $0x84] sm:$0xf] %v1849
        %1851 = vst.msk [vmem:[%s1768 + $0x88] sm:$0xf] %vm1075, %v1693
        %v1852 = vld [vmem:[%s1768 + $0x8c] sm:$0x1]
        %v1853 = vsel %vm1086, %v1695, %v1852
        %1854 = vst [vmem:[%s1768 + $0x8c] sm:$0x1] %v1853
        %v1855 = vld [vmem:[%s1768 + $0x90] sm:$0xf]
        %v1856 = vsel %vm1770, %v1697, %v1855
        %1857 = vst [vmem:[%s1768 + $0x90] sm:$0xf] %v1856
        %1858 = vst.msk [vmem:[%s1768 + $0x94] sm:$0xf] %vm1075, %v1699
        %v1859 = vld [vmem:[%s1768 + $0x98] sm:$0x1]
        %v1860 = vsel %vm1086, %v1701, %v1859
        %1861 = vst [vmem:[%s1768 + $0x98] sm:$0x1] %v1860
        %v1862 = vld [vmem:[%s1768 + $0x9c] sm:$0xf]
        %v1863 = vsel %vm1770, %v1703, %v1862
        %1864 = vst [vmem:[%s1768 + $0x9c] sm:$0xf] %v1863
        %1865 = vst.msk [vmem:[%s1768 + $0xa0] sm:$0xf] %vm1075, %v1705
        %v1866 = vld [vmem:[%s1768 + $0xa4] sm:$0x1]
        %v1867 = vsel %vm1086, %v1707, %v1866
        %1868 = vst [vmem:[%s1768 + $0xa4] sm:$0x1] %v1867
        %v1869 = vld [vmem:[%s1768 + $0xa8] sm:$0xf]
        %v1870 = vsel %vm1770, %v1709, %v1869
        %1871 = vst [vmem:[%s1768 + $0xa8] sm:$0xf] %v1870
        %1872 = vst.msk [vmem:[%s1768 + $0xac] sm:$0xf] %vm1075, %v1711
        %v1873 = vld [vmem:[%s1768 + $0xb0] sm:$0x1]
        %v1874 = vsel %vm1086, %v1713, %v1873
        %1875 = vst [vmem:[%s1768 + $0xb0] sm:$0x1] %v1874
        %v1876 = vld [vmem:[%s1768 + $0xb4] sm:$0xf]
        %v1877 = vsel %vm1770, %v1715, %v1876
        %1878 = vst [vmem:[%s1768 + $0xb4] sm:$0xf] %v1877
        %1879 = vst.msk [vmem:[%s1768 + $0xb8] sm:$0xf] %vm1075, %v1717
        %v1880 = vld [vmem:[%s1768 + $0xbc] sm:$0x1]
        %v1881 = vsel %vm1086, %v1719, %v1880
        %1882 = vst [vmem:[%s1768 + $0xbc] sm:$0x1] %v1881
        %v1883 = vld [vmem:[#allocation2] sm:$0xf]
        %v1884 = vld [vmem:[#allocation2 + $0x4] sm:$0xf]
        %v1885 = vld [vmem:[#allocation2 + $0x8] sm:$0x1]
        %v1886 = vld [vmem:[#allocation2 + $0xc] sm:$0xf]
        %v1887 = vld [vmem:[#allocation2 + $0x10] sm:$0xf]
        %v1888 = vld [vmem:[#allocation2 + $0x14] sm:$0x1]
        %v1889 = vld [vmem:[#allocation2 + $0x18] sm:$0xf]
        %v1890 = vld [vmem:[#allocation2 + $0x1c] sm:$0xf]
        %v1891 = vld [vmem:[#allocation2 + $0x20] sm:$0x1]
        %v1892 = vld [vmem:[#allocation2 + $0x24] sm:$0xf]
        %v1893 = vld [vmem:[#allocation2 + $0x28] sm:$0xf]
        %v1894 = vld [vmem:[#allocation2 + $0x2c] sm:$0x1]
        %v1895 = vld [vmem:[#allocation2 + $0x30] sm:$0xf]
        %v1896 = vld [vmem:[#allocation2 + $0x34] sm:$0xf]
        %v1897 = vld [vmem:[#allocation2 + $0x38] sm:$0x1]
        %v1898 = vld [vmem:[#allocation2 + $0x3c] sm:$0xf]
        %v1899 = vld [vmem:[#allocation2 + $0x40] sm:$0xf]
        %v1900 = vld [vmem:[#allocation2 + $0x44] sm:$0x1]
        %v1901 = vld [vmem:[#allocation2 + $0x48] sm:$0xf]
        %v1902 = vld [vmem:[#allocation2 + $0x4c] sm:$0xf]
        %v1903 = vld [vmem:[#allocation2 + $0x50] sm:$0x1]
        %v1904 = vld [vmem:[#allocation2 + $0x54] sm:$0xf]
        %v1905 = vld [vmem:[#allocation2 + $0x58] sm:$0xf]
        %v1906 = vld [vmem:[#allocation2 + $0x5c] sm:$0x1]
        %v1907 = vld [vmem:[#allocation2 + $0x60] sm:$0xf]
        %v1908 = vld [vmem:[#allocation2 + $0x64] sm:$0xf]
        %v1909 = vld [vmem:[#allocation2 + $0x68] sm:$0x1]
        %v1910 = vld [vmem:[#allocation2 + $0x6c] sm:$0xf]
        %v1911 = vld [vmem:[#allocation2 + $0x70] sm:$0xf]
        %v1912 = vld [vmem:[#allocation2 + $0x74] sm:$0x1]
        %v1913 = vld [vmem:[#allocation2 + $0x78] sm:$0xf]
        %v1914 = vld [vmem:[#allocation2 + $0x7c] sm:$0xf]
        %v1915 = vld [vmem:[#allocation2 + $0x80] sm:$0x1]
        %v1916 = vld [vmem:[#allocation2 + $0x84] sm:$0xf]
        %v1917 = vld [vmem:[#allocation2 + $0x88] sm:$0xf]
        %v1918 = vld [vmem:[#allocation2 + $0x8c] sm:$0x1]
        %v1919 = vld [vmem:[#allocation2 + $0x90] sm:$0xf]
        %v1920 = vld [vmem:[#allocation2 + $0x94] sm:$0xf]
        %v1921 = vld [vmem:[#allocation2 + $0x98] sm:$0x1]
        %v1922 = vld [vmem:[#allocation2 + $0x9c] sm:$0xf]
        %v1923 = vld [vmem:[#allocation2 + $0xa0] sm:$0xf]
        %v1924 = vld [vmem:[#allocation2 + $0xa4] sm:$0x1]
        %v1925 = vld [vmem:[#allocation2 + $0xa8] sm:$0xf]
        %v1926 = vld [vmem:[#allocation2 + $0xac] sm:$0xf]
        %v1927 = vld [vmem:[#allocation2 + $0xb0] sm:$0x1]
        %v1928 = vld [vmem:[#allocation2 + $0xb4] sm:$0xf]
        %v1929 = vld [vmem:[#allocation2 + $0xb8] sm:$0xf]
        %v1930 = vld [vmem:[#allocation2 + $0xbc] sm:$0x1]
        %v1931 = vld [vmem:[#allocation2 + $0xc0] sm:$0xf]
        %v1932 = vld [vmem:[#allocation2 + $0xc4] sm:$0xf]
        %v1933 = vld [vmem:[#allocation2 + $0xc8] sm:$0x1]
        %v1934 = vld [vmem:[#allocation2 + $0xcc] sm:$0xf]
        %v1935 = vld [vmem:[#allocation2 + $0xd0] sm:$0xf]
        %v1936 = vld [vmem:[#allocation2 + $0xd4] sm:$0x1]
        %v1969 = vunpack.c.l.b16 %v1883
        %v1970 = vunpack.c.l.b16 %v1884
        %v1971 = vunpack.c.l.b16 %v1886
        %v1972 = vunpack.c.l.b16 %v1887
        %v1973 = vunpack.c.l.b16 %v1889
        %v1974 = vunpack.c.l.b16 %v1890
        %v1975 = vunpack.c.l.b16 %v1892
        %v1976 = vunpack.c.l.b16 %v1893
        %v1977 = vunpack.c.l.b16 %v1895
        %v1978 = vunpack.c.l.b16 %v1896
        %v1979 = vunpack.c.l.b16 %v1898
        %v1980 = vunpack.c.l.b16 %v1899
        %v1981 = vunpack.c.l.b16 %v1901
        %v1982 = vunpack.c.l.b16 %v1902
        %v1983 = vunpack.c.l.b16 %v1904
        %v1984 = vunpack.c.l.b16 %v1905
        %v1985 = vunpack.c.l.b16 %v1907
        %v1986 = vunpack.c.l.b16 %v1908
        %v1987 = vunpack.c.l.b16 %v1910
        %v1988 = vunpack.c.l.b16 %v1911
        %v1989 = vunpack.c.l.b16 %v1913
        %v1990 = vunpack.c.l.b16 %v1914
        %v1991 = vunpack.c.l.b16 %v1916
        %v1992 = vunpack.c.l.b16 %v1917
        %v1993 = vunpack.c.l.b16 %v1919
        %v1994 = vunpack.c.l.b16 %v1920
        %v1995 = vunpack.c.l.b16 %v1922
        %v1996 = vunpack.c.l.b16 %v1923
        %v1997 = vunpack.c.l.b16 %v1925
        %v1998 = vunpack.c.l.b16 %v1926
        %v1999 = vunpack.c.l.b16 %v1928
        %v2000 = vunpack.c.l.b16 %v1929
        %v2001 = vpack.c.b16 %v1970, %v1969
        %v2002 = vpack.c.b16 %v1972, %v1971
        %v2003 = vpack.c.b16 %v1974, %v1973
        %v2004 = vpack.c.b16 %v1976, %v1975
        %v2005 = vpack.c.b16 %v1978, %v1977
        %v2006 = vpack.c.b16 %v1980, %v1979
        %v2007 = vpack.c.b16 %v1982, %v1981
        %v2008 = vpack.c.b16 %v1984, %v1983
        %v2009 = vpack.c.b16 %v1986, %v1985
        %v2010 = vpack.c.b16 %v1988, %v1987
        %v2011 = vpack.c.b16 %v1990, %v1989
        %v2012 = vpack.c.b16 %v1992, %v1991
        %v2013 = vpack.c.b16 %v1994, %v1993
        %v2014 = vpack.c.b16 %v1996, %v1995
        %v2015 = vpack.c.b16 %v1998, %v1997
        %v2016 = vpack.c.b16 %v2000, %v1999
        %v2033 = vunpack.c.l.b16 %v1885
        %v2034 = vunpack.c.l.b16 %v1888
        %v2035 = vunpack.c.l.b16 %v1891
        %v2036 = vunpack.c.l.b16 %v1894
        %v2037 = vunpack.c.l.b16 %v1897
        %v2038 = vunpack.c.l.b16 %v1900
        %v2039 = vunpack.c.l.b16 %v1903
        %v2040 = vunpack.c.l.b16 %v1906
        %v2041 = vunpack.c.l.b16 %v1909
        %v2042 = vunpack.c.l.b16 %v1912
        %v2043 = vunpack.c.l.b16 %v1915
        %v2044 = vunpack.c.l.b16 %v1918
        %v2045 = vunpack.c.l.b16 %v1921
        %v2046 = vunpack.c.l.b16 %v1924
        %v2047 = vunpack.c.l.b16 %v1927
        %v2048 = vunpack.c.l.b16 %v1930
        %v2049 = vpack.c.b16 %v2033, %v2033
        %v2050 = vpack.c.b16 %v2034, %v2034
        %v2051 = vpack.c.b16 %v2035, %v2035
        %v2052 = vpack.c.b16 %v2036, %v2036
        %v2053 = vpack.c.b16 %v2037, %v2037
        %v2054 = vpack.c.b16 %v2038, %v2038
        %v2055 = vpack.c.b16 %v2039, %v2039
        %v2056 = vpack.c.b16 %v2040, %v2040
        %v2057 = vpack.c.b16 %v2041, %v2041
        %v2058 = vpack.c.b16 %v2042, %v2042
        %v2059 = vpack.c.b16 %v2043, %v2043
        %v2060 = vpack.c.b16 %v2044, %v2044
        %v2061 = vpack.c.b16 %v2045, %v2045
        %v2062 = vpack.c.b16 %v2046, %v2046
        %v2063 = vpack.c.b16 %v2047, %v2047
        %v2064 = vpack.c.b16 %v2048, %v2048
        %vm2065 = vsmask.f32 7424
        %v2067 = vshrl.u32 %v2001, 16
        %v2069 = vshll.u32 %v2001, 16
        %v2071 = vrot.slane %v2069, 1
        %v2072 = vor.u32 %v2067, %v2071
        %v2074 = vshll.u32 %v2049, 16
        %v2076 = vrot.slane %v2074, 1
        %v2077 = vsel %vm2065, %v2072, %v2076
        %v2079 = vshrl.u32 %v2002, 16
        %v2081 = vshll.u32 %v2002, 16
        %v2083 = vrot.slane %v2081, 1
        %v2084 = vor.u32 %v2079, %v2083
        %v2086 = vshll.u32 %v2050, 16
        %v2088 = vrot.slane %v2086, 1
        %v2089 = vsel %vm2065, %v2084, %v2088
        %v2091 = vshrl.u32 %v2003, 16
        %v2093 = vshll.u32 %v2003, 16
        %v2095 = vrot.slane %v2093, 1
        %v2096 = vor.u32 %v2091, %v2095
        %v2098 = vshll.u32 %v2051, 16
        %v2100 = vrot.slane %v2098, 1
        %v2101 = vsel %vm2065, %v2096, %v2100
        %v2103 = vshrl.u32 %v2004, 16
        %v2105 = vshll.u32 %v2004, 16
        %v2107 = vrot.slane %v2105, 1
        %v2108 = vor.u32 %v2103, %v2107
        %v2110 = vshll.u32 %v2052, 16
        %v2112 = vrot.slane %v2110, 1
        %v2113 = vsel %vm2065, %v2108, %v2112
        %v2115 = vshrl.u32 %v2005, 16
        %v2117 = vshll.u32 %v2005, 16
        %v2119 = vrot.slane %v2117, 1
        %v2120 = vor.u32 %v2115, %v2119
        %v2122 = vshll.u32 %v2053, 16
        %v2124 = vrot.slane %v2122, 1
        %v2125 = vsel %vm2065, %v2120, %v2124
        %v2127 = vshrl.u32 %v2006, 16
        %v2129 = vshll.u32 %v2006, 16
        %v2131 = vrot.slane %v2129, 1
        %v2132 = vor.u32 %v2127, %v2131
        %v2134 = vshll.u32 %v2054, 16
        %v2136 = vrot.slane %v2134, 1
        %v2137 = vsel %vm2065, %v2132, %v2136
        %v2139 = vshrl.u32 %v2007, 16
        %v2141 = vshll.u32 %v2007, 16
        %v2143 = vrot.slane %v2141, 1
        %v2144 = vor.u32 %v2139, %v2143
        %v2146 = vshll.u32 %v2055, 16
        %v2148 = vrot.slane %v2146, 1
        %v2149 = vsel %vm2065, %v2144, %v2148
        %v2151 = vshrl.u32 %v2008, 16
        %v2153 = vshll.u32 %v2008, 16
        %v2155 = vrot.slane %v2153, 1
        %v2156 = vor.u32 %v2151, %v2155
        %v2158 = vshll.u32 %v2056, 16
        %v2160 = vrot.slane %v2158, 1
        %v2161 = vsel %vm2065, %v2156, %v2160
        %v2163 = vshrl.u32 %v2009, 16
        %v2165 = vshll.u32 %v2009, 16
        %v2167 = vrot.slane %v2165, 1
        %v2168 = vor.u32 %v2163, %v2167
        %v2170 = vshll.u32 %v2057, 16
        %v2172 = vrot.slane %v2170, 1
        %v2173 = vsel %vm2065, %v2168, %v2172
        %v2175 = vshrl.u32 %v2010, 16
        %v2177 = vshll.u32 %v2010, 16
        %v2179 = vrot.slane %v2177, 1
        %v2180 = vor.u32 %v2175, %v2179
        %v2182 = vshll.u32 %v2058, 16
        %v2184 = vrot.slane %v2182, 1
        %v2185 = vsel %vm2065, %v2180, %v2184
        %v2187 = vshrl.u32 %v2011, 16
        %v2189 = vshll.u32 %v2011, 16
        %v2191 = vrot.slane %v2189, 1
        %v2192 = vor.u32 %v2187, %v2191
        %v2194 = vshll.u32 %v2059, 16
        %v2196 = vrot.slane %v2194, 1
        %v2197 = vsel %vm2065, %v2192, %v2196
        %v2199 = vshrl.u32 %v2012, 16
        %v2201 = vshll.u32 %v2012, 16
        %v2203 = vrot.slane %v2201, 1
        %v2204 = vor.u32 %v2199, %v2203
        %v2206 = vshll.u32 %v2060, 16
        %v2208 = vrot.slane %v2206, 1
        %v2209 = vsel %vm2065, %v2204, %v2208
        %v2211 = vshrl.u32 %v2013, 16
        %v2213 = vshll.u32 %v2013, 16
        %v2215 = vrot.slane %v2213, 1
        %v2216 = vor.u32 %v2211, %v2215
        %v2218 = vshll.u32 %v2061, 16
        %v2220 = vrot.slane %v2218, 1
        %v2221 = vsel %vm2065, %v2216, %v2220
        %v2223 = vshrl.u32 %v2014, 16
        %v2225 = vshll.u32 %v2014, 16
        %v2227 = vrot.slane %v2225, 1
        %v2228 = vor.u32 %v2223, %v2227
        %v2230 = vshll.u32 %v2062, 16
        %v2232 = vrot.slane %v2230, 1
        %v2233 = vsel %vm2065, %v2228, %v2232
        %v2235 = vshrl.u32 %v2015, 16
        %v2237 = vshll.u32 %v2015, 16
        %v2239 = vrot.slane %v2237, 1
        %v2240 = vor.u32 %v2235, %v2239
        %v2242 = vshll.u32 %v2063, 16
        %v2244 = vrot.slane %v2242, 1
        %v2245 = vsel %vm2065, %v2240, %v2244
        %v2247 = vshrl.u32 %v2016, 16
        %v2249 = vshll.u32 %v2016, 16
        %v2251 = vrot.slane %v2249, 1
        %v2252 = vor.u32 %v2247, %v2251
        %v2254 = vshll.u32 %v2064, 16
        %v2256 = vrot.slane %v2254, 1
        %v2257 = vsel %vm2065, %v2252, %v2256
        %2258 = vrot.lane.b32.xlu0 %v2077, 8
        %v2259 = vpop.permute.xlu0 %2258
        %2260 = vrot.lane.b32.xlu0 %v2089, 8
        %v2261 = vpop.permute.xlu0 %2260
        %2262 = vrot.lane.b32.xlu0 %v2101, 8
        %v2263 = vpop.permute.xlu0 %2262
        %2264 = vrot.lane.b32.xlu0 %v2113, 8
        %v2265 = vpop.permute.xlu0 %2264
        %2266 = vrot.lane.b32.xlu0 %v2125, 8
        %v2267 = vpop.permute.xlu0 %2266
        %2268 = vrot.lane.b32.xlu0 %v2137, 8
        %v2269 = vpop.permute.xlu0 %2268
        %2270 = vrot.lane.b32.xlu0 %v2149, 8
        %v2271 = vpop.permute.xlu0 %2270
        %2272 = vrot.lane.b32.xlu0 %v2161, 8
        %v2273 = vpop.permute.xlu0 %2272
        %2274 = vrot.lane.b32.xlu0 %v2173, 8
        %v2275 = vpop.permute.xlu0 %2274
        %2276 = vrot.lane.b32.xlu0 %v2185, 8
        %v2277 = vpop.permute.xlu0 %2276
        %2278 = vrot.lane.b32.xlu0 %v2197, 8
        %v2279 = vpop.permute.xlu0 %2278
        %2280 = vrot.lane.b32.xlu0 %v2209, 8
        %v2281 = vpop.permute.xlu0 %2280
        %2282 = vrot.lane.b32.xlu0 %v2221, 8
        %v2283 = vpop.permute.xlu0 %2282
        %2284 = vrot.lane.b32.xlu0 %v2233, 8
        %v2285 = vpop.permute.xlu0 %2284
        %2286 = vrot.lane.b32.xlu0 %v2245, 8
        %v2287 = vpop.permute.xlu0 %2286
        %2288 = vrot.lane.b32.xlu0 %v2257, 8
        %v2289 = vpop.permute.xlu0 %2288
        %vm2290 = vcmask 1046528
        %v2291 = vrot.slane %v2001, 1
        %v2292 = vrot.slane %v2049, 1
        %v2293 = vsel %vm2290, %v2291, %v2292
        %v2294 = vrot.slane %v2002, 1
        %v2295 = vrot.slane %v2050, 1
        %v2296 = vsel %vm2290, %v2294, %v2295
        %v2297 = vrot.slane %v2003, 1
        %v2298 = vrot.slane %v2051, 1
        %v2299 = vsel %vm2290, %v2297, %v2298
        %v2300 = vrot.slane %v2004, 1
        %v2301 = vrot.slane %v2052, 1
        %v2302 = vsel %vm2290, %v2300, %v2301
        %v2303 = vrot.slane %v2005, 1
        %v2304 = vrot.slane %v2053, 1
        %v2305 = vsel %vm2290, %v2303, %v2304
        %v2306 = vrot.slane %v2006, 1
        %v2307 = vrot.slane %v2054, 1
        %v2308 = vsel %vm2290, %v2306, %v2307
        %v2309 = vrot.slane %v2007, 1
        %v2310 = vrot.slane %v2055, 1
        %v2311 = vsel %vm2290, %v2309, %v2310
        %v2312 = vrot.slane %v2008, 1
        %v2313 = vrot.slane %v2056, 1
        %v2314 = vsel %vm2290, %v2312, %v2313
        %v2315 = vrot.slane %v2009, 1
        %v2316 = vrot.slane %v2057, 1
        %v2317 = vsel %vm2290, %v2315, %v2316
        %v2318 = vrot.slane %v2010, 1
        %v2319 = vrot.slane %v2058, 1
        %v2320 = vsel %vm2290, %v2318, %v2319
        %v2321 = vrot.slane %v2011, 1
        %v2322 = vrot.slane %v2059, 1
        %v2323 = vsel %vm2290, %v2321, %v2322
        %v2324 = vrot.slane %v2012, 1
        %v2325 = vrot.slane %v2060, 1
        %v2326 = vsel %vm2290, %v2324, %v2325
        %v2327 = vrot.slane %v2013, 1
        %v2328 = vrot.slane %v2061, 1
        %v2329 = vsel %vm2290, %v2327, %v2328
        %v2330 = vrot.slane %v2014, 1
        %v2331 = vrot.slane %v2062, 1
        %v2332 = vsel %vm2290, %v2330, %v2331
        %v2333 = vrot.slane %v2015, 1
        %v2334 = vrot.slane %v2063, 1
        %v2335 = vsel %vm2290, %v2333, %v2334
        %v2336 = vrot.slane %v2016, 1
        %v2337 = vrot.slane %v2064, 1
        %v2338 = vsel %vm2290, %v2336, %v2337
        %2339 = vrot.lane.b32.xlu0 %v2293, 16
        %v2340 = vpop.permute.xlu0 %2339
        %2341 = vrot.lane.b32.xlu0 %v2296, 16
        %v2342 = vpop.permute.xlu0 %2341
        %2343 = vrot.lane.b32.xlu0 %v2299, 16
        %v2344 = vpop.permute.xlu0 %2343
        %2345 = vrot.lane.b32.xlu0 %v2302, 16
        %v2346 = vpop.permute.xlu0 %2345
        %2347 = vrot.lane.b32.xlu0 %v2305, 16
        %v2348 = vpop.permute.xlu0 %2347
        %2349 = vrot.lane.b32.xlu0 %v2308, 16
        %v2350 = vpop.permute.xlu0 %2349
        %2351 = vrot.lane.b32.xlu0 %v2311, 16
        %v2352 = vpop.permute.xlu0 %2351
        %2353 = vrot.lane.b32.xlu0 %v2314, 16
        %v2354 = vpop.permute.xlu0 %2353
        %2355 = vrot.lane.b32.xlu0 %v2317, 16
        %v2356 = vpop.permute.xlu0 %2355
        %2357 = vrot.lane.b32.xlu0 %v2320, 16
        %v2358 = vpop.permute.xlu0 %2357
        %2359 = vrot.lane.b32.xlu0 %v2323, 16
        %v2360 = vpop.permute.xlu0 %2359
        %2361 = vrot.lane.b32.xlu0 %v2326, 16
        %v2362 = vpop.permute.xlu0 %2361
        %2363 = vrot.lane.b32.xlu0 %v2329, 16
        %v2364 = vpop.permute.xlu0 %2363
        %2365 = vrot.lane.b32.xlu0 %v2332, 16
        %v2366 = vpop.permute.xlu0 %2365
        %2367 = vrot.lane.b32.xlu0 %v2335, 16
        %v2368 = vpop.permute.xlu0 %2367
        %2369 = vrot.lane.b32.xlu0 %v2338, 16
        %v2370 = vpop.permute.xlu0 %2369
        %vm2371 = vcmask 64512
        %v2373 = vsel %vm2371, %v2001, %v2259
        %v2375 = vsel %vm2371, %v2002, %v2261
        %v2377 = vsel %vm2371, %v2003, %v2263
        %v2379 = vsel %vm2371, %v2004, %v2265
        %v2381 = vsel %vm2371, %v2005, %v2267
        %v2383 = vsel %vm2371, %v2006, %v2269
        %v2385 = vsel %vm2371, %v2007, %v2271
        %v2387 = vsel %vm2371, %v2008, %v2273
        %v2389 = vsel %vm2371, %v2009, %v2275
        %v2391 = vsel %vm2371, %v2010, %v2277
        %v2393 = vsel %vm2371, %v2011, %v2279
        %v2395 = vsel %vm2371, %v2012, %v2281
        %v2397 = vsel %vm2371, %v2013, %v2283
        %v2399 = vsel %vm2371, %v2014, %v2285
        %v2401 = vsel %vm2371, %v2015, %v2287
        %v2403 = vsel %vm2371, %v2016, %v2289
        %vm2404 = vcmask 130048
        %v2406 = vsel %vm2404, %v2373, %v2340
        %v2408 = vsel %vm2404, %v2375, %v2342
        %v2410 = vsel %vm2404, %v2377, %v2344
        %v2412 = vsel %vm2404, %v2379, %v2346
        %v2414 = vsel %vm2404, %v2381, %v2348
        %v2416 = vsel %vm2404, %v2383, %v2350
        %v2418 = vsel %vm2404, %v2385, %v2352
        %v2420 = vsel %vm2404, %v2387, %v2354
        %v2422 = vsel %vm2404, %v2389, %v2356
        %v2424 = vsel %vm2404, %v2391, %v2358
        %v2426 = vsel %vm2404, %v2393, %v2360
        %v2428 = vsel %vm2404, %v2395, %v2362
        %v2430 = vsel %vm2404, %v2397, %v2364
        %v2432 = vsel %vm2404, %v2399, %v2366
        %v2434 = vsel %vm2404, %v2401, %v2368
        %v2436 = vsel %vm2404, %v2403, %v2370
        %v2437 = vld [vmem:[%s3] sm:$0xf]
        %v2438 = vld [vmem:[%s3 + $0x4] sm:$0xf]
        %v2439 = vld [vmem:[%s3 + $0x8] sm:$0xf]
        %v2442 = vunpack.c.l.b16 %v1931
        %v2443 = vunpack.c.l.b16 %v1932
        %v2444 = vpack.c.b16 %v2443, %v2442
        %v2446 = vunpack.c.l.b16 %v1933
        %v2447 = vpack.c.b16 %v2446, %v2446
        %v2449 = vshrl.u32 %v2444, 16
        %v2451 = vshll.u32 %v2444, 16
        %v2453 = vrot.slane %v2451, 1
        %v2454 = vor.u32 %v2449, %v2453
        %v2456 = vshll.u32 %v2447, 16
        %v2458 = vrot.slane %v2456, 1
        %v2459 = vsel %vm2065, %v2454, %v2458
        %2460 = vrot.lane.b32.xlu0 %v2459, 8
        %v2461 = vpop.permute.xlu0 %2460
        %v2462 = vrot.slane %v2444, 1
        %v2463 = vrot.slane %v2447, 1
        %v2464 = vsel %vm2290, %v2462, %v2463
        %2465 = vrot.lane.b32.xlu0 %v2464, 16
        %v2466 = vpop.permute.xlu0 %2465
        %v2468 = vsel %vm2371, %v2444, %v2461
        %v2470 = vsel %vm2404, %v2468, %v2466
        %s2471 = scalar_lea.vmem %s3, 12
        %v2472 = vld [vmem:[%s2471] sm:$0xf]
        %v2473 = vld [vmem:[%s2471 + $0x4] sm:$0xf]
        %v2474 = vld [vmem:[%s2471 + $0x8] sm:$0xf]
        %v2478 = vunpack.c.l.b16 %v2472
        %v2479 = vunpack.c.l.b16 %v2473
        %v2480 = vunpack.c.l.b16 %v2474
        %v2481 = vpack.c.b16 %v2479, %v2478
        %v2482 = vpack.c.b16 %v2480, %v2480
        %vm2484 = vcmask 195584
        %v2485 = vsel %vm2484, %v2408, 0
        %v2487 = vsel %vm2484, %v2410, 0
        %v2489 = vsel %vm2484, %v2412, 0
        %v2491 = vsel %vm2484, %v2414, 0
        %v2493 = vsel %vm2484, %v2416, 0
        %v2495 = vsel %vm2484, %v2418, 0
        %v2497 = vsel %vm2484, %v2420, 0
        %v2499 = vsel %vm2484, %v2422, 0
        %v2501 = vsel %vm2484, %v2424, 0
        %v2503 = vsel %vm2484, %v2426, 0
        %v2505 = vsel %vm2484, %v2428, 0
        %v2507 = vsel %vm2484, %v2430, 0
        %v2509 = vsel %vm2484, %v2432, 0
        %v2511 = vsel %vm2484, %v2434, 0
        %v2513 = vsel %vm2484, %v2436, 0
        %v2515 = vsel %vm2484, %v2470, 0
        %vm2517 = vcmask 1043456
        %v2519 = vsel %vm2517, %v2482, 0
        %2521 = vmatprep.subr.bf16.mxu0 0
        %2522 = vmatpush1.bf16.msra.mxu0 %v2481
        %2523 = vmatprep.subr.bf16.mxu0 0
        %2524 = vmatpush1.bf16.msra.mxu0 %v2519
        %2525 = vmatprep.subr.bf16.mxu0 0
        %2526 = vmatpush1.bf16.msra.mxu0 0
        %2527 = vmatprep.subr.bf16.mxu0 0
        %2528 = vmatpush1.bf16.msra.mxu0 0
        %2529 = vmatprep.subr.bf16.mxu0 0
        %2530 = vmatpush1.bf16.msra.mxu0 0
        %2531 = vmatprep.subr.bf16.mxu0 0
        %2532 = vmatpush1.bf16.msra.mxu0 0
        %2533 = vmatprep.subr.bf16.mxu0 0
        %2534 = vmatpush1.bf16.msra.mxu0 0
        %2535 = vmatprep.subr.bf16.mxu0 0
        %2536 = vmatpush1.bf16.msra.mxu0 0
        %2537 = vmatprep.subr.bf16.mxu0 0
        %2538 = vmatpush1.bf16.msra.mxu0 0
        %2539 = vmatprep.subr.bf16.mxu0 0
        %2540 = vmatpush1.bf16.msra.mxu0 0
        %2541 = vmatprep.subr.bf16.mxu0 0
        %2542 = vmatpush1.bf16.msra.mxu0 0
        %2543 = vmatprep.subr.bf16.mxu0 0
        %2544 = vmatpush1.bf16.msra.mxu0 0
        %2545 = vmatprep.subr.bf16.mxu0 0
        %2546 = vmatpush1.bf16.msra.mxu0 0
        %2547 = vmatprep.subr.bf16.mxu0 0
        %2548 = vmatpush1.bf16.msra.mxu0 0
        %2549 = vmatprep.subr.bf16.mxu0 0
        %2550 = vmatpush1.bf16.msra.mxu0 0
        %2551 = vmatprep.subr.bf16.mxu0 0
        %2552 = vmatpush1.bf16.msra.mxu0 0
        %2553 = vmatprep.mubr.bf16.mxu0 0
        %2554 = vmatmul.mubr.bf16.gmra.mrb[0].mxu0 %v2485
        %v2555 = vpop.f32.mrb[0].mxu0
        %v2556 = vadd.f32 0.0, %v2555
        %v2557 = vpop.f32.mrb[0].mxu0
        %v2558 = vpop.f32.mrb[0].mxu0
        %v2559 = vadd.f32 0.0, %v2558
        %v2560 = vpop.f32.mrb[0].mxu0
        %2561 = vmatprep.mubr.bf16.mxu0 0
        %2562 = vmatmul.mubr.bf16.gmra.mrb[0].mxu0 %v2487
        %v2563 = vpop.f32.mrb[0].mxu0
        %v2564 = vadd.f32 0.0, %v2563
        %v2565 = vpop.f32.mrb[0].mxu0
        %v2566 = vpop.f32.mrb[0].mxu0
        %v2567 = vadd.f32 0.0, %v2566
        %v2568 = vpop.f32.mrb[0].mxu0
        %2569 = vmatprep.mubr.bf16.mxu0 0
        %2570 = vmatmul.mubr.bf16.gmra.mrb[0].mxu0 %v2489
        %v2571 = vpop.f32.mrb[0].mxu0
        %v2572 = vadd.f32 0.0, %v2571
        %v2573 = vpop.f32.mrb[0].mxu0
        %v2574 = vpop.f32.mrb[0].mxu0
        %v2575 = vadd.f32 0.0, %v2574
        %v2576 = vpop.f32.mrb[0].mxu0
        %2577 = vmatprep.mubr.bf16.mxu0 0
        %2578 = vmatmul.mubr.bf16.gmra.mrb[0].mxu0 %v2491
        %v2579 = vpop.f32.mrb[0].mxu0
        %v2580 = vadd.f32 0.0, %v2579
        %v2581 = vpop.f32.mrb[0].mxu0
        %v2582 = vpop.f32.mrb[0].mxu0
        %v2583 = vadd.f32 0.0, %v2582
        %v2584 = vpop.f32.mrb[0].mxu0
        %2585 = vmatprep.mubr.bf16.mxu0 0
        %2586 = vmatmul.mubr.bf16.gmra.mrb[0].mxu0 %v2493
        %v2587 = vpop.f32.mrb[0].mxu0
        %v2588 = vadd.f32 0.0, %v2587
        %v2589 = vpop.f32.mrb[0].mxu0
        %v2590 = vpop.f32.mrb[0].mxu0
        %v2591 = vadd.f32 0.0, %v2590
        %v2592 = vpop.f32.mrb[0].mxu0
        %2593 = vmatprep.mubr.bf16.mxu0 0
        %2594 = vmatmul.mubr.bf16.gmra.mrb[0].mxu0 %v2495
        %v2595 = vpop.f32.mrb[0].mxu0
        %v2596 = vadd.f32 0.0, %v2595
        %v2597 = vpop.f32.mrb[0].mxu0
        %v2598 = vpop.f32.mrb[0].mxu0
        %v2599 = vadd.f32 0.0, %v2598
        %v2600 = vpop.f32.mrb[0].mxu0
        %2601 = vmatprep.mubr.bf16.mxu0 0
        %2602 = vmatmul.mubr.bf16.gmra.mrb[0].mxu0 %v2497
        %v2603 = vpop.f32.mrb[0].mxu0
        %v2604 = vadd.f32 0.0, %v2603
        %v2605 = vpop.f32.mrb[0].mxu0
        %v2606 = vpop.f32.mrb[0].mxu0
        %v2607 = vadd.f32 0.0, %v2606
        %v2608 = vpop.f32.mrb[0].mxu0
        %2609 = vmatprep.mubr.bf16.mxu0 0
        %2610 = vmatmul.mubr.bf16.gmra.mrb[0].mxu0 %v2499
        %v2611 = vpop.f32.mrb[0].mxu0
        %v2612 = vadd.f32 0.0, %v2611
        %v2613 = vpop.f32.mrb[0].mxu0
        %v2614 = vpop.f32.mrb[0].mxu0
        %v2615 = vadd.f32 0.0, %v2614
        %v2616 = vpop.f32.mrb[0].mxu0
        %2617 = vmatprep.mubr.bf16.mxu0 0
        %2618 = vmatmul.mubr.bf16.gmra.mrb[0].mxu0 %v2501
        %v2619 = vpop.f32.mrb[0].mxu0
        %v2620 = vadd.f32 0.0, %v2619
        %v2621 = vpop.f32.mrb[0].mxu0
        %v2622 = vpop.f32.mrb[0].mxu0
        %v2623 = vadd.f32 0.0, %v2622
        %v2624 = vpop.f32.mrb[0].mxu0
        %2625 = vmatprep.mubr.bf16.mxu0 0
        %2626 = vmatmul.mubr.bf16.gmra.mrb[0].mxu0 %v2503
        %v2627 = vpop.f32.mrb[0].mxu0
        %v2628 = vadd.f32 0.0, %v2627
        %v2629 = vpop.f32.mrb[0].mxu0
        %v2630 = vpop.f32.mrb[0].mxu0
        %v2631 = vadd.f32 0.0, %v2630
        %v2632 = vpop.f32.mrb[0].mxu0
        %2633 = vmatprep.mubr.bf16.mxu0 0
        %2634 = vmatmul.mubr.bf16.gmra.mrb[0].mxu0 %v2505
        %v2635 = vpop.f32.mrb[0].mxu0
        %v2636 = vadd.f32 0.0, %v2635
        %v2637 = vpop.f32.mrb[0].mxu0
        %v2638 = vpop.f32.mrb[0].mxu0
        %v2639 = vadd.f32 0.0, %v2638
        %v2640 = vpop.f32.mrb[0].mxu0
        %2641 = vmatprep.mubr.bf16.mxu0 0
        %2642 = vmatmul.mubr.bf16.gmra.mrb[0].mxu0 %v2507
        %v2643 = vpop.f32.mrb[0].mxu0
        %v2644 = vadd.f32 0.0, %v2643
        %v2645 = vpop.f32.mrb[0].mxu0
        %v2646 = vpop.f32.mrb[0].mxu0
        %v2647 = vadd.f32 0.0, %v2646
        %v2648 = vpop.f32.mrb[0].mxu0
        %2649 = vmatprep.mubr.bf16.mxu0 0
        %2650 = vmatmul.mubr.bf16.gmra.mrb[0].mxu0 %v2509
        %v2651 = vpop.f32.mrb[0].mxu0
        %v2652 = vadd.f32 0.0, %v2651
        %v2653 = vpop.f32.mrb[0].mxu0
        %v2654 = vpop.f32.mrb[0].mxu0
        %v2655 = vadd.f32 0.0, %v2654
        %v2656 = vpop.f32.mrb[0].mxu0
        %2657 = vmatprep.mubr.bf16.mxu0 0
        %2658 = vmatmul.mubr.bf16.gmra.mrb[0].mxu0 %v2511
        %v2659 = vpop.f32.mrb[0].mxu0
        %v2660 = vadd.f32 0.0, %v2659
        %v2661 = vpop.f32.mrb[0].mxu0
        %v2662 = vpop.f32.mrb[0].mxu0
        %v2663 = vadd.f32 0.0, %v2662
        %v2664 = vpop.f32.mrb[0].mxu0
        %2665 = vmatprep.mubr.bf16.mxu0 0
        %2666 = vmatmul.mubr.bf16.gmra.mrb[0].mxu0 %v2513
        %v2667 = vpop.f32.mrb[0].mxu0
        %v2668 = vadd.f32 0.0, %v2667
        %v2669 = vpop.f32.mrb[0].mxu0
        %v2670 = vpop.f32.mrb[0].mxu0
        %v2671 = vadd.f32 0.0, %v2670
        %v2672 = vpop.f32.mrb[0].mxu0
        %2673 = vmatprep.mubr.bf16.mxu0 0
        %2674 = vmatmul.mubr.bf16.gmra.mrb[0].mxu0 %v2515
        %v2675 = vpop.f32.mrb[0].mxu0
        %v2676 = vadd.f32 0.0, %v2675
        %v2677 = vpop.f32.mrb[0].mxu0
        %v2678 = vpop.f32.mrb[0].mxu0
        %v2679 = vadd.f32 0.0, %v2678
        %v2680 = vpop.f32.mrb[0].mxu0
        %2681 = vdwg.mxu0
        %v2685 = vunpack.c.l.b16 %v2437
        %v2686 = vunpack.c.l.b16 %v2438
        %v2687 = vunpack.c.l.b16 %v2439
        %v2688 = vpack.c.b16 %v2686, %v2685
        %v2689 = vpack.c.b16 %v2687, %v2687
        %v2691 = vsel %vm2484, %v2406, 0
        %v2694 = vsel %vm2517, %v2689, 0
        %2696 = vmatprep.subr.bf16.mxu0 0
        %2697 = vmatpush1.bf16.msra.mxu0 %v2688
        %2698 = vmatprep.subr.bf16.mxu0 0
        %2699 = vmatpush1.bf16.msra.mxu0 %v2694
        %2700 = vmatprep.subr.bf16.mxu0 0
        %2701 = vmatpush1.bf16.msra.mxu0 0
        %2702 = vmatprep.subr.bf16.mxu0 0
        %2703 = vmatpush1.bf16.msra.mxu0 0
        %2704 = vmatprep.subr.bf16.mxu0 0
        %2705 = vmatpush1.bf16.msra.mxu0 0
        %2706 = vmatprep.subr.bf16.mxu0 0
        %2707 = vmatpush1.bf16.msra.mxu0 0
        %2708 = vmatprep.subr.bf16.mxu0 0
        %2709 = vmatpush1.bf16.msra.mxu0 0
        %2710 = vmatprep.subr.bf16.mxu0 0
        %2711 = vmatpush1.bf16.msra.mxu0 0
        %2712 = vmatprep.subr.bf16.mxu0 0
        %2713 = vmatpush1.bf16.msra.mxu0 0
        %2714 = vmatprep.subr.bf16.mxu0 0
        %2715 = vmatpush1.bf16.msra.mxu0 0
        %2716 = vmatprep.subr.bf16.mxu0 0
        %2717 = vmatpush1.bf16.msra.mxu0 0
        %2718 = vmatprep.subr.bf16.mxu0 0
        %2719 = vmatpush1.bf16.msra.mxu0 0
        %2720 = vmatprep.subr.bf16.mxu0 0
        %2721 = vmatpush1.bf16.msra.mxu0 0
        %2722 = vmatprep.subr.bf16.mxu0 0
        %2723 = vmatpush1.bf16.msra.mxu0 0
        %2724 = vmatprep.subr.bf16.mxu0 0
        %2725 = vmatpush1.bf16.msra.mxu0 0
        %2726 = vmatprep.subr.bf16.mxu0 0
        %2727 = vmatpush1.bf16.msra.mxu0 0
        %2728 = vmatprep.mubr.bf16.mxu0 0
        %2729 = vmatmul.mubr.bf16.gmra.mrb[0].mxu0 %v2691
        %v2730 = vpop.f32.mrb[0].mxu0
        %v2731 = vadd.f32 %v2556, %v2730
        %v2732 = vpop.f32.mrb[0].mxu0
        %v2733 = vpop.f32.mrb[0].mxu0
        %v2734 = vadd.f32 %v2559, %v2733
        %v2735 = vpop.f32.mrb[0].mxu0
        %2736 = vmatprep.mubr.bf16.mxu0 0
        %2737 = vmatmul.mubr.bf16.gmra.mrb[0].mxu0 %v2485
        %v2738 = vpop.f32.mrb[0].mxu0
        %v2739 = vadd.f32 %v2564, %v2738
        %v2740 = vpop.f32.mrb[0].mxu0
        %v2741 = vpop.f32.mrb[0].mxu0
        %v2742 = vadd.f32 %v2567, %v2741
        %v2743 = vpop.f32.mrb[0].mxu0
        %2744 = vmatprep.mubr.bf16.mxu0 0
        %2745 = vmatmul.mubr.bf16.gmra.mrb[0].mxu0 %v2487
        %v2746 = vpop.f32.mrb[0].mxu0
        %v2747 = vadd.f32 %v2572, %v2746
        %v2748 = vpop.f32.mrb[0].mxu0
        %v2749 = vpop.f32.mrb[0].mxu0
        %v2750 = vadd.f32 %v2575, %v2749
        %v2751 = vpop.f32.mrb[0].mxu0
        %2752 = vmatprep.mubr.bf16.mxu0 0
        %2753 = vmatmul.mubr.bf16.gmra.mrb[0].mxu0 %v2489
        %v2754 = vpop.f32.mrb[0].mxu0
        %v2755 = vadd.f32 %v2580, %v2754
        %v2756 = vpop.f32.mrb[0].mxu0
        %v2757 = vpop.f32.mrb[0].mxu0
        %v2758 = vadd.f32 %v2583, %v2757
        %v2759 = vpop.f32.mrb[0].mxu0
        %2760 = vmatprep.mubr.bf16.mxu0 0
        %2761 = vmatmul.mubr.bf16.gmra.mrb[0].mxu0 %v2491
        %v2762 = vpop.f32.mrb[0].mxu0
        %v2763 = vadd.f32 %v2588, %v2762
        %v2764 = vpop.f32.mrb[0].mxu0
        %v2765 = vpop.f32.mrb[0].mxu0
        %v2766 = vadd.f32 %v2591, %v2765
        %v2767 = vpop.f32.mrb[0].mxu0
        %2768 = vmatprep.mubr.bf16.mxu0 0
        %2769 = vmatmul.mubr.bf16.gmra.mrb[0].mxu0 %v2493
        %v2770 = vpop.f32.mrb[0].mxu0
        %v2771 = vadd.f32 %v2596, %v2770
        %v2772 = vpop.f32.mrb[0].mxu0
        %v2773 = vpop.f32.mrb[0].mxu0
        %v2774 = vadd.f32 %v2599, %v2773
        %v2775 = vpop.f32.mrb[0].mxu0
        %2776 = vmatprep.mubr.bf16.mxu0 0
        %2777 = vmatmul.mubr.bf16.gmra.mrb[0].mxu0 %v2495
        %v2778 = vpop.f32.mrb[0].mxu0
        %v2779 = vadd.f32 %v2604, %v2778
        %v2780 = vpop.f32.mrb[0].mxu0
        %v2781 = vpop.f32.mrb[0].mxu0
        %v2782 = vadd.f32 %v2607, %v2781
        %v2783 = vpop.f32.mrb[0].mxu0
        %2784 = vmatprep.mubr.bf16.mxu0 0
        %2785 = vmatmul.mubr.bf16.gmra.mrb[0].mxu0 %v2497
        %v2786 = vpop.f32.mrb[0].mxu0
        %v2787 = vadd.f32 %v2612, %v2786
        %v2788 = vpop.f32.mrb[0].mxu0
        %v2789 = vpop.f32.mrb[0].mxu0
        %v2790 = vadd.f32 %v2615, %v2789
        %v2791 = vpop.f32.mrb[0].mxu0
        %2792 = vmatprep.mubr.bf16.mxu0 0
        %2793 = vmatmul.mubr.bf16.gmra.mrb[0].mxu0 %v2499
        %v2794 = vpop.f32.mrb[0].mxu0
        %v2795 = vadd.f32 %v2620, %v2794
        %v2796 = vpop.f32.mrb[0].mxu0
        %v2797 = vpop.f32.mrb[0].mxu0
        %v2798 = vadd.f32 %v2623, %v2797
        %v2799 = vpop.f32.mrb[0].mxu0
        %2800 = vmatprep.mubr.bf16.mxu0 0
        %2801 = vmatmul.mubr.bf16.gmra.mrb[0].mxu0 %v2501
        %v2802 = vpop.f32.mrb[0].mxu0
        %v2803 = vadd.f32 %v2628, %v2802
        %v2804 = vpop.f32.mrb[0].mxu0
        %v2805 = vpop.f32.mrb[0].mxu0
        %v2806 = vadd.f32 %v2631, %v2805
        %v2807 = vpop.f32.mrb[0].mxu0
        %2808 = vmatprep.mubr.bf16.mxu0 0
        %2809 = vmatmul.mubr.bf16.gmra.mrb[0].mxu0 %v2503
        %v2810 = vpop.f32.mrb[0].mxu0
        %v2811 = vadd.f32 %v2636, %v2810
        %v2812 = vpop.f32.mrb[0].mxu0
        %v2813 = vpop.f32.mrb[0].mxu0
        %v2814 = vadd.f32 %v2639, %v2813
        %v2815 = vpop.f32.mrb[0].mxu0
        %2816 = vmatprep.mubr.bf16.mxu0 0
        %2817 = vmatmul.mubr.bf16.gmra.mrb[0].mxu0 %v2505
        %v2818 = vpop.f32.mrb[0].mxu0
        %v2819 = vadd.f32 %v2644, %v2818
        %v2820 = vpop.f32.mrb[0].mxu0
        %v2821 = vpop.f32.mrb[0].mxu0
        %v2822 = vadd.f32 %v2647, %v2821
        %v2823 = vpop.f32.mrb[0].mxu0
        %2824 = vmatprep.mubr.bf16.mxu0 0
        %2825 = vmatmul.mubr.bf16.gmra.mrb[0].mxu0 %v2507
        %v2826 = vpop.f32.mrb[0].mxu0
        %v2827 = vadd.f32 %v2652, %v2826
        %v2828 = vpop.f32.mrb[0].mxu0
        %v2829 = vpop.f32.mrb[0].mxu0
        %v2830 = vadd.f32 %v2655, %v2829
        %v2831 = vpop.f32.mrb[0].mxu0
        %2832 = vmatprep.mubr.bf16.mxu0 0
        %2833 = vmatmul.mubr.bf16.gmra.mrb[0].mxu0 %v2509
        %v2834 = vpop.f32.mrb[0].mxu0
        %v2835 = vadd.f32 %v2660, %v2834
        %v2836 = vpop.f32.mrb[0].mxu0
        %v2837 = vpop.f32.mrb[0].mxu0
        %v2838 = vadd.f32 %v2663, %v2837
        %v2839 = vpop.f32.mrb[0].mxu0
        %2840 = vmatprep.mubr.bf16.mxu0 0
        %2841 = vmatmul.mubr.bf16.gmra.mrb[0].mxu0 %v2511
        %v2842 = vpop.f32.mrb[0].mxu0
        %v2843 = vadd.f32 %v2668, %v2842
        %v2844 = vpop.f32.mrb[0].mxu0
        %v2845 = vpop.f32.mrb[0].mxu0
        %v2846 = vadd.f32 %v2671, %v2845
        %v2847 = vpop.f32.mrb[0].mxu0
        %2848 = vmatprep.mubr.bf16.mxu0 0
        %2849 = vmatmul.mubr.bf16.gmra.mrb[0].mxu0 %v2513
        %v2850 = vpop.f32.mrb[0].mxu0
        %v2851 = vadd.f32 %v2676, %v2850
        %v2852 = vpop.f32.mrb[0].mxu0
        %v2853 = vpop.f32.mrb[0].mxu0
        %v2854 = vadd.f32 %v2679, %v2853
        %v2855 = vpop.f32.mrb[0].mxu0
        %2856 = vdwg.mxu0
        %v2859 = vunpack.c.l.b16 %v1934
        %v2860 = vunpack.c.l.b16 %v1935
        %v2861 = vpack.c.b16 %v2860, %v2859
        %v2863 = vunpack.c.l.b16 %v1936
        %v2864 = vpack.c.b16 %v2863, %v2863
        %v2866 = vshrl.u32 %v2861, 16
        %v2868 = vshll.u32 %v2861, 16
        %v2870 = vrot.slane %v2868, 1
        %v2871 = vor.u32 %v2866, %v2870
        %v2873 = vshll.u32 %v2864, 16
        %v2875 = vrot.slane %v2873, 1
        %v2876 = vsel %vm2065, %v2871, %v2875
        %2877 = vrot.lane.b32.xlu0 %v2876, 8
        %v2878 = vpop.permute.xlu0 %2877
        %v2879 = vrot.slane %v2861, 1
        %v2880 = vrot.slane %v2864, 1
        %v2881 = vsel %vm2290, %v2879, %v2880
        %2882 = vrot.lane.b32.xlu0 %v2881, 16
        %v2883 = vpop.permute.xlu0 %2882
        %v2885 = vsel %vm2371, %v2861, %v2878
        %v2887 = vsel %vm2404, %v2885, %v2883
        %s2888 = scalar_lea.vmem %s3, 24
        %v2889 = vld [vmem:[%s2888] sm:$0xf]
        %v2890 = vld [vmem:[%s2888 + $0x4] sm:$0xf]
        %v2891 = vld [vmem:[%s2888 + $0x8] sm:$0xf]
        %v2895 = vunpack.c.l.b16 %v2889
        %v2896 = vunpack.c.l.b16 %v2890
        %v2897 = vunpack.c.l.b16 %v2891
        %v2898 = vpack.c.b16 %v2896, %v2895
        %v2899 = vpack.c.b16 %v2897, %v2897
        %v2901 = vsel %vm2484, %v2887, 0
        %v2904 = vsel %vm2517, %v2899, 0
        %2906 = vmatprep.subr.bf16.mxu0 0
        %2907 = vmatpush1.bf16.msra.mxu0 %v2898
        %2908 = vmatprep.subr.bf16.mxu0 0
        %2909 = vmatpush1.bf16.msra.mxu0 %v2904
        %2910 = vmatprep.subr.bf16.mxu0 0
        %2911 = vmatpush1.bf16.msra.mxu0 0
        %2912 = vmatprep.subr.bf16.mxu0 0
        %2913 = vmatpush1.bf16.msra.mxu0 0
        %2914 = vmatprep.subr.bf16.mxu0 0
        %2915 = vmatpush1.bf16.msra.mxu0 0
        %2916 = vmatprep.subr.bf16.mxu0 0
        %2917 = vmatpush1.bf16.msra.mxu0 0
        %2918 = vmatprep.subr.bf16.mxu0 0
        %2919 = vmatpush1.bf16.msra.mxu0 0
        %2920 = vmatprep.subr.bf16.mxu0 0
        %2921 = vmatpush1.bf16.msra.mxu0 0
        %2922 = vmatprep.subr.bf16.mxu0 0
        %2923 = vmatpush1.bf16.msra.mxu0 0
        %2924 = vmatprep.subr.bf16.mxu0 0
        %2925 = vmatpush1.bf16.msra.mxu0 0
        %2926 = vmatprep.subr.bf16.mxu0 0
        %2927 = vmatpush1.bf16.msra.mxu0 0
        %2928 = vmatprep.subr.bf16.mxu0 0
        %2929 = vmatpush1.bf16.msra.mxu0 0
        %2930 = vmatprep.subr.bf16.mxu0 0
        %2931 = vmatpush1.bf16.msra.mxu0 0
        %2932 = vmatprep.subr.bf16.mxu0 0
        %2933 = vmatpush1.bf16.msra.mxu0 0
        %2934 = vmatprep.subr.bf16.mxu0 0
        %2935 = vmatpush1.bf16.msra.mxu0 0
        %2936 = vmatprep.subr.bf16.mxu0 0
        %2937 = vmatpush1.bf16.msra.mxu0 0
        %2938 = vmatprep.mubr.bf16.mxu0 0
        %2939 = vmatmul.mubr.bf16.gmra.mrb[0].mxu0 %v2487
        %v2940 = vpop.f32.mrb[0].mxu0
        %v2941 = vadd.f32 0.0, %v2940
        %v2942 = vpop.f32.mrb[0].mxu0
        %v2943 = vpop.f32.mrb[0].mxu0
        %v2944 = vadd.f32 0.0, %v2943
        %v2945 = vpop.f32.mrb[0].mxu0
        %2946 = vmatprep.mubr.bf16.mxu0 0
        %2947 = vmatmul.mubr.bf16.gmra.mrb[0].mxu0 %v2489
        %v2948 = vpop.f32.mrb[0].mxu0
        %v2949 = vadd.f32 0.0, %v2948
        %v2950 = vpop.f32.mrb[0].mxu0
        %v2951 = vpop.f32.mrb[0].mxu0
        %v2952 = vadd.f32 0.0, %v2951
        %v2953 = vpop.f32.mrb[0].mxu0
        %2954 = vmatprep.mubr.bf16.mxu0 0
        %2955 = vmatmul.mubr.bf16.gmra.mrb[0].mxu0 %v2491
        %v2956 = vpop.f32.mrb[0].mxu0
        %v2957 = vadd.f32 0.0, %v2956
        %v2958 = vpop.f32.mrb[0].mxu0
        %v2959 = vpop.f32.mrb[0].mxu0
        %v2960 = vadd.f32 0.0, %v2959
        %v2961 = vpop.f32.mrb[0].mxu0
        %2962 = vmatprep.mubr.bf16.mxu0 0
        %2963 = vmatmul.mubr.bf16.gmra.mrb[0].mxu0 %v2493
        %v2964 = vpop.f32.mrb[0].mxu0
        %v2965 = vadd.f32 0.0, %v2964
        %v2966 = vpop.f32.mrb[0].mxu0
        %v2967 = vpop.f32.mrb[0].mxu0
        %v2968 = vadd.f32 0.0, %v2967
        %v2969 = vpop.f32.mrb[0].mxu0
        %2970 = vmatprep.mubr.bf16.mxu0 0
        %2971 = vmatmul.mubr.bf16.gmra.mrb[0].mxu0 %v2495
        %v2972 = vpop.f32.mrb[0].mxu0
        %v2973 = vadd.f32 0.0, %v2972
        %v2974 = vpop.f32.mrb[0].mxu0
        %v2975 = vpop.f32.mrb[0].mxu0
        %v2976 = vadd.f32 0.0, %v2975
        %v2977 = vpop.f32.mrb[0].mxu0
        %2978 = vmatprep.mubr.bf16.mxu0 0
        %2979 = vmatmul.mubr.bf16.gmra.mrb[0].mxu0 %v2497
        %v2980 = vpop.f32.mrb[0].mxu0
        %v2981 = vadd.f32 0.0, %v2980
        %v2982 = vpop.f32.mrb[0].mxu0
        %v2983 = vpop.f32.mrb[0].mxu0
        %v2984 = vadd.f32 0.0, %v2983
        %v2985 = vpop.f32.mrb[0].mxu0
        %2986 = vmatprep.mubr.bf16.mxu0 0
        %2987 = vmatmul.mubr.bf16.gmra.mrb[0].mxu0 %v2499
        %v2988 = vpop.f32.mrb[0].mxu0
        %v2989 = vadd.f32 0.0, %v2988
        %v2990 = vpop.f32.mrb[0].mxu0
        %v2991 = vpop.f32.mrb[0].mxu0
        %v2992 = vadd.f32 0.0, %v2991
        %v2993 = vpop.f32.mrb[0].mxu0
        %2994 = vmatprep.mubr.bf16.mxu0 0
        %2995 = vmatmul.mubr.bf16.gmra.mrb[0].mxu0 %v2501
        %v2996 = vpop.f32.mrb[0].mxu0
        %v2997 = vadd.f32 0.0, %v2996
        %v2998 = vpop.f32.mrb[0].mxu0
        %v2999 = vpop.f32.mrb[0].mxu0
        %v3000 = vadd.f32 0.0, %v2999
        %v3001 = vpop.f32.mrb[0].mxu0
        %3002 = vmatprep.mubr.bf16.mxu0 0
        %3003 = vmatmul.mubr.bf16.gmra.mrb[0].mxu0 %v2503
        %v3004 = vpop.f32.mrb[0].mxu0
        %v3005 = vadd.f32 0.0, %v3004
        %v3006 = vpop.f32.mrb[0].mxu0
        %v3007 = vpop.f32.mrb[0].mxu0
        %v3008 = vadd.f32 0.0, %v3007
        %v3009 = vpop.f32.mrb[0].mxu0
        %3010 = vmatprep.mubr.bf16.mxu0 0
        %3011 = vmatmul.mubr.bf16.gmra.mrb[0].mxu0 %v2505
        %v3012 = vpop.f32.mrb[0].mxu0
        %v3013 = vadd.f32 0.0, %v3012
        %v3014 = vpop.f32.mrb[0].mxu0
        %v3015 = vpop.f32.mrb[0].mxu0
        %v3016 = vadd.f32 0.0, %v3015
        %v3017 = vpop.f32.mrb[0].mxu0
        %3018 = vmatprep.mubr.bf16.mxu0 0
        %3019 = vmatmul.mubr.bf16.gmra.mrb[0].mxu0 %v2507
        %v3020 = vpop.f32.mrb[0].mxu0
        %v3021 = vadd.f32 0.0, %v3020
        %v3022 = vpop.f32.mrb[0].mxu0
        %v3023 = vpop.f32.mrb[0].mxu0
        %v3024 = vadd.f32 0.0, %v3023
        %v3025 = vpop.f32.mrb[0].mxu0
        %3026 = vmatprep.mubr.bf16.mxu0 0
        %3027 = vmatmul.mubr.bf16.gmra.mrb[0].mxu0 %v2509
        %v3028 = vpop.f32.mrb[0].mxu0
        %v3029 = vadd.f32 0.0, %v3028
        %v3030 = vpop.f32.mrb[0].mxu0
        %v3031 = vpop.f32.mrb[0].mxu0
        %v3032 = vadd.f32 0.0, %v3031
        %v3033 = vpop.f32.mrb[0].mxu0
        %3034 = vmatprep.mubr.bf16.mxu0 0
        %3035 = vmatmul.mubr.bf16.gmra.mrb[0].mxu0 %v2511
        %v3036 = vpop.f32.mrb[0].mxu0
        %v3037 = vadd.f32 0.0, %v3036
        %v3038 = vpop.f32.mrb[0].mxu0
        %v3039 = vpop.f32.mrb[0].mxu0
        %v3040 = vadd.f32 0.0, %v3039
        %v3041 = vpop.f32.mrb[0].mxu0
        %3042 = vmatprep.mubr.bf16.mxu0 0
        %3043 = vmatmul.mubr.bf16.gmra.mrb[0].mxu0 %v2513
        %v3044 = vpop.f32.mrb[0].mxu0
        %v3045 = vadd.f32 0.0, %v3044
        %v3046 = vpop.f32.mrb[0].mxu0
        %v3047 = vpop.f32.mrb[0].mxu0
        %v3048 = vadd.f32 0.0, %v3047
        %v3049 = vpop.f32.mrb[0].mxu0
        %3050 = vmatprep.mubr.bf16.mxu0 0
        %3051 = vmatmul.mubr.bf16.gmra.mrb[0].mxu0 %v2515
        %v3052 = vpop.f32.mrb[0].mxu0
        %v3053 = vadd.f32 0.0, %v3052
        %v3054 = vpop.f32.mrb[0].mxu0
        %v3055 = vpop.f32.mrb[0].mxu0
        %v3056 = vadd.f32 0.0, %v3055
        %v3057 = vpop.f32.mrb[0].mxu0
        %3058 = vmatprep.mubr.bf16.mxu0 0
        %3059 = vmatmul.mubr.bf16.gmra.mrb[0].mxu0 %v2901
        %v3060 = vpop.f32.mrb[0].mxu0
        %v3061 = vadd.f32 0.0, %v3060
        %v3062 = vpop.f32.mrb[0].mxu0
        %v3063 = vpop.f32.mrb[0].mxu0
        %v3064 = vadd.f32 0.0, %v3063
        %v3065 = vpop.f32.mrb[0].mxu0
        %3066 = vdwg.mxu0
        %v3067 = vadd.f32 %v2731, %v2941
        %v3068 = vadd.f32 %v2734, %v2944
        %v3069 = vadd.f32 %v2739, %v2949
        %v3070 = vadd.f32 %v2742, %v2952
        %v3071 = vadd.f32 %v2747, %v2957
        %v3072 = vadd.f32 %v2750, %v2960
        %v3073 = vadd.f32 %v2755, %v2965
        %v3074 = vadd.f32 %v2758, %v2968
        %v3075 = vadd.f32 %v2763, %v2973
        %v3076 = vadd.f32 %v2766, %v2976
        %v3077 = vadd.f32 %v2771, %v2981
        %v3078 = vadd.f32 %v2774, %v2984
        %v3079 = vadd.f32 %v2779, %v2989
        %v3080 = vadd.f32 %v2782, %v2992
        %v3081 = vadd.f32 %v2787, %v2997
        %v3082 = vadd.f32 %v2790, %v3000
        %v3083 = vadd.f32 %v2795, %v3005
        %v3084 = vadd.f32 %v2798, %v3008
        %v3085 = vadd.f32 %v2803, %v3013
        %v3086 = vadd.f32 %v2806, %v3016
        %v3087 = vadd.f32 %v2811, %v3021
        %v3088 = vadd.f32 %v2814, %v3024
        %v3089 = vadd.f32 %v2819, %v3029
        %v3090 = vadd.f32 %v2822, %v3032
        %v3091 = vadd.f32 %v2827, %v3037
        %v3092 = vadd.f32 %v2830, %v3040
        %v3093 = vadd.f32 %v2835, %v3045
        %v3094 = vadd.f32 %v2838, %v3048
        %v3095 = vadd.f32 %v2843, %v3053
        %v3096 = vadd.f32 %v2846, %v3056
        %v3097 = vadd.f32 %v2851, %v3061
        %v3098 = vadd.f32 %v2854, %v3064
        %v3099 = vld [vmem:[%s4] sm:$0x1]
        %v3101 = vlaneseq
        %v3102 = vshrl.u32 %v3101, 7
        %v3103 = vsub.s32 0, %v3102
        %v3104 = vrot.slane %v3099, %v3103
        %v3106 = vadd.f32 %v3067, %v3104
        %v3107 = vadd.f32 %v3068, %v3104
        %v3108 = vadd.f32 %v3069, %v3104
        %v3109 = vadd.f32 %v3070, %v3104
        %v3110 = vadd.f32 %v3071, %v3104
        %v3111 = vadd.f32 %v3072, %v3104
        %v3112 = vadd.f32 %v3073, %v3104
        %v3113 = vadd.f32 %v3074, %v3104
        %v3114 = vadd.f32 %v3075, %v3104
        %v3115 = vadd.f32 %v3076, %v3104
        %v3116 = vadd.f32 %v3077, %v3104
        %v3117 = vadd.f32 %v3078, %v3104
        %v3118 = vadd.f32 %v3079, %v3104
        %v3119 = vadd.f32 %v3080, %v3104
        %v3120 = vadd.f32 %v3081, %v3104
        %v3121 = vadd.f32 %v3082, %v3104
        %v3122 = vadd.f32 %v3083, %v3104
        %v3123 = vadd.f32 %v3084, %v3104
        %v3124 = vadd.f32 %v3085, %v3104
        %v3125 = vadd.f32 %v3086, %v3104
        %v3126 = vadd.f32 %v3087, %v3104
        %v3127 = vadd.f32 %v3088, %v3104
        %v3128 = vadd.f32 %v3089, %v3104
        %v3129 = vadd.f32 %v3090, %v3104
        %v3130 = vadd.f32 %v3091, %v3104
        %v3131 = vadd.f32 %v3092, %v3104
        %v3132 = vadd.f32 %v3093, %v3104
        %v3133 = vadd.f32 %v3094, %v3104
        %v3134 = vadd.f32 %v3095, %v3104
        %v3135 = vadd.f32 %v3096, %v3104
        %v3136 = vadd.f32 %v3097, %v3104
        %v3137 = vadd.f32 %v3098, %v3104
        %v3138 = vmax.f32 %v3106, 0.0
        %v3139 = vmax.f32 %v3107, 0.0
        %v3140 = vmax.f32 %v3108, 0.0
        %v3141 = vmax.f32 %v3109, 0.0
        %v3142 = vmax.f32 %v3110, 0.0
        %v3143 = vmax.f32 %v3111, 0.0
        %v3144 = vmax.f32 %v3112, 0.0
        %v3145 = vmax.f32 %v3113, 0.0
        %v3146 = vmax.f32 %v3114, 0.0
        %v3147 = vmax.f32 %v3115, 0.0
        %v3148 = vmax.f32 %v3116, 0.0
        %v3149 = vmax.f32 %v3117, 0.0
        %v3150 = vmax.f32 %v3118, 0.0
        %v3151 = vmax.f32 %v3119, 0.0
        %v3152 = vmax.f32 %v3120, 0.0
        %v3153 = vmax.f32 %v3121, 0.0
        %v3154 = vmax.f32 %v3122, 0.0
        %v3155 = vmax.f32 %v3123, 0.0
        %v3156 = vmax.f32 %v3124, 0.0
        %v3157 = vmax.f32 %v3125, 0.0
        %v3158 = vmax.f32 %v3126, 0.0
        %v3159 = vmax.f32 %v3127, 0.0
        %v3160 = vmax.f32 %v3128, 0.0
        %v3161 = vmax.f32 %v3129, 0.0
        %v3162 = vmax.f32 %v3130, 0.0
        %v3163 = vmax.f32 %v3131, 0.0
        %v3164 = vmax.f32 %v3132, 0.0
        %v3165 = vmax.f32 %v3133, 0.0
        %v3166 = vmax.f32 %v3134, 0.0
        %v3167 = vmax.f32 %v3135, 0.0
        %v3168 = vmax.f32 %v3136, 0.0
        %v3169 = vmax.f32 %v3137, 0.0
        %vm3170 = vcmask 1040384
        %vm3171 = vcmask 1044484
        %vm3172 = vmor %vm3170, %vm3171
        %v3173 = vrot.slane %v1318, 7
        %v3174 = vrot.slane %v3173, 4
        %v3175 = vrot.slane %v1319, 7
        %v3176 = vsel %vm3172, %v3174, %v3175
        %v3177 = vrot.slane %v3175, 4
        %v3178 = vrot.slane %v1320, 7
        %v3179 = vrot.slane %v3178, 4
        %v3180 = vrot.slane %v1321, 7
        %v3181 = vsel %vm3172, %v3179, %v3180
        %v3182 = vrot.slane %v3180, 4
        %v3183 = vrot.slane %v1322, 7
        %v3184 = vrot.slane %v3183, 4
        %v3185 = vrot.slane %v1323, 7
        %v3186 = vsel %vm3172, %v3184, %v3185
        %v3187 = vrot.slane %v3185, 4
        %v3188 = vrot.slane %v1324, 7
        %v3189 = vrot.slane %v3188, 4
        %v3190 = vrot.slane %v1325, 7
        %v3191 = vsel %vm3172, %v3189, %v3190
        %v3192 = vrot.slane %v3190, 4
        %v3193 = vrot.slane %v1326, 7
        %v3194 = vrot.slane %v3193, 4
        %v3195 = vrot.slane %v1327, 7
        %v3196 = vsel %vm3172, %v3194, %v3195
        %v3197 = vrot.slane %v3195, 4
        %v3198 = vrot.slane %v1328, 7
        %v3199 = vrot.slane %v3198, 4
        %v3200 = vrot.slane %v1329, 7
        %v3201 = vsel %vm3172, %v3199, %v3200
        %v3202 = vrot.slane %v3200, 4
        %v3203 = vrot.slane %v1330, 7
        %v3204 = vrot.slane %v3203, 4
        %v3205 = vrot.slane %v1331, 7
        %v3206 = vsel %vm3172, %v3204, %v3205
        %v3207 = vrot.slane %v3205, 4
        %v3208 = vrot.slane %v1332, 7
        %v3209 = vrot.slane %v3208, 4
        %v3210 = vrot.slane %v1333, 7
        %v3211 = vsel %vm3172, %v3209, %v3210
        %v3212 = vrot.slane %v3210, 4
        %v3213 = vrot.slane %v1334, 7
        %v3214 = vrot.slane %v3213, 4
        %v3215 = vrot.slane %v1335, 7
        %v3216 = vsel %vm3172, %v3214, %v3215
        %v3217 = vrot.slane %v3215, 4
        %v3218 = vrot.slane %v1336, 7
        %v3219 = vrot.slane %v3218, 4
        %v3220 = vrot.slane %v1337, 7
        %v3221 = vsel %vm3172, %v3219, %v3220
        %v3222 = vrot.slane %v3220, 4
        %v3223 = vrot.slane %v1338, 7
        %v3224 = vrot.slane %v3223, 4
        %v3225 = vrot.slane %v1339, 7
        %v3226 = vsel %vm3172, %v3224, %v3225
        %v3227 = vrot.slane %v3225, 4
        %v3228 = vrot.slane %v1340, 7
        %v3229 = vrot.slane %v3228, 4
        %v3230 = vrot.slane %v1341, 7
        %v3231 = vsel %vm3172, %v3229, %v3230
        %v3232 = vrot.slane %v3230, 4
        %v3233 = vrot.slane %v1342, 7
        %v3234 = vrot.slane %v3233, 4
        %v3235 = vrot.slane %v1343, 7
        %v3236 = vsel %vm3172, %v3234, %v3235
        %v3237 = vrot.slane %v3235, 4
        %v3238 = vrot.slane %v1344, 7
        %v3239 = vrot.slane %v3238, 4
        %v3240 = vrot.slane %v1345, 7
        %v3241 = vsel %vm3172, %v3239, %v3240
        %v3242 = vrot.slane %v3240, 4
        %v3243 = vrot.slane %v1346, 7
        %v3244 = vrot.slane %v3243, 4
        %v3245 = vrot.slane %v1347, 7
        %v3246 = vsel %vm3172, %v3244, %v3245
        %v3247 = vrot.slane %v3245, 4
        %v3248 = vrot.slane %v1348, 7
        %v3249 = vrot.slane %v3248, 4
        %v3250 = vrot.slane %v1349, 7
        %v3251 = vsel %vm3172, %v3249, %v3250
        %v3252 = vrot.slane %v3250, 4
        %3253 = vrot.lane.b32.xlu0 %v3173, 112
        %v3254 = vpop.permute.xlu0 %3253
        %3255 = vrot.lane.b32.xlu0 %v3176, 112
        %v3256 = vpop.permute.xlu0 %3255
        %3257 = vrot.lane.b32.xlu0 %v3177, 112
        %v3258 = vpop.permute.xlu0 %3257
        %3259 = vrot.lane.b32.xlu0 %v3178, 112
        %v3260 = vpop.permute.xlu0 %3259
        %3261 = vrot.lane.b32.xlu0 %v3181, 112
        %v3262 = vpop.permute.xlu0 %3261
        %3263 = vrot.lane.b32.xlu0 %v3182, 112
        %v3264 = vpop.permute.xlu0 %3263
        %3265 = vrot.lane.b32.xlu0 %v3183, 112
        %v3266 = vpop.permute.xlu0 %3265
        %3267 = vrot.lane.b32.xlu0 %v3186, 112
        %v3268 = vpop.permute.xlu0 %3267
        %3269 = vrot.lane.b32.xlu0 %v3187, 112
        %v3270 = vpop.permute.xlu0 %3269
        %3271 = vrot.lane.b32.xlu0 %v3188, 112
        %v3272 = vpop.permute.xlu0 %3271
        %3273 = vrot.lane.b32.xlu0 %v3191, 112
        %v3274 = vpop.permute.xlu0 %3273
        %3275 = vrot.lane.b32.xlu0 %v3192, 112
        %v3276 = vpop.permute.xlu0 %3275
        %3277 = vrot.lane.b32.xlu0 %v3193, 112
        %v3278 = vpop.permute.xlu0 %3277
        %3279 = vrot.lane.b32.xlu0 %v3196, 112
        %v3280 = vpop.permute.xlu0 %3279
        %3281 = vrot.lane.b32.xlu0 %v3197, 112
        %v3282 = vpop.permute.xlu0 %3281
        %3283 = vrot.lane.b32.xlu0 %v3198, 112
        %v3284 = vpop.permute.xlu0 %3283
        %3285 = vrot.lane.b32.xlu0 %v3201, 112
        %v3286 = vpop.permute.xlu0 %3285
        %3287 = vrot.lane.b32.xlu0 %v3202, 112
        %v3288 = vpop.permute.xlu0 %3287
        %3289 = vrot.lane.b32.xlu0 %v3203, 112
        %v3290 = vpop.permute.xlu0 %3289
        %3291 = vrot.lane.b32.xlu0 %v3206, 112
        %v3292 = vpop.permute.xlu0 %3291
        %3293 = vrot.lane.b32.xlu0 %v3207, 112
        %v3294 = vpop.permute.xlu0 %3293
        %3295 = vrot.lane.b32.xlu0 %v3208, 112
        %v3296 = vpop.permute.xlu0 %3295
        %3297 = vrot.lane.b32.xlu0 %v3211, 112
        %v3298 = vpop.permute.xlu0 %3297
        %3299 = vrot.lane.b32.xlu0 %v3212, 112
        %v3300 = vpop.permute.xlu0 %3299
        %3301 = vrot.lane.b32.xlu0 %v3213, 112
        %v3302 = vpop.permute.xlu0 %3301
        %3303 = vrot.lane.b32.xlu0 %v3216, 112
        %v3304 = vpop.permute.xlu0 %3303
        %3305 = vrot.lane.b32.xlu0 %v3217, 112
        %v3306 = vpop.permute.xlu0 %3305
        %3307 = vrot.lane.b32.xlu0 %v3218, 112
        %v3308 = vpop.permute.xlu0 %3307
        %3309 = vrot.lane.b32.xlu0 %v3221, 112
        %v3310 = vpop.permute.xlu0 %3309
        %3311 = vrot.lane.b32.xlu0 %v3222, 112
        %v3312 = vpop.permute.xlu0 %3311
        %3313 = vrot.lane.b32.xlu0 %v3223, 112
        %v3314 = vpop.permute.xlu0 %3313
        %3315 = vrot.lane.b32.xlu0 %v3226, 112
        %v3316 = vpop.permute.xlu0 %3315
        %3317 = vrot.lane.b32.xlu0 %v3227, 112
        %v3318 = vpop.permute.xlu0 %3317
        %3319 = vrot.lane.b32.xlu0 %v3228, 112
        %v3320 = vpop.permute.xlu0 %3319
        %3321 = vrot.lane.b32.xlu0 %v3231, 112
        %v3322 = vpop.permute.xlu0 %3321
        %3323 = vrot.lane.b32.xlu0 %v3232, 112
        %v3324 = vpop.permute.xlu0 %3323
        %3325 = vrot.lane.b32.xlu0 %v3233, 112
        %v3326 = vpop.permute.xlu0 %3325
        %3327 = vrot.lane.b32.xlu0 %v3236, 112
        %v3328 = vpop.permute.xlu0 %3327
        %3329 = vrot.lane.b32.xlu0 %v3237, 112
        %v3330 = vpop.permute.xlu0 %3329
        %3331 = vrot.lane.b32.xlu0 %v3238, 112
        %v3332 = vpop.permute.xlu0 %3331
        %3333 = vrot.lane.b32.xlu0 %v3241, 112
        %v3334 = vpop.permute.xlu0 %3333
        %3335 = vrot.lane.b32.xlu0 %v3242, 112
        %v3336 = vpop.permute.xlu0 %3335
        %3337 = vrot.lane.b32.xlu0 %v3243, 112
        %v3338 = vpop.permute.xlu0 %3337
        %3339 = vrot.lane.b32.xlu0 %v3246, 112
        %v3340 = vpop.permute.xlu0 %3339
        %3341 = vrot.lane.b32.xlu0 %v3247, 112
        %v3342 = vpop.permute.xlu0 %3341
        %3343 = vrot.lane.b32.xlu0 %v3248, 112
        %v3344 = vpop.permute.xlu0 %3343
        %3345 = vrot.lane.b32.xlu0 %v3251, 112
        %v3346 = vpop.permute.xlu0 %3345
        %3347 = vrot.lane.b32.xlu0 %v3252, 112
        %v3348 = vpop.permute.xlu0 %3347
        %s3397 = scalar_lea.vmem [#allocation3], 24
        %vm3398 = vcmask 27649
        %3399 = vst.msk [vmem:[%s3397] sm:$0xe] %vm3398, %v3254
        %3400 = vst.msk [vmem:[%s3397 + $0x4] sm:$0xf] %vm1197, %v3256
        %3401 = vst.msk [vmem:[%s3397 + $0x8] sm:$0x1] %vm1212, %v3258
        %3402 = vst.msk [vmem:[%s3397 + $0xc] sm:$0xe] %vm3398, %v3260
        %3403 = vst.msk [vmem:[%s3397 + $0x10] sm:$0xf] %vm1197, %v3262
        %3404 = vst.msk [vmem:[%s3397 + $0x14] sm:$0x1] %vm1212, %v3264
        %3405 = vst.msk [vmem:[%s3397 + $0x18] sm:$0xe] %vm3398, %v3266
        %3406 = vst.msk [vmem:[%s3397 + $0x1c] sm:$0xf] %vm1197, %v3268
        %3407 = vst.msk [vmem:[%s3397 + $0x20] sm:$0x1] %vm1212, %v3270
        %3408 = vst.msk [vmem:[%s3397 + $0x24] sm:$0xe] %vm3398, %v3272
        %3409 = vst.msk [vmem:[%s3397 + $0x28] sm:$0xf] %vm1197, %v3274
        %3410 = vst.msk [vmem:[%s3397 + $0x2c] sm:$0x1] %vm1212, %v3276
        %3411 = vst.msk [vmem:[%s3397 + $0x30] sm:$0xe] %vm3398, %v3278
        %3412 = vst.msk [vmem:[%s3397 + $0x34] sm:$0xf] %vm1197, %v3280
        %3413 = vst.msk [vmem:[%s3397 + $0x38] sm:$0x1] %vm1212, %v3282
        %3414 = vst.msk [vmem:[%s3397 + $0x3c] sm:$0xe] %vm3398, %v3284
        %3415 = vst.msk [vmem:[%s3397 + $0x40] sm:$0xf] %vm1197, %v3286
        %3416 = vst.msk [vmem:[%s3397 + $0x44] sm:$0x1] %vm1212, %v3288
        %3417 = vst.msk [vmem:[%s3397 + $0x48] sm:$0xe] %vm3398, %v3290
        %3418 = vst.msk [vmem:[%s3397 + $0x4c] sm:$0xf] %vm1197, %v3292
        %3419 = vst.msk [vmem:[%s3397 + $0x50] sm:$0x1] %vm1212, %v3294
        %3420 = vst.msk [vmem:[%s3397 + $0x54] sm:$0xe] %vm3398, %v3296
        %3421 = vst.msk [vmem:[%s3397 + $0x58] sm:$0xf] %vm1197, %v3298
        %3422 = vst.msk [vmem:[%s3397 + $0x5c] sm:$0x1] %vm1212, %v3300
        %3423 = vst.msk [vmem:[%s3397 + $0x60] sm:$0xe] %vm3398, %v3302
        %3424 = vst.msk [vmem:[%s3397 + $0x64] sm:$0xf] %vm1197, %v3304
        %3425 = vst.msk [vmem:[%s3397 + $0x68] sm:$0x1] %vm1212, %v3306
        %3426 = vst.msk [vmem:[%s3397 + $0x6c] sm:$0xe] %vm3398, %v3308
        %3427 = vst.msk [vmem:[%s3397 + $0x70] sm:$0xf] %vm1197, %v3310
        %3428 = vst.msk [vmem:[%s3397 + $0x74] sm:$0x1] %vm1212, %v3312
        %3429 = vst.msk [vmem:[%s3397 + $0x78] sm:$0xe] %vm3398, %v3314
        %3430 = vst.msk [vmem:[%s3397 + $0x7c] sm:$0xf] %vm1197, %v3316
        %3431 = vst.msk [vmem:[%s3397 + $0x80] sm:$0x1] %vm1212, %v3318
        %3432 = vst.msk [vmem:[%s3397 + $0x84] sm:$0xe] %vm3398, %v3320
        %3433 = vst.msk [vmem:[%s3397 + $0x88] sm:$0xf] %vm1197, %v3322
        %3434 = vst.msk [vmem:[%s3397 + $0x8c] sm:$0x1] %vm1212, %v3324
        %3435 = vst.msk [vmem:[%s3397 + $0x90] sm:$0xe] %vm3398, %v3326
        %3436 = vst.msk [vmem:[%s3397 + $0x94] sm:$0xf] %vm1197, %v3328
        %3437 = vst.msk [vmem:[%s3397 + $0x98] sm:$0x1] %vm1212, %v3330
        %3438 = vst.msk [vmem:[%s3397 + $0x9c] sm:$0xe] %vm3398, %v3332
        %3439 = vst.msk [vmem:[%s3397 + $0xa0] sm:$0xf] %vm1197, %v3334
        %3440 = vst.msk [vmem:[%s3397 + $0xa4] sm:$0x1] %vm1212, %v3336
        %3441 = vst.msk [vmem:[%s3397 + $0xa8] sm:$0xe] %vm3398, %v3338
        %3442 = vst.msk [vmem:[%s3397 + $0xac] sm:$0xf] %vm1197, %v3340
        %3443 = vst.msk [vmem:[%s3397 + $0xb0] sm:$0x1] %vm1212, %v3342
        %3444 = vst.msk [vmem:[%s3397 + $0xb4] sm:$0xe] %vm3398, %v3344
        %3445 = vst.msk [vmem:[%s3397 + $0xb8] sm:$0xf] %vm1197, %v3346
        %3446 = vst.msk [vmem:[%s3397 + $0xbc] sm:$0x1] %vm1212, %v3348
        %v3447 = vld [vmem:[#allocation3] sm:$0xf]
        %v3448 = vld [vmem:[#allocation3 + $0x4] sm:$0xf]
        %v3449 = vld [vmem:[#allocation3 + $0x8] sm:$0x3]
        %v3450 = vld [vmem:[#allocation3 + $0xc] sm:$0xf]
        %v3451 = vld [vmem:[#allocation3 + $0x10] sm:$0xf]
        %v3452 = vld [vmem:[#allocation3 + $0x14] sm:$0x3]
        %v3453 = vld [vmem:[#allocation3 + $0x18] sm:$0xf]
        %v3454 = vld [vmem:[#allocation3 + $0x1c] sm:$0xf]
        %v3455 = vld [vmem:[#allocation3 + $0x20] sm:$0x3]
        %v3456 = vld [vmem:[#allocation3 + $0x24] sm:$0xf]
        %v3457 = vld [vmem:[#allocation3 + $0x28] sm:$0xf]
        %v3458 = vld [vmem:[#allocation3 + $0x2c] sm:$0x3]
        %v3459 = vld [vmem:[#allocation3 + $0x30] sm:$0xf]
        %v3460 = vld [vmem:[#allocation3 + $0x34] sm:$0xf]
        %v3461 = vld [vmem:[#allocation3 + $0x38] sm:$0x3]
        %v3462 = vld [vmem:[#allocation3 + $0x3c] sm:$0xf]
        %v3463 = vld [vmem:[#allocation3 + $0x40] sm:$0xf]
        %v3464 = vld [vmem:[#allocation3 + $0x44] sm:$0x3]
        %v3465 = vld [vmem:[#allocation3 + $0x48] sm:$0xf]
        %v3466 = vld [vmem:[#allocation3 + $0x4c] sm:$0xf]
        %v3467 = vld [vmem:[#allocation3 + $0x50] sm:$0x3]
        %v3468 = vld [vmem:[#allocation3 + $0x54] sm:$0xf]
        %v3469 = vld [vmem:[#allocation3 + $0x58] sm:$0xf]
        %v3470 = vld [vmem:[#allocation3 + $0x5c] sm:$0x3]
        %v3471 = vld [vmem:[#allocation3 + $0x60] sm:$0xf]
        %v3472 = vld [vmem:[#allocation3 + $0x64] sm:$0xf]
        %v3473 = vld [vmem:[#allocation3 + $0x68] sm:$0x3]
        %v3474 = vld [vmem:[#allocation3 + $0x6c] sm:$0xf]
        %v3475 = vld [vmem:[#allocation3 + $0x70] sm:$0xf]
        %v3476 = vld [vmem:[#allocation3 + $0x74] sm:$0x3]
        %v3477 = vld [vmem:[#allocation3 + $0x78] sm:$0xf]
        %v3478 = vld [vmem:[#allocation3 + $0x7c] sm:$0xf]
        %v3479 = vld [vmem:[#allocation3 + $0x80] sm:$0x3]
        %v3480 = vld [vmem:[#allocation3 + $0x84] sm:$0xf]
        %v3481 = vld [vmem:[#allocation3 + $0x88] sm:$0xf]
        %v3482 = vld [vmem:[#allocation3 + $0x8c] sm:$0x3]
        %v3483 = vld [vmem:[#allocation3 + $0x90] sm:$0xf]
        %v3484 = vld [vmem:[#allocation3 + $0x94] sm:$0xf]
        %v3485 = vld [vmem:[#allocation3 + $0x98] sm:$0x3]
        %v3486 = vld [vmem:[#allocation3 + $0x9c] sm:$0xf]
        %v3487 = vld [vmem:[#allocation3 + $0xa0] sm:$0xf]
        %v3488 = vld [vmem:[#allocation3 + $0xa4] sm:$0x3]
        %v3489 = vld [vmem:[#allocation3 + $0xa8] sm:$0xf]
        %v3490 = vld [vmem:[#allocation3 + $0xac] sm:$0xf]
        %v3491 = vld [vmem:[#allocation3 + $0xb0] sm:$0x3]
        %v3492 = vld [vmem:[#allocation3 + $0xb4] sm:$0xf]
        %v3493 = vld [vmem:[#allocation3 + $0xb8] sm:$0xf]
        %v3494 = vld [vmem:[#allocation3 + $0xbc] sm:$0x3]
        %v3495 = vld [vmem:[#allocation3 + $0xc0] sm:$0xf]
        %v3496 = vld [vmem:[#allocation3 + $0xc4] sm:$0xf]
        %v3497 = vld [vmem:[#allocation3 + $0xc8] sm:$0x3]
        %v3498 = vld [vmem:[#allocation3 + $0xcc] sm:$0xf]
        %v3499 = vld [vmem:[#allocation3 + $0xd0] sm:$0xf]
        %v3500 = vld [vmem:[#allocation3 + $0xd4] sm:$0x3]
        %v3501 = vld [vmem:[#allocation3 + $0xd8] sm:$0xf]
        %v3502 = vld [vmem:[#allocation3 + $0xdc] sm:$0xf]
        %v3503 = vld [vmem:[#allocation3 + $0xe0] sm:$0x3]
        %v3504 = vld [vmem:[#allocation3 + $0xe4] sm:$0xf]
        %v3505 = vld [vmem:[#allocation3 + $0xe8] sm:$0xf]
        %v3506 = vld [vmem:[#allocation3 + $0xec] sm:$0x3]
        %v3539 = vunpack.c.l.b16 %v3447
        %v3540 = vunpack.c.l.b16 %v3448
        %v3541 = vunpack.c.l.b16 %v3450
        %v3542 = vunpack.c.l.b16 %v3451
        %v3543 = vunpack.c.l.b16 %v3453
        %v3544 = vunpack.c.l.b16 %v3454
        %v3545 = vunpack.c.l.b16 %v3456
        %v3546 = vunpack.c.l.b16 %v3457
        %v3547 = vunpack.c.l.b16 %v3459
        %v3548 = vunpack.c.l.b16 %v3460
        %v3549 = vunpack.c.l.b16 %v3462
        %v3550 = vunpack.c.l.b16 %v3463
        %v3551 = vunpack.c.l.b16 %v3465
        %v3552 = vunpack.c.l.b16 %v3466
        %v3553 = vunpack.c.l.b16 %v3468
        %v3554 = vunpack.c.l.b16 %v3469
        %v3555 = vunpack.c.l.b16 %v3471
        %v3556 = vunpack.c.l.b16 %v3472
        %v3557 = vunpack.c.l.b16 %v3474
        %v3558 = vunpack.c.l.b16 %v3475
        %v3559 = vunpack.c.l.b16 %v3477
        %v3560 = vunpack.c.l.b16 %v3478
        %v3561 = vunpack.c.l.b16 %v3480
        %v3562 = vunpack.c.l.b16 %v3481
        %v3563 = vunpack.c.l.b16 %v3483
        %v3564 = vunpack.c.l.b16 %v3484
        %v3565 = vunpack.c.l.b16 %v3486
        %v3566 = vunpack.c.l.b16 %v3487
        %v3567 = vunpack.c.l.b16 %v3489
        %v3568 = vunpack.c.l.b16 %v3490
        %v3569 = vunpack.c.l.b16 %v3492
        %v3570 = vunpack.c.l.b16 %v3493
        %v3571 = vpack.c.b16 %v3540, %v3539
        %v3572 = vpack.c.b16 %v3542, %v3541
        %v3573 = vpack.c.b16 %v3544, %v3543
        %v3574 = vpack.c.b16 %v3546, %v3545
        %v3575 = vpack.c.b16 %v3548, %v3547
        %v3576 = vpack.c.b16 %v3550, %v3549
        %v3577 = vpack.c.b16 %v3552, %v3551
        %v3578 = vpack.c.b16 %v3554, %v3553
        %v3579 = vpack.c.b16 %v3556, %v3555
        %v3580 = vpack.c.b16 %v3558, %v3557
        %v3581 = vpack.c.b16 %v3560, %v3559
        %v3582 = vpack.c.b16 %v3562, %v3561
        %v3583 = vpack.c.b16 %v3564, %v3563
        %v3584 = vpack.c.b16 %v3566, %v3565
        %v3585 = vpack.c.b16 %v3568, %v3567
        %v3586 = vpack.c.b16 %v3570, %v3569
        %v3603 = vunpack.c.l.b16 %v3449
        %v3604 = vunpack.c.l.b16 %v3452
        %v3605 = vunpack.c.l.b16 %v3455
        %v3606 = vunpack.c.l.b16 %v3458
        %v3607 = vunpack.c.l.b16 %v3461
        %v3608 = vunpack.c.l.b16 %v3464
        %v3609 = vunpack.c.l.b16 %v3467
        %v3610 = vunpack.c.l.b16 %v3470
        %v3611 = vunpack.c.l.b16 %v3473
        %v3612 = vunpack.c.l.b16 %v3476
        %v3613 = vunpack.c.l.b16 %v3479
        %v3614 = vunpack.c.l.b16 %v3482
        %v3615 = vunpack.c.l.b16 %v3485
        %v3616 = vunpack.c.l.b16 %v3488
        %v3617 = vunpack.c.l.b16 %v3491
        %v3618 = vunpack.c.l.b16 %v3494
        %v3619 = vpack.c.b16 %v3603, %v3603
        %v3620 = vpack.c.b16 %v3604, %v3604
        %v3621 = vpack.c.b16 %v3605, %v3605
        %v3622 = vpack.c.b16 %v3606, %v3606
        %v3623 = vpack.c.b16 %v3607, %v3607
        %v3624 = vpack.c.b16 %v3608, %v3608
        %v3625 = vpack.c.b16 %v3609, %v3609
        %v3626 = vpack.c.b16 %v3610, %v3610
        %v3627 = vpack.c.b16 %v3611, %v3611
        %v3628 = vpack.c.b16 %v3612, %v3612
        %v3629 = vpack.c.b16 %v3613, %v3613
        %v3630 = vpack.c.b16 %v3614, %v3614
        %v3631 = vpack.c.b16 %v3615, %v3615
        %v3632 = vpack.c.b16 %v3616, %v3616
        %v3633 = vpack.c.b16 %v3617, %v3617
        %v3634 = vpack.c.b16 %v3618, %v3618
        %v3636 = vshrl.u32 %v3571, 16
        %v3638 = vshll.u32 %v3571, 16
        %v3640 = vrot.slane %v3638, 1
        %v3641 = vor.u32 %v3636, %v3640
        %v3643 = vshll.u32 %v3619, 16
        %v3645 = vrot.slane %v3643, 1
        %v3646 = vsel %vm2065, %v3641, %v3645
        %v3648 = vshrl.u32 %v3572, 16
        %v3650 = vshll.u32 %v3572, 16
        %v3652 = vrot.slane %v3650, 1
        %v3653 = vor.u32 %v3648, %v3652
        %v3655 = vshll.u32 %v3620, 16
        %v3657 = vrot.slane %v3655, 1
        %v3658 = vsel %vm2065, %v3653, %v3657
        %v3660 = vshrl.u32 %v3573, 16
        %v3662 = vshll.u32 %v3573, 16
        %v3664 = vrot.slane %v3662, 1
        %v3665 = vor.u32 %v3660, %v3664
        %v3667 = vshll.u32 %v3621, 16
        %v3669 = vrot.slane %v3667, 1
        %v3670 = vsel %vm2065, %v3665, %v3669
        %v3672 = vshrl.u32 %v3574, 16
        %v3674 = vshll.u32 %v3574, 16
        %v3676 = vrot.slane %v3674, 1
        %v3677 = vor.u32 %v3672, %v3676
        %v3679 = vshll.u32 %v3622, 16
        %v3681 = vrot.slane %v3679, 1
        %v3682 = vsel %vm2065, %v3677, %v3681
        %v3684 = vshrl.u32 %v3575, 16
        %v3686 = vshll.u32 %v3575, 16
        %v3688 = vrot.slane %v3686, 1
        %v3689 = vor.u32 %v3684, %v3688
        %v3691 = vshll.u32 %v3623, 16
        %v3693 = vrot.slane %v3691, 1
        %v3694 = vsel %vm2065, %v3689, %v3693
        %v3696 = vshrl.u32 %v3576, 16
        %v3698 = vshll.u32 %v3576, 16
        %v3700 = vrot.slane %v3698, 1
        %v3701 = vor.u32 %v3696, %v3700
        %v3703 = vshll.u32 %v3624, 16
        %v3705 = vrot.slane %v3703, 1
        %v3706 = vsel %vm2065, %v3701, %v3705
        %v3708 = vshrl.u32 %v3577, 16
        %v3710 = vshll.u32 %v3577, 16
        %v3712 = vrot.slane %v3710, 1
        %v3713 = vor.u32 %v3708, %v3712
        %v3715 = vshll.u32 %v3625, 16
        %v3717 = vrot.slane %v3715, 1
        %v3718 = vsel %vm2065, %v3713, %v3717
        %v3720 = vshrl.u32 %v3578, 16
        %v3722 = vshll.u32 %v3578, 16
        %v3724 = vrot.slane %v3722, 1
        %v3725 = vor.u32 %v3720, %v3724
        %v3727 = vshll.u32 %v3626, 16
        %v3729 = vrot.slane %v3727, 1
        %v3730 = vsel %vm2065, %v3725, %v3729
        %v3732 = vshrl.u32 %v3579, 16
        %v3734 = vshll.u32 %v3579, 16
        %v3736 = vrot.slane %v3734, 1
        %v3737 = vor.u32 %v3732, %v3736
        %v3739 = vshll.u32 %v3627, 16
        %v3741 = vrot.slane %v3739, 1
        %v3742 = vsel %vm2065, %v3737, %v3741
        %v3744 = vshrl.u32 %v3580, 16
        %v3746 = vshll.u32 %v3580, 16
        %v3748 = vrot.slane %v3746, 1
        %v3749 = vor.u32 %v3744, %v3748
        %v3751 = vshll.u32 %v3628, 16
        %v3753 = vrot.slane %v3751, 1
        %v3754 = vsel %vm2065, %v3749, %v3753
        %v3756 = vshrl.u32 %v3581, 16
        %v3758 = vshll.u32 %v3581, 16
        %v3760 = vrot.slane %v3758, 1
        %v3761 = vor.u32 %v3756, %v3760
        %v3763 = vshll.u32 %v3629, 16
        %v3765 = vrot.slane %v3763, 1
        %v3766 = vsel %vm2065, %v3761, %v3765
        %v3768 = vshrl.u32 %v3582, 16
        %v3770 = vshll.u32 %v3582, 16
        %v3772 = vrot.slane %v3770, 1
        %v3773 = vor.u32 %v3768, %v3772
        %v3775 = vshll.u32 %v3630, 16
        %v3777 = vrot.slane %v3775, 1
        %v3778 = vsel %vm2065, %v3773, %v3777
        %v3780 = vshrl.u32 %v3583, 16
        %v3782 = vshll.u32 %v3583, 16
        %v3784 = vrot.slane %v3782, 1
        %v3785 = vor.u32 %v3780, %v3784
        %v3787 = vshll.u32 %v3631, 16
        %v3789 = vrot.slane %v3787, 1
        %v3790 = vsel %vm2065, %v3785, %v3789
        %v3792 = vshrl.u32 %v3584, 16
        %v3794 = vshll.u32 %v3584, 16
        %v3796 = vrot.slane %v3794, 1
        %v3797 = vor.u32 %v3792, %v3796
        %v3799 = vshll.u32 %v3632, 16
        %v3801 = vrot.slane %v3799, 1
        %v3802 = vsel %vm2065, %v3797, %v3801
        %v3804 = vshrl.u32 %v3585, 16
        %v3806 = vshll.u32 %v3585, 16
        %v3808 = vrot.slane %v3806, 1
        %v3809 = vor.u32 %v3804, %v3808
        %v3811 = vshll.u32 %v3633, 16
        %v3813 = vrot.slane %v3811, 1
        %v3814 = vsel %vm2065, %v3809, %v3813
        %v3816 = vshrl.u32 %v3586, 16
        %v3818 = vshll.u32 %v3586, 16
        %v3820 = vrot.slane %v3818, 1
        %v3821 = vor.u32 %v3816, %v3820
        %v3823 = vshll.u32 %v3634, 16
        %v3825 = vrot.slane %v3823, 1
        %v3826 = vsel %vm2065, %v3821, %v3825
        %3827 = vrot.lane.b32.xlu0 %v3646, 4
        %v3828 = vpop.permute.xlu0 %3827
        %3829 = vrot.lane.b32.xlu0 %v3658, 4
        %v3830 = vpop.permute.xlu0 %3829
        %3831 = vrot.lane.b32.xlu0 %v3670, 4
        %v3832 = vpop.permute.xlu0 %3831
        %3833 = vrot.lane.b32.xlu0 %v3682, 4
        %v3834 = vpop.permute.xlu0 %3833
        %3835 = vrot.lane.b32.xlu0 %v3694, 4
        %v3836 = vpop.permute.xlu0 %3835
        %3837 = vrot.lane.b32.xlu0 %v3706, 4
        %v3838 = vpop.permute.xlu0 %3837
        %3839 = vrot.lane.b32.xlu0 %v3718, 4
        %v3840 = vpop.permute.xlu0 %3839
        %3841 = vrot.lane.b32.xlu0 %v3730, 4
        %v3842 = vpop.permute.xlu0 %3841
        %3843 = vrot.lane.b32.xlu0 %v3742, 4
        %v3844 = vpop.permute.xlu0 %3843
        %3845 = vrot.lane.b32.xlu0 %v3754, 4
        %v3846 = vpop.permute.xlu0 %3845
        %3847 = vrot.lane.b32.xlu0 %v3766, 4
        %v3848 = vpop.permute.xlu0 %3847
        %3849 = vrot.lane.b32.xlu0 %v3778, 4
        %v3850 = vpop.permute.xlu0 %3849
        %3851 = vrot.lane.b32.xlu0 %v3790, 4
        %v3852 = vpop.permute.xlu0 %3851
        %3853 = vrot.lane.b32.xlu0 %v3802, 4
        %v3854 = vpop.permute.xlu0 %3853
        %3855 = vrot.lane.b32.xlu0 %v3814, 4
        %v3856 = vpop.permute.xlu0 %3855
        %3857 = vrot.lane.b32.xlu0 %v3826, 4
        %v3858 = vpop.permute.xlu0 %3857
        %v3859 = vrot.slane %v3571, 1
        %v3860 = vrot.slane %v3619, 1
        %v3861 = vsel %vm2290, %v3859, %v3860
        %v3862 = vrot.slane %v3572, 1
        %v3863 = vrot.slane %v3620, 1
        %v3864 = vsel %vm2290, %v3862, %v3863
        %v3865 = vrot.slane %v3573, 1
        %v3866 = vrot.slane %v3621, 1
        %v3867 = vsel %vm2290, %v3865, %v3866
        %v3868 = vrot.slane %v3574, 1
        %v3869 = vrot.slane %v3622, 1
        %v3870 = vsel %vm2290, %v3868, %v3869
        %v3871 = vrot.slane %v3575, 1
        %v3872 = vrot.slane %v3623, 1
        %v3873 = vsel %vm2290, %v3871, %v3872
        %v3874 = vrot.slane %v3576, 1
        %v3875 = vrot.slane %v3624, 1
        %v3876 = vsel %vm2290, %v3874, %v3875
        %v3877 = vrot.slane %v3577, 1
        %v3878 = vrot.slane %v3625, 1
        %v3879 = vsel %vm2290, %v3877, %v3878
        %v3880 = vrot.slane %v3578, 1
        %v3881 = vrot.slane %v3626, 1
        %v3882 = vsel %vm2290, %v3880, %v3881
        %v3883 = vrot.slane %v3579, 1
        %v3884 = vrot.slane %v3627, 1
        %v3885 = vsel %vm2290, %v3883, %v3884
        %v3886 = vrot.slane %v3580, 1
        %v3887 = vrot.slane %v3628, 1
        %v3888 = vsel %vm2290, %v3886, %v3887
        %v3889 = vrot.slane %v3581, 1
        %v3890 = vrot.slane %v3629, 1
        %v3891 = vsel %vm2290, %v3889, %v3890
        %v3892 = vrot.slane %v3582, 1
        %v3893 = vrot.slane %v3630, 1
        %v3894 = vsel %vm2290, %v3892, %v3893
        %v3895 = vrot.slane %v3583, 1
        %v3896 = vrot.slane %v3631, 1
        %v3897 = vsel %vm2290, %v3895, %v3896
        %v3898 = vrot.slane %v3584, 1
        %v3899 = vrot.slane %v3632, 1
        %v3900 = vsel %vm2290, %v3898, %v3899
        %v3901 = vrot.slane %v3585, 1
        %v3902 = vrot.slane %v3633, 1
        %v3903 = vsel %vm2290, %v3901, %v3902
        %v3904 = vrot.slane %v3586, 1
        %v3905 = vrot.slane %v3634, 1
        %v3906 = vsel %vm2290, %v3904, %v3905
        %3907 = vrot.lane.b32.xlu0 %v3861, 8
        %v3908 = vpop.permute.xlu0 %3907
        %3909 = vrot.lane.b32.xlu0 %v3864, 8
        %v3910 = vpop.permute.xlu0 %3909
        %3911 = vrot.lane.b32.xlu0 %v3867, 8
        %v3912 = vpop.permute.xlu0 %3911
        %3913 = vrot.lane.b32.xlu0 %v3870, 8
        %v3914 = vpop.permute.xlu0 %3913
        %3915 = vrot.lane.b32.xlu0 %v3873, 8
        %v3916 = vpop.permute.xlu0 %3915
        %3917 = vrot.lane.b32.xlu0 %v3876, 8
        %v3918 = vpop.permute.xlu0 %3917
        %3919 = vrot.lane.b32.xlu0 %v3879, 8
        %v3920 = vpop.permute.xlu0 %3919
        %3921 = vrot.lane.b32.xlu0 %v3882, 8
        %v3922 = vpop.permute.xlu0 %3921
        %3923 = vrot.lane.b32.xlu0 %v3885, 8
        %v3924 = vpop.permute.xlu0 %3923
        %3925 = vrot.lane.b32.xlu0 %v3888, 8
        %v3926 = vpop.permute.xlu0 %3925
        %3927 = vrot.lane.b32.xlu0 %v3891, 8
        %v3928 = vpop.permute.xlu0 %3927
        %3929 = vrot.lane.b32.xlu0 %v3894, 8
        %v3930 = vpop.permute.xlu0 %3929
        %3931 = vrot.lane.b32.xlu0 %v3897, 8
        %v3932 = vpop.permute.xlu0 %3931
        %3933 = vrot.lane.b32.xlu0 %v3900, 8
        %v3934 = vpop.permute.xlu0 %3933
        %3935 = vrot.lane.b32.xlu0 %v3903, 8
        %v3936 = vpop.permute.xlu0 %3935
        %3937 = vrot.lane.b32.xlu0 %v3906, 8
        %v3938 = vpop.permute.xlu0 %3937
        %vm3939 = vsmask.f32 6400
        %v3940 = vrot.slane %v3636, 1
        %v3941 = vrot.slane %v3638, 2
        %v3942 = vor.u32 %v3940, %v3941
        %v3943 = vshrl.u32 %v3619, 16
        %v3945 = vrot.slane %v3943, 1
        %v3946 = vrot.slane %v3643, 2
        %v3947 = vor.u32 %v3945, %v3946
        %v3948 = vsel %vm3939, %v3942, %v3947
        %v3949 = vrot.slane %v3648, 1
        %v3950 = vrot.slane %v3650, 2
        %v3951 = vor.u32 %v3949, %v3950
        %v3952 = vshrl.u32 %v3620, 16
        %v3954 = vrot.slane %v3952, 1
        %v3955 = vrot.slane %v3655, 2
        %v3956 = vor.u32 %v3954, %v3955
        %v3957 = vsel %vm3939, %v3951, %v3956
        %v3958 = vrot.slane %v3660, 1
        %v3959 = vrot.slane %v3662, 2
        %v3960 = vor.u32 %v3958, %v3959
        %v3961 = vshrl.u32 %v3621, 16
        %v3963 = vrot.slane %v3961, 1
        %v3964 = vrot.slane %v3667, 2
        %v3965 = vor.u32 %v3963, %v3964
        %v3966 = vsel %vm3939, %v3960, %v3965
        %v3967 = vrot.slane %v3672, 1
        %v3968 = vrot.slane %v3674, 2
        %v3969 = vor.u32 %v3967, %v3968
        %v3970 = vshrl.u32 %v3622, 16
        %v3972 = vrot.slane %v3970, 1
        %v3973 = vrot.slane %v3679, 2
        %v3974 = vor.u32 %v3972, %v3973
        %v3975 = vsel %vm3939, %v3969, %v3974
        %v3976 = vrot.slane %v3684, 1
        %v3977 = vrot.slane %v3686, 2
        %v3978 = vor.u32 %v3976, %v3977
        %v3979 = vshrl.u32 %v3623, 16
        %v3981 = vrot.slane %v3979, 1
        %v3982 = vrot.slane %v3691, 2
        %v3983 = vor.u32 %v3981, %v3982
        %v3984 = vsel %vm3939, %v3978, %v3983
        %v3985 = vrot.slane %v3696, 1
        %v3986 = vrot.slane %v3698, 2
        %v3987 = vor.u32 %v3985, %v3986
        %v3988 = vshrl.u32 %v3624, 16
        %v3990 = vrot.slane %v3988, 1
        %v3991 = vrot.slane %v3703, 2
        %v3992 = vor.u32 %v3990, %v3991
        %v3993 = vsel %vm3939, %v3987, %v3992
        %v3994 = vrot.slane %v3708, 1
        %v3995 = vrot.slane %v3710, 2
        %v3996 = vor.u32 %v3994, %v3995
        %v3997 = vshrl.u32 %v3625, 16
        %v3999 = vrot.slane %v3997, 1
        %v4000 = vrot.slane %v3715, 2
        %v4001 = vor.u32 %v3999, %v4000
        %v4002 = vsel %vm3939, %v3996, %v4001
        %v4003 = vrot.slane %v3720, 1
        %v4004 = vrot.slane %v3722, 2
        %v4005 = vor.u32 %v4003, %v4004
        %v4006 = vshrl.u32 %v3626, 16
        %v4008 = vrot.slane %v4006, 1
        %v4009 = vrot.slane %v3727, 2
        %v4010 = vor.u32 %v4008, %v4009
        %v4011 = vsel %vm3939, %v4005, %v4010
        %v4012 = vrot.slane %v3732, 1
        %v4013 = vrot.slane %v3734, 2
        %v4014 = vor.u32 %v4012, %v4013
        %v4015 = vshrl.u32 %v3627, 16
        %v4017 = vrot.slane %v4015, 1
        %v4018 = vrot.slane %v3739, 2
        %v4019 = vor.u32 %v4017, %v4018
        %v4020 = vsel %vm3939, %v4014, %v4019
        %v4021 = vrot.slane %v3744, 1
        %v4022 = vrot.slane %v3746, 2
        %v4023 = vor.u32 %v4021, %v4022
        %v4024 = vshrl.u32 %v3628, 16
        %v4026 = vrot.slane %v4024, 1
        %v4027 = vrot.slane %v3751, 2
        %v4028 = vor.u32 %v4026, %v4027
        %v4029 = vsel %vm3939, %v4023, %v4028
        %v4030 = vrot.slane %v3756, 1
        %v4031 = vrot.slane %v3758, 2
        %v4032 = vor.u32 %v4030, %v4031
        %v4033 = vshrl.u32 %v3629, 16
        %v4035 = vrot.slane %v4033, 1
        %v4036 = vrot.slane %v3763, 2
        %v4037 = vor.u32 %v4035, %v4036
        %v4038 = vsel %vm3939, %v4032, %v4037
        %v4039 = vrot.slane %v3768, 1
        %v4040 = vrot.slane %v3770, 2
        %v4041 = vor.u32 %v4039, %v4040
        %v4042 = vshrl.u32 %v3630, 16
        %v4044 = vrot.slane %v4042, 1
        %v4045 = vrot.slane %v3775, 2
        %v4046 = vor.u32 %v4044, %v4045
        %v4047 = vsel %vm3939, %v4041, %v4046
        %v4048 = vrot.slane %v3780, 1
        %v4049 = vrot.slane %v3782, 2
        %v4050 = vor.u32 %v4048, %v4049
        %v4051 = vshrl.u32 %v3631, 16
        %v4053 = vrot.slane %v4051, 1
        %v4054 = vrot.slane %v3787, 2
        %v4055 = vor.u32 %v4053, %v4054
        %v4056 = vsel %vm3939, %v4050, %v4055
        %v4057 = vrot.slane %v3792, 1
        %v4058 = vrot.slane %v3794, 2
        %v4059 = vor.u32 %v4057, %v4058
        %v4060 = vshrl.u32 %v3632, 16
        %v4062 = vrot.slane %v4060, 1
        %v4063 = vrot.slane %v3799, 2
        %v4064 = vor.u32 %v4062, %v4063
        %v4065 = vsel %vm3939, %v4059, %v4064
        %v4066 = vrot.slane %v3804, 1
        %v4067 = vrot.slane %v3806, 2
        %v4068 = vor.u32 %v4066, %v4067
        %v4069 = vshrl.u32 %v3633, 16
        %v4071 = vrot.slane %v4069, 1
        %v4072 = vrot.slane %v3811, 2
        %v4073 = vor.u32 %v4071, %v4072
        %v4074 = vsel %vm3939, %v4068, %v4073
        %v4075 = vrot.slane %v3816, 1
        %v4076 = vrot.slane %v3818, 2
        %v4077 = vor.u32 %v4075, %v4076
        %v4078 = vshrl.u32 %v3634, 16
        %v4080 = vrot.slane %v4078, 1
        %v4081 = vrot.slane %v3823, 2
        %v4082 = vor.u32 %v4080, %v4081
        %v4083 = vsel %vm3939, %v4077, %v4082
        %4084 = vrot.lane.b32.xlu0 %v3948, 12
        %v4085 = vpop.permute.xlu0 %4084
        %4086 = vrot.lane.b32.xlu0 %v3957, 12
        %v4087 = vpop.permute.xlu0 %4086
        %4088 = vrot.lane.b32.xlu0 %v3966, 12
        %v4089 = vpop.permute.xlu0 %4088
        %4090 = vrot.lane.b32.xlu0 %v3975, 12
        %v4091 = vpop.permute.xlu0 %4090
        %4092 = vrot.lane.b32.xlu0 %v3984, 12
        %v4093 = vpop.permute.xlu0 %4092
        %4094 = vrot.lane.b32.xlu0 %v3993, 12
        %v4095 = vpop.permute.xlu0 %4094
        %4096 = vrot.lane.b32.xlu0 %v4002, 12
        %v4097 = vpop.permute.xlu0 %4096
        %4098 = vrot.lane.b32.xlu0 %v4011, 12
        %v4099 = vpop.permute.xlu0 %4098
        %4100 = vrot.lane.b32.xlu0 %v4020, 12
        %v4101 = vpop.permute.xlu0 %4100
        %4102 = vrot.lane.b32.xlu0 %v4029, 12
        %v4103 = vpop.permute.xlu0 %4102
        %4104 = vrot.lane.b32.xlu0 %v4038, 12
        %v4105 = vpop.permute.xlu0 %4104
        %4106 = vrot.lane.b32.xlu0 %v4047, 12
        %v4107 = vpop.permute.xlu0 %4106
        %4108 = vrot.lane.b32.xlu0 %v4056, 12
        %v4109 = vpop.permute.xlu0 %4108
        %4110 = vrot.lane.b32.xlu0 %v4065, 12
        %v4111 = vpop.permute.xlu0 %4110
        %4112 = vrot.lane.b32.xlu0 %v4074, 12
        %v4113 = vpop.permute.xlu0 %4112
        %4114 = vrot.lane.b32.xlu0 %v4083, 12
        %v4115 = vpop.permute.xlu0 %4114
        %vm4116 = vcmask 1045504
        %v4117 = vrot.slane %v3571, 2
        %v4118 = vrot.slane %v3619, 2
        %v4119 = vsel %vm4116, %v4117, %v4118
        %v4120 = vrot.slane %v3572, 2
        %v4121 = vrot.slane %v3620, 2
        %v4122 = vsel %vm4116, %v4120, %v4121
        %v4123 = vrot.slane %v3573, 2
        %v4124 = vrot.slane %v3621, 2
        %v4125 = vsel %vm4116, %v4123, %v4124
        %v4126 = vrot.slane %v3574, 2
        %v4127 = vrot.slane %v3622, 2
        %v4128 = vsel %vm4116, %v4126, %v4127
        %v4129 = vrot.slane %v3575, 2
        %v4130 = vrot.slane %v3623, 2
        %v4131 = vsel %vm4116, %v4129, %v4130
        %v4132 = vrot.slane %v3576, 2
        %v4133 = vrot.slane %v3624, 2
        %v4134 = vsel %vm4116, %v4132, %v4133
        %v4135 = vrot.slane %v3577, 2
        %v4136 = vrot.slane %v3625, 2
        %v4137 = vsel %vm4116, %v4135, %v4136
        %v4138 = vrot.slane %v3578, 2
        %v4139 = vrot.slane %v3626, 2
        %v4140 = vsel %vm4116, %v4138, %v4139
        %v4141 = vrot.slane %v3579, 2
        %v4142 = vrot.slane %v3627, 2
        %v4143 = vsel %vm4116, %v4141, %v4142
        %v4144 = vrot.slane %v3580, 2
        %v4145 = vrot.slane %v3628, 2
        %v4146 = vsel %vm4116, %v4144, %v4145
        %v4147 = vrot.slane %v3581, 2
        %v4148 = vrot.slane %v3629, 2
        %v4149 = vsel %vm4116, %v4147, %v4148
        %v4150 = vrot.slane %v3582, 2
        %v4151 = vrot.slane %v3630, 2
        %v4152 = vsel %vm4116, %v4150, %v4151
        %v4153 = vrot.slane %v3583, 2
        %v4154 = vrot.slane %v3631, 2
        %v4155 = vsel %vm4116, %v4153, %v4154
        %v4156 = vrot.slane %v3584, 2
        %v4157 = vrot.slane %v3632, 2
        %v4158 = vsel %vm4116, %v4156, %v4157
        %v4159 = vrot.slane %v3585, 2
        %v4160 = vrot.slane %v3633, 2
        %v4161 = vsel %vm4116, %v4159, %v4160
        %v4162 = vrot.slane %v3586, 2
        %v4163 = vrot.slane %v3634, 2
        %v4164 = vsel %vm4116, %v4162, %v4163
        %4165 = vrot.lane.b32.xlu0 %v4119, 16
        %v4166 = vpop.permute.xlu0 %4165
        %4167 = vrot.lane.b32.xlu0 %v4122, 16
        %v4168 = vpop.permute.xlu0 %4167
        %4169 = vrot.lane.b32.xlu0 %v4125, 16
        %v4170 = vpop.permute.xlu0 %4169
        %4171 = vrot.lane.b32.xlu0 %v4128, 16
        %v4172 = vpop.permute.xlu0 %4171
        %4173 = vrot.lane.b32.xlu0 %v4131, 16
        %v4174 = vpop.permute.xlu0 %4173
        %4175 = vrot.lane.b32.xlu0 %v4134, 16
        %v4176 = vpop.permute.xlu0 %4175
        %4177 = vrot.lane.b32.xlu0 %v4137, 16
        %v4178 = vpop.permute.xlu0 %4177
        %4179 = vrot.lane.b32.xlu0 %v4140, 16
        %v4180 = vpop.permute.xlu0 %4179
        %4181 = vrot.lane.b32.xlu0 %v4143, 16
        %v4182 = vpop.permute.xlu0 %4181
        %4183 = vrot.lane.b32.xlu0 %v4146, 16
        %v4184 = vpop.permute.xlu0 %4183
        %4185 = vrot.lane.b32.xlu0 %v4149, 16
        %v4186 = vpop.permute.xlu0 %4185
        %4187 = vrot.lane.b32.xlu0 %v4152, 16
        %v4188 = vpop.permute.xlu0 %4187
        %4189 = vrot.lane.b32.xlu0 %v4155, 16
        %v4190 = vpop.permute.xlu0 %4189
        %4191 = vrot.lane.b32.xlu0 %v4158, 16
        %v4192 = vpop.permute.xlu0 %4191
        %4193 = vrot.lane.b32.xlu0 %v4161, 16
        %v4194 = vpop.permute.xlu0 %4193
        %4195 = vrot.lane.b32.xlu0 %v4164, 16
        %v4196 = vpop.permute.xlu0 %4195
        %v4198 = vsel %vm829, %v3571, %v3828
        %v4200 = vsel %vm829, %v3572, %v3830
        %v4202 = vsel %vm829, %v3573, %v3832
        %v4204 = vsel %vm829, %v3574, %v3834
        %v4206 = vsel %vm829, %v3575, %v3836
        %v4208 = vsel %vm829, %v3576, %v3838
        %v4210 = vsel %vm829, %v3577, %v3840
        %v4212 = vsel %vm829, %v3578, %v3842
        %v4214 = vsel %vm829, %v3579, %v3844
        %v4216 = vsel %vm829, %v3580, %v3846
        %v4218 = vsel %vm829, %v3581, %v3848
        %v4220 = vsel %vm829, %v3582, %v3850
        %v4222 = vsel %vm829, %v3583, %v3852
        %v4224 = vsel %vm829, %v3584, %v3854
        %v4226 = vsel %vm829, %v3585, %v3856
        %v4228 = vsel %vm829, %v3586, %v3858
        %v4230 = vsel %vm2371, %v4198, %v3908
        %v4232 = vsel %vm2371, %v4200, %v3910
        %v4234 = vsel %vm2371, %v4202, %v3912
        %v4236 = vsel %vm2371, %v4204, %v3914
        %v4238 = vsel %vm2371, %v4206, %v3916
        %v4240 = vsel %vm2371, %v4208, %v3918
        %v4242 = vsel %vm2371, %v4210, %v3920
        %v4244 = vsel %vm2371, %v4212, %v3922
        %v4246 = vsel %vm2371, %v4214, %v3924
        %v4248 = vsel %vm2371, %v4216, %v3926
        %v4250 = vsel %vm2371, %v4218, %v3928
        %v4252 = vsel %vm2371, %v4220, %v3930
        %v4254 = vsel %vm2371, %v4222, %v3932
        %v4256 = vsel %vm2371, %v4224, %v3934
        %v4258 = vsel %vm2371, %v4226, %v3936
        %v4260 = vsel %vm2371, %v4228, %v3938
        %vm4261 = vcmask 97280
        %v4263 = vsel %vm4261, %v4230, %v4085
        %v4265 = vsel %vm4261, %v4232, %v4087
        %v4267 = vsel %vm4261, %v4234, %v4089
        %v4269 = vsel %vm4261, %v4236, %v4091
        %v4271 = vsel %vm4261, %v4238, %v4093
        %v4273 = vsel %vm4261, %v4240, %v4095
        %v4275 = vsel %vm4261, %v4242, %v4097
        %v4277 = vsel %vm4261, %v4244, %v4099
        %v4279 = vsel %vm4261, %v4246, %v4101
        %v4281 = vsel %vm4261, %v4248, %v4103
        %v4283 = vsel %vm4261, %v4250, %v4105
        %v4285 = vsel %vm4261, %v4252, %v4107
        %v4287 = vsel %vm4261, %v4254, %v4109
        %v4289 = vsel %vm4261, %v4256, %v4111
        %v4291 = vsel %vm4261, %v4258, %v4113
        %v4293 = vsel %vm4261, %v4260, %v4115
        %v4295 = vsel %vm2404, %v4263, %v4166
        %v4297 = vsel %vm2404, %v4265, %v4168
        %v4299 = vsel %vm2404, %v4267, %v4170
        %v4301 = vsel %vm2404, %v4269, %v4172
        %v4303 = vsel %vm2404, %v4271, %v4174
        %v4305 = vsel %vm2404, %v4273, %v4176
        %v4307 = vsel %vm2404, %v4275, %v4178
        %v4309 = vsel %vm2404, %v4277, %v4180
        %v4311 = vsel %vm2404, %v4279, %v4182
        %v4313 = vsel %vm2404, %v4281, %v4184
        %v4315 = vsel %vm2404, %v4283, %v4186
        %v4317 = vsel %vm2404, %v4285, %v4188
        %v4319 = vsel %vm2404, %v4287, %v4190
        %v4321 = vsel %vm2404, %v4289, %v4192
        %v4323 = vsel %vm2404, %v4291, %v4194
        %v4325 = vsel %vm2404, %v4293, %v4196
        %v4326 = vld [vmem:[%s5] sm:$0xf]
        %v4327 = vld [vmem:[%s5 + $0x4] sm:$0xf]
        %v4328 = vld [vmem:[%s5 + $0x8] sm:$0x3]
        %v4331 = vunpack.c.l.b16 %v3495
        %v4332 = vunpack.c.l.b16 %v3496
        %v4333 = vpack.c.b16 %v4332, %v4331
        %v4335 = vunpack.c.l.b16 %v3497
        %v4336 = vpack.c.b16 %v4335, %v4335
        %v4338 = vshrl.u32 %v4333, 16
        %v4340 = vshll.u32 %v4333, 16
        %v4342 = vrot.slane %v4340, 1
        %v4343 = vor.u32 %v4338, %v4342
        %v4345 = vshll.u32 %v4336, 16
        %v4347 = vrot.slane %v4345, 1
        %v4348 = vsel %vm2065, %v4343, %v4347
        %4349 = vrot.lane.b32.xlu0 %v4348, 4
        %v4350 = vpop.permute.xlu0 %4349
        %v4351 = vrot.slane %v4333, 1
        %v4352 = vrot.slane %v4336, 1
        %v4353 = vsel %vm2290, %v4351, %v4352
        %4354 = vrot.lane.b32.xlu0 %v4353, 8
        %v4355 = vpop.permute.xlu0 %4354
        %v4356 = vrot.slane %v4338, 1
        %v4357 = vrot.slane %v4340, 2
        %v4358 = vor.u32 %v4356, %v4357
        %v4359 = vshrl.u32 %v4336, 16
        %v4361 = vrot.slane %v4359, 1
        %v4362 = vrot.slane %v4345, 2
        %v4363 = vor.u32 %v4361, %v4362
        %v4364 = vsel %vm3939, %v4358, %v4363
        %4365 = vrot.lane.b32.xlu0 %v4364, 12
        %v4366 = vpop.permute.xlu0 %4365
        %v4367 = vrot.slane %v4333, 2
        %v4368 = vrot.slane %v4336, 2
        %v4369 = vsel %vm4116, %v4367, %v4368
        %4370 = vrot.lane.b32.xlu0 %v4369, 16
        %v4371 = vpop.permute.xlu0 %4370
        %v4373 = vsel %vm829, %v4333, %v4350
        %v4375 = vsel %vm2371, %v4373, %v4355
        %v4377 = vsel %vm4261, %v4375, %v4366
        %v4379 = vsel %vm2404, %v4377, %v4371
        %s4380 = scalar_lea.vmem %s5, 12
        %v4381 = vld [vmem:[%s4380] sm:$0xf]
        %v4382 = vld [vmem:[%s4380 + $0x4] sm:$0xf]
        %v4383 = vld [vmem:[%s4380 + $0x8] sm:$0x3]
        %v4387 = vunpack.c.l.b16 %v4381
        %v4388 = vunpack.c.l.b16 %v4382
        %v4389 = vunpack.c.l.b16 %v4383
        %v4390 = vpack.c.b16 %v4388, %v4387
        %v4391 = vpack.c.b16 %v4389, %v4389
        %vm4393 = vcmask 162816
        %v4394 = vsel %vm4393, %v4297, 0
        %v4396 = vsel %vm4393, %v4299, 0
        %v4398 = vsel %vm4393, %v4301, 0
        %v4400 = vsel %vm4393, %v4303, 0
        %v4402 = vsel %vm4393, %v4305, 0
        %v4404 = vsel %vm4393, %v4307, 0
        %v4406 = vsel %vm4393, %v4309, 0
        %v4408 = vsel %vm4393, %v4311, 0
        %v4410 = vsel %vm4393, %v4313, 0
        %v4412 = vsel %vm4393, %v4315, 0
        %v4414 = vsel %vm4393, %v4317, 0
        %v4416 = vsel %vm4393, %v4319, 0
        %v4418 = vsel %vm4393, %v4321, 0
        %v4420 = vsel %vm4393, %v4323, 0
        %v4422 = vsel %vm4393, %v4325, 0
        %v4424 = vsel %vm4393, %v4379, 0
        %v4427 = vsel %vm878, %v4391, 0
        %4429 = vmatprep.subr.bf16.mxu0 0
        %4430 = vmatpush1.bf16.msra.mxu0 %v4390
        %4431 = vmatprep.subr.bf16.mxu0 0
        %4432 = vmatpush1.bf16.msra.mxu0 %v4427
        %4433 = vmatprep.subr.bf16.mxu0 0
        %4434 = vmatpush1.bf16.msra.mxu0 0
        %4435 = vmatprep.subr.bf16.mxu0 0
        %4436 = vmatpush1.bf16.msra.mxu0 0
        %4437 = vmatprep.subr.bf16.mxu0 0
        %4438 = vmatpush1.bf16.msra.mxu0 0
        %4439 = vmatprep.subr.bf16.mxu0 0
        %4440 = vmatpush1.bf16.msra.mxu0 0
        %4441 = vmatprep.subr.bf16.mxu0 0
        %4442 = vmatpush1.bf16.msra.mxu0 0
        %4443 = vmatprep.subr.bf16.mxu0 0
        %4444 = vmatpush1.bf16.msra.mxu0 0
        %4445 = vmatprep.subr.bf16.mxu0 0
        %4446 = vmatpush1.bf16.msra.mxu0 0
        %4447 = vmatprep.subr.bf16.mxu0 0
        %4448 = vmatpush1.bf16.msra.mxu0 0
        %4449 = vmatprep.subr.bf16.mxu0 0
        %4450 = vmatpush1.bf16.msra.mxu0 0
        %4451 = vmatprep.subr.bf16.mxu0 0
        %4452 = vmatpush1.bf16.msra.mxu0 0
        %4453 = vmatprep.subr.bf16.mxu0 0
        %4454 = vmatpush1.bf16.msra.mxu0 0
        %4455 = vmatprep.subr.bf16.mxu0 0
        %4456 = vmatpush1.bf16.msra.mxu0 0
        %4457 = vmatprep.subr.bf16.mxu0 0
        %4458 = vmatpush1.bf16.msra.mxu0 0
        %4459 = vmatprep.subr.bf16.mxu0 0
        %4460 = vmatpush1.bf16.msra.mxu0 0
        %4461 = vmatprep.mubr.bf16.mxu0 0
        %4462 = vmatmul.mubr.bf16.gmra.mrb[0].mxu0 %v4394
        %v4463 = vpop.f32.mrb[0].mxu0
        %v4464 = vadd.f32 0.0, %v4463
        %v4465 = vpop.f32.mrb[0].mxu0
        %v4466 = vpop.f32.mrb[0].mxu0
        %v4467 = vadd.f32 0.0, %v4466
        %v4468 = vpop.f32.mrb[0].mxu0
        %4469 = vmatprep.mubr.bf16.mxu0 0
        %4470 = vmatmul.mubr.bf16.gmra.mrb[0].mxu0 %v4396
        %v4471 = vpop.f32.mrb[0].mxu0
        %v4472 = vadd.f32 0.0, %v4471
        %v4473 = vpop.f32.mrb[0].mxu0
        %v4474 = vpop.f32.mrb[0].mxu0
        %v4475 = vadd.f32 0.0, %v4474
        %v4476 = vpop.f32.mrb[0].mxu0
        %4477 = vmatprep.mubr.bf16.mxu0 0
        %4478 = vmatmul.mubr.bf16.gmra.mrb[0].mxu0 %v4398
        %v4479 = vpop.f32.mrb[0].mxu0
        %v4480 = vadd.f32 0.0, %v4479
        %v4481 = vpop.f32.mrb[0].mxu0
        %v4482 = vpop.f32.mrb[0].mxu0
        %v4483 = vadd.f32 0.0, %v4482
        %v4484 = vpop.f32.mrb[0].mxu0
        %4485 = vmatprep.mubr.bf16.mxu0 0
        %4486 = vmatmul.mubr.bf16.gmra.mrb[0].mxu0 %v4400
        %v4487 = vpop.f32.mrb[0].mxu0
        %v4488 = vadd.f32 0.0, %v4487
        %v4489 = vpop.f32.mrb[0].mxu0
        %v4490 = vpop.f32.mrb[0].mxu0
        %v4491 = vadd.f32 0.0, %v4490
        %v4492 = vpop.f32.mrb[0].mxu0
        %4493 = vmatprep.mubr.bf16.mxu0 0
        %4494 = vmatmul.mubr.bf16.gmra.mrb[0].mxu0 %v4402
        %v4495 = vpop.f32.mrb[0].mxu0
        %v4496 = vadd.f32 0.0, %v4495
        %v4497 = vpop.f32.mrb[0].mxu0
        %v4498 = vpop.f32.mrb[0].mxu0
        %v4499 = vadd.f32 0.0, %v4498
        %v4500 = vpop.f32.mrb[0].mxu0
        %4501 = vmatprep.mubr.bf16.mxu0 0
        %4502 = vmatmul.mubr.bf16.gmra.mrb[0].mxu0 %v4404
        %v4503 = vpop.f32.mrb[0].mxu0
        %v4504 = vadd.f32 0.0, %v4503
        %v4505 = vpop.f32.mrb[0].mxu0
        %v4506 = vpop.f32.mrb[0].mxu0
        %v4507 = vadd.f32 0.0, %v4506
        %v4508 = vpop.f32.mrb[0].mxu0
        %4509 = vmatprep.mubr.bf16.mxu0 0
        %4510 = vmatmul.mubr.bf16.gmra.mrb[0].mxu0 %v4406
        %v4511 = vpop.f32.mrb[0].mxu0
        %v4512 = vadd.f32 0.0, %v4511
        %v4513 = vpop.f32.mrb[0].mxu0
        %v4514 = vpop.f32.mrb[0].mxu0
        %v4515 = vadd.f32 0.0, %v4514
        %v4516 = vpop.f32.mrb[0].mxu0
        %4517 = vmatprep.mubr.bf16.mxu0 0
        %4518 = vmatmul.mubr.bf16.gmra.mrb[0].mxu0 %v4408
        %v4519 = vpop.f32.mrb[0].mxu0
        %v4520 = vadd.f32 0.0, %v4519
        %v4521 = vpop.f32.mrb[0].mxu0
        %v4522 = vpop.f32.mrb[0].mxu0
        %v4523 = vadd.f32 0.0, %v4522
        %v4524 = vpop.f32.mrb[0].mxu0
        %4525 = vmatprep.mubr.bf16.mxu0 0
        %4526 = vmatmul.mubr.bf16.gmra.mrb[0].mxu0 %v4410
        %v4527 = vpop.f32.mrb[0].mxu0
        %v4528 = vadd.f32 0.0, %v4527
        %v4529 = vpop.f32.mrb[0].mxu0
        %v4530 = vpop.f32.mrb[0].mxu0
        %v4531 = vadd.f32 0.0, %v4530
        %v4532 = vpop.f32.mrb[0].mxu0
        %4533 = vmatprep.mubr.bf16.mxu0 0
        %4534 = vmatmul.mubr.bf16.gmra.mrb[0].mxu0 %v4412
        %v4535 = vpop.f32.mrb[0].mxu0
        %v4536 = vadd.f32 0.0, %v4535
        %v4537 = vpop.f32.mrb[0].mxu0
        %v4538 = vpop.f32.mrb[0].mxu0
        %v4539 = vadd.f32 0.0, %v4538
        %v4540 = vpop.f32.mrb[0].mxu0
        %4541 = vmatprep.mubr.bf16.mxu0 0
        %4542 = vmatmul.mubr.bf16.gmra.mrb[0].mxu0 %v4414
        %v4543 = vpop.f32.mrb[0].mxu0
        %v4544 = vadd.f32 0.0, %v4543
        %v4545 = vpop.f32.mrb[0].mxu0
        %v4546 = vpop.f32.mrb[0].mxu0
        %v4547 = vadd.f32 0.0, %v4546
        %v4548 = vpop.f32.mrb[0].mxu0
        %4549 = vmatprep.mubr.bf16.mxu0 0
        %4550 = vmatmul.mubr.bf16.gmra.mrb[0].mxu0 %v4416
        %v4551 = vpop.f32.mrb[0].mxu0
        %v4552 = vadd.f32 0.0, %v4551
        %v4553 = vpop.f32.mrb[0].mxu0
        %v4554 = vpop.f32.mrb[0].mxu0
        %v4555 = vadd.f32 0.0, %v4554
        %v4556 = vpop.f32.mrb[0].mxu0
        %4557 = vmatprep.mubr.bf16.mxu0 0
        %4558 = vmatmul.mubr.bf16.gmra.mrb[0].mxu0 %v4418
        %v4559 = vpop.f32.mrb[0].mxu0
        %v4560 = vadd.f32 0.0, %v4559
        %v4561 = vpop.f32.mrb[0].mxu0
        %v4562 = vpop.f32.mrb[0].mxu0
        %v4563 = vadd.f32 0.0, %v4562
        %v4564 = vpop.f32.mrb[0].mxu0
        %4565 = vmatprep.mubr.bf16.mxu0 0
        %4566 = vmatmul.mubr.bf16.gmra.mrb[0].mxu0 %v4420
        %v4567 = vpop.f32.mrb[0].mxu0
        %v4568 = vadd.f32 0.0, %v4567
        %v4569 = vpop.f32.mrb[0].mxu0
        %v4570 = vpop.f32.mrb[0].mxu0
        %v4571 = vadd.f32 0.0, %v4570
        %v4572 = vpop.f32.mrb[0].mxu0
        %4573 = vmatprep.mubr.bf16.mxu0 0
        %4574 = vmatmul.mubr.bf16.gmra.mrb[0].mxu0 %v4422
        %v4575 = vpop.f32.mrb[0].mxu0
        %v4576 = vadd.f32 0.0, %v4575
        %v4577 = vpop.f32.mrb[0].mxu0
        %v4578 = vpop.f32.mrb[0].mxu0
        %v4579 = vadd.f32 0.0, %v4578
        %v4580 = vpop.f32.mrb[0].mxu0
        %4581 = vmatprep.mubr.bf16.mxu0 0
        %4582 = vmatmul.mubr.bf16.gmra.mrb[0].mxu0 %v4424
        %v4583 = vpop.f32.mrb[0].mxu0
        %v4584 = vadd.f32 0.0, %v4583
        %v4585 = vpop.f32.mrb[0].mxu0
        %v4586 = vpop.f32.mrb[0].mxu0
        %v4587 = vadd.f32 0.0, %v4586
        %v4588 = vpop.f32.mrb[0].mxu0
        %4589 = vdwg.mxu0
        %v4593 = vunpack.c.l.b16 %v4326
        %v4594 = vunpack.c.l.b16 %v4327
        %v4595 = vunpack.c.l.b16 %v4328
        %v4596 = vpack.c.b16 %v4594, %v4593
        %v4597 = vpack.c.b16 %v4595, %v4595
        %v4599 = vsel %vm4393, %v4295, 0
        %v4602 = vsel %vm878, %v4597, 0
        %4604 = vmatprep.subr.bf16.mxu0 0
        %4605 = vmatpush1.bf16.msra.mxu0 %v4596
        %4606 = vmatprep.subr.bf16.mxu0 0
        %4607 = vmatpush1.bf16.msra.mxu0 %v4602
        %4608 = vmatprep.subr.bf16.mxu0 0
        %4609 = vmatpush1.bf16.msra.mxu0 0
        %4610 = vmatprep.subr.bf16.mxu0 0
        %4611 = vmatpush1.bf16.msra.mxu0 0
        %4612 = vmatprep.subr.bf16.mxu0 0
        %4613 = vmatpush1.bf16.msra.mxu0 0
        %4614 = vmatprep.subr.bf16.mxu0 0
        %4615 = vmatpush1.bf16.msra.mxu0 0
        %4616 = vmatprep.subr.bf16.mxu0 0
        %4617 = vmatpush1.bf16.msra.mxu0 0
        %4618 = vmatprep.subr.bf16.mxu0 0
        %4619 = vmatpush1.bf16.msra.mxu0 0
        %4620 = vmatprep.subr.bf16.mxu0 0
        %4621 = vmatpush1.bf16.msra.mxu0 0
        %4622 = vmatprep.subr.bf16.mxu0 0
        %4623 = vmatpush1.bf16.msra.mxu0 0
        %4624 = vmatprep.subr.bf16.mxu0 0
        %4625 = vmatpush1.bf16.msra.mxu0 0
        %4626 = vmatprep.subr.bf16.mxu0 0
        %4627 = vmatpush1.bf16.msra.mxu0 0
        %4628 = vmatprep.subr.bf16.mxu0 0
        %4629 = vmatpush1.bf16.msra.mxu0 0
        %4630 = vmatprep.subr.bf16.mxu0 0
        %4631 = vmatpush1.bf16.msra.mxu0 0
        %4632 = vmatprep.subr.bf16.mxu0 0
        %4633 = vmatpush1.bf16.msra.mxu0 0
        %4634 = vmatprep.subr.bf16.mxu0 0
        %4635 = vmatpush1.bf16.msra.mxu0 0
        %4636 = vmatprep.mubr.bf16.mxu0 0
        %4637 = vmatmul.mubr.bf16.gmra.mrb[0].mxu0 %v4599
        %v4638 = vpop.f32.mrb[0].mxu0
        %v4639 = vadd.f32 %v4464, %v4638
        %v4640 = vpop.f32.mrb[0].mxu0
        %v4641 = vpop.f32.mrb[0].mxu0
        %v4642 = vadd.f32 %v4467, %v4641
        %v4643 = vpop.f32.mrb[0].mxu0
        %4644 = vmatprep.mubr.bf16.mxu0 0
        %4645 = vmatmul.mubr.bf16.gmra.mrb[0].mxu0 %v4394
        %v4646 = vpop.f32.mrb[0].mxu0
        %v4647 = vadd.f32 %v4472, %v4646
        %v4648 = vpop.f32.mrb[0].mxu0
        %v4649 = vpop.f32.mrb[0].mxu0
        %v4650 = vadd.f32 %v4475, %v4649
        %v4651 = vpop.f32.mrb[0].mxu0
        %4652 = vmatprep.mubr.bf16.mxu0 0
        %4653 = vmatmul.mubr.bf16.gmra.mrb[0].mxu0 %v4396
        %v4654 = vpop.f32.mrb[0].mxu0
        %v4655 = vadd.f32 %v4480, %v4654
        %v4656 = vpop.f32.mrb[0].mxu0
        %v4657 = vpop.f32.mrb[0].mxu0
        %v4658 = vadd.f32 %v4483, %v4657
        %v4659 = vpop.f32.mrb[0].mxu0
        %4660 = vmatprep.mubr.bf16.mxu0 0
        %4661 = vmatmul.mubr.bf16.gmra.mrb[0].mxu0 %v4398
        %v4662 = vpop.f32.mrb[0].mxu0
        %v4663 = vadd.f32 %v4488, %v4662
        %v4664 = vpop.f32.mrb[0].mxu0
        %v4665 = vpop.f32.mrb[0].mxu0
        %v4666 = vadd.f32 %v4491, %v4665
        %v4667 = vpop.f32.mrb[0].mxu0
        %4668 = vmatprep.mubr.bf16.mxu0 0
        %4669 = vmatmul.mubr.bf16.gmra.mrb[0].mxu0 %v4400
        %v4670 = vpop.f32.mrb[0].mxu0
        %v4671 = vadd.f32 %v4496, %v4670
        %v4672 = vpop.f32.mrb[0].mxu0
        %v4673 = vpop.f32.mrb[0].mxu0
        %v4674 = vadd.f32 %v4499, %v4673
        %v4675 = vpop.f32.mrb[0].mxu0
        %4676 = vmatprep.mubr.bf16.mxu0 0
        %4677 = vmatmul.mubr.bf16.gmra.mrb[0].mxu0 %v4402
        %v4678 = vpop.f32.mrb[0].mxu0
        %v4679 = vadd.f32 %v4504, %v4678
        %v4680 = vpop.f32.mrb[0].mxu0
        %v4681 = vpop.f32.mrb[0].mxu0
        %v4682 = vadd.f32 %v4507, %v4681
        %v4683 = vpop.f32.mrb[0].mxu0
        %4684 = vmatprep.mubr.bf16.mxu0 0
        %4685 = vmatmul.mubr.bf16.gmra.mrb[0].mxu0 %v4404
        %v4686 = vpop.f32.mrb[0].mxu0
        %v4687 = vadd.f32 %v4512, %v4686
        %v4688 = vpop.f32.mrb[0].mxu0
        %v4689 = vpop.f32.mrb[0].mxu0
        %v4690 = vadd.f32 %v4515, %v4689
        %v4691 = vpop.f32.mrb[0].mxu0
        %4692 = vmatprep.mubr.bf16.mxu0 0
        %4693 = vmatmul.mubr.bf16.gmra.mrb[0].mxu0 %v4406
        %v4694 = vpop.f32.mrb[0].mxu0
        %v4695 = vadd.f32 %v4520, %v4694
        %v4696 = vpop.f32.mrb[0].mxu0
        %v4697 = vpop.f32.mrb[0].mxu0
        %v4698 = vadd.f32 %v4523, %v4697
        %v4699 = vpop.f32.mrb[0].mxu0
        %4700 = vmatprep.mubr.bf16.mxu0 0
        %4701 = vmatmul.mubr.bf16.gmra.mrb[0].mxu0 %v4408
        %v4702 = vpop.f32.mrb[0].mxu0
        %v4703 = vadd.f32 %v4528, %v4702
        %v4704 = vpop.f32.mrb[0].mxu0
        %v4705 = vpop.f32.mrb[0].mxu0
        %v4706 = vadd.f32 %v4531, %v4705
        %v4707 = vpop.f32.mrb[0].mxu0
        %4708 = vmatprep.mubr.bf16.mxu0 0
        %4709 = vmatmul.mubr.bf16.gmra.mrb[0].mxu0 %v4410
        %v4710 = vpop.f32.mrb[0].mxu0
        %v4711 = vadd.f32 %v4536, %v4710
        %v4712 = vpop.f32.mrb[0].mxu0
        %v4713 = vpop.f32.mrb[0].mxu0
        %v4714 = vadd.f32 %v4539, %v4713
        %v4715 = vpop.f32.mrb[0].mxu0
        %4716 = vmatprep.mubr.bf16.mxu0 0
        %4717 = vmatmul.mubr.bf16.gmra.mrb[0].mxu0 %v4412
        %v4718 = vpop.f32.mrb[0].mxu0
        %v4719 = vadd.f32 %v4544, %v4718
        %v4720 = vpop.f32.mrb[0].mxu0
        %v4721 = vpop.f32.mrb[0].mxu0
        %v4722 = vadd.f32 %v4547, %v4721
        %v4723 = vpop.f32.mrb[0].mxu0
        %4724 = vmatprep.mubr.bf16.mxu0 0
        %4725 = vmatmul.mubr.bf16.gmra.mrb[0].mxu0 %v4414
        %v4726 = vpop.f32.mrb[0].mxu0
        %v4727 = vadd.f32 %v4552, %v4726
        %v4728 = vpop.f32.mrb[0].mxu0
        %v4729 = vpop.f32.mrb[0].mxu0
        %v4730 = vadd.f32 %v4555, %v4729
        %v4731 = vpop.f32.mrb[0].mxu0
        %4732 = vmatprep.mubr.bf16.mxu0 0
        %4733 = vmatmul.mubr.bf16.gmra.mrb[0].mxu0 %v4416
        %v4734 = vpop.f32.mrb[0].mxu0
        %v4735 = vadd.f32 %v4560, %v4734
        %v4736 = vpop.f32.mrb[0].mxu0
        %v4737 = vpop.f32.mrb[0].mxu0
        %v4738 = vadd.f32 %v4563, %v4737
        %v4739 = vpop.f32.mrb[0].mxu0
        %4740 = vmatprep.mubr.bf16.mxu0 0
        %4741 = vmatmul.mubr.bf16.gmra.mrb[0].mxu0 %v4418
        %v4742 = vpop.f32.mrb[0].mxu0
        %v4743 = vadd.f32 %v4568, %v4742
        %v4744 = vpop.f32.mrb[0].mxu0
        %v4745 = vpop.f32.mrb[0].mxu0
        %v4746 = vadd.f32 %v4571, %v4745
        %v4747 = vpop.f32.mrb[0].mxu0
        %4748 = vmatprep.mubr.bf16.mxu0 0
        %4749 = vmatmul.mubr.bf16.gmra.mrb[0].mxu0 %v4420
        %v4750 = vpop.f32.mrb[0].mxu0
        %v4751 = vadd.f32 %v4576, %v4750
        %v4752 = vpop.f32.mrb[0].mxu0
        %v4753 = vpop.f32.mrb[0].mxu0
        %v4754 = vadd.f32 %v4579, %v4753
        %v4755 = vpop.f32.mrb[0].mxu0
        %4756 = vmatprep.mubr.bf16.mxu0 0
        %4757 = vmatmul.mubr.bf16.gmra.mrb[0].mxu0 %v4422
        %v4758 = vpop.f32.mrb[0].mxu0
        %v4759 = vadd.f32 %v4584, %v4758
        %v4760 = vpop.f32.mrb[0].mxu0
        %v4761 = vpop.f32.mrb[0].mxu0
        %v4762 = vadd.f32 %v4587, %v4761
        %v4763 = vpop.f32.mrb[0].mxu0
        %4764 = vdwg.mxu0
        %v4767 = vunpack.c.l.b16 %v3498
        %v4768 = vunpack.c.l.b16 %v3499
        %v4769 = vpack.c.b16 %v4768, %v4767
        %v4771 = vunpack.c.l.b16 %v3500
        %v4772 = vpack.c.b16 %v4771, %v4771
        %v4774 = vshrl.u32 %v4769, 16
        %v4776 = vshll.u32 %v4769, 16
        %v4778 = vrot.slane %v4776, 1
        %v4779 = vor.u32 %v4774, %v4778
        %v4781 = vshll.u32 %v4772, 16
        %v4783 = vrot.slane %v4781, 1
        %v4784 = vsel %vm2065, %v4779, %v4783
        %4785 = vrot.lane.b32.xlu0 %v4784, 4
        %v4786 = vpop.permute.xlu0 %4785
        %v4787 = vrot.slane %v4769, 1
        %v4788 = vrot.slane %v4772, 1
        %v4789 = vsel %vm2290, %v4787, %v4788
        %4790 = vrot.lane.b32.xlu0 %v4789, 8
        %v4791 = vpop.permute.xlu0 %4790
        %v4792 = vrot.slane %v4774, 1
        %v4793 = vrot.slane %v4776, 2
        %v4794 = vor.u32 %v4792, %v4793
        %v4795 = vshrl.u32 %v4772, 16
        %v4797 = vrot.slane %v4795, 1
        %v4798 = vrot.slane %v4781, 2
        %v4799 = vor.u32 %v4797, %v4798
        %v4800 = vsel %vm3939, %v4794, %v4799
        %4801 = vrot.lane.b32.xlu0 %v4800, 12
        %v4802 = vpop.permute.xlu0 %4801
        %v4803 = vrot.slane %v4769, 2
        %v4804 = vrot.slane %v4772, 2
        %v4805 = vsel %vm4116, %v4803, %v4804
        %4806 = vrot.lane.b32.xlu0 %v4805, 16
        %v4807 = vpop.permute.xlu0 %4806
        %v4809 = vsel %vm829, %v4769, %v4786
        %v4811 = vsel %vm2371, %v4809, %v4791
        %v4813 = vsel %vm4261, %v4811, %v4802
        %v4815 = vsel %vm2404, %v4813, %v4807
        %s4816 = scalar_lea.vmem %s5, 24
        %v4817 = vld [vmem:[%s4816] sm:$0xf]
        %v4818 = vld [vmem:[%s4816 + $0x4] sm:$0xf]
        %v4819 = vld [vmem:[%s4816 + $0x8] sm:$0x3]
        %v4823 = vunpack.c.l.b16 %v4817
        %v4824 = vunpack.c.l.b16 %v4818
        %v4825 = vunpack.c.l.b16 %v4819
        %v4826 = vpack.c.b16 %v4824, %v4823
        %v4827 = vpack.c.b16 %v4825, %v4825
        %v4829 = vsel %vm4393, %v4815, 0
        %v4832 = vsel %vm878, %v4827, 0
        %4834 = vmatprep.subr.bf16.mxu0 0
        %4835 = vmatpush1.bf16.msra.mxu0 %v4826
        %4836 = vmatprep.subr.bf16.mxu0 0
        %4837 = vmatpush1.bf16.msra.mxu0 %v4832
        %4838 = vmatprep.subr.bf16.mxu0 0
        %4839 = vmatpush1.bf16.msra.mxu0 0
        %4840 = vmatprep.subr.bf16.mxu0 0
        %4841 = vmatpush1.bf16.msra.mxu0 0
        %4842 = vmatprep.subr.bf16.mxu0 0
        %4843 = vmatpush1.bf16.msra.mxu0 0
        %4844 = vmatprep.subr.bf16.mxu0 0
        %4845 = vmatpush1.bf16.msra.mxu0 0
        %4846 = vmatprep.subr.bf16.mxu0 0
        %4847 = vmatpush1.bf16.msra.mxu0 0
        %4848 = vmatprep.subr.bf16.mxu0 0
        %4849 = vmatpush1.bf16.msra.mxu0 0
        %4850 = vmatprep.subr.bf16.mxu0 0
        %4851 = vmatpush1.bf16.msra.mxu0 0
        %4852 = vmatprep.subr.bf16.mxu0 0
        %4853 = vmatpush1.bf16.msra.mxu0 0
        %4854 = vmatprep.subr.bf16.mxu0 0
        %4855 = vmatpush1.bf16.msra.mxu0 0
        %4856 = vmatprep.subr.bf16.mxu0 0
        %4857 = vmatpush1.bf16.msra.mxu0 0
        %4858 = vmatprep.subr.bf16.mxu0 0
        %4859 = vmatpush1.bf16.msra.mxu0 0
        %4860 = vmatprep.subr.bf16.mxu0 0
        %4861 = vmatpush1.bf16.msra.mxu0 0
        %4862 = vmatprep.subr.bf16.mxu0 0
        %4863 = vmatpush1.bf16.msra.mxu0 0
        %4864 = vmatprep.subr.bf16.mxu0 0
        %4865 = vmatpush1.bf16.msra.mxu0 0
        %4866 = vmatprep.mubr.bf16.mxu0 0
        %4867 = vmatmul.mubr.bf16.gmra.mrb[0].mxu0 %v4396
        %v4868 = vpop.f32.mrb[0].mxu0
        %v4869 = vadd.f32 0.0, %v4868
        %v4870 = vpop.f32.mrb[0].mxu0
        %v4871 = vpop.f32.mrb[0].mxu0
        %v4872 = vadd.f32 0.0, %v4871
        %v4873 = vpop.f32.mrb[0].mxu0
        %4874 = vmatprep.mubr.bf16.mxu0 0
        %4875 = vmatmul.mubr.bf16.gmra.mrb[0].mxu0 %v4398
        %v4876 = vpop.f32.mrb[0].mxu0
        %v4877 = vadd.f32 0.0, %v4876
        %v4878 = vpop.f32.mrb[0].mxu0
        %v4879 = vpop.f32.mrb[0].mxu0
        %v4880 = vadd.f32 0.0, %v4879
        %v4881 = vpop.f32.mrb[0].mxu0
        %4882 = vmatprep.mubr.bf16.mxu0 0
        %4883 = vmatmul.mubr.bf16.gmra.mrb[0].mxu0 %v4400
        %v4884 = vpop.f32.mrb[0].mxu0
        %v4885 = vadd.f32 0.0, %v4884
        %v4886 = vpop.f32.mrb[0].mxu0
        %v4887 = vpop.f32.mrb[0].mxu0
        %v4888 = vadd.f32 0.0, %v4887
        %v4889 = vpop.f32.mrb[0].mxu0
        %4890 = vmatprep.mubr.bf16.mxu0 0
        %4891 = vmatmul.mubr.bf16.gmra.mrb[0].mxu0 %v4402
        %v4892 = vpop.f32.mrb[0].mxu0
        %v4893 = vadd.f32 0.0, %v4892
        %v4894 = vpop.f32.mrb[0].mxu0
        %v4895 = vpop.f32.mrb[0].mxu0
        %v4896 = vadd.f32 0.0, %v4895
        %v4897 = vpop.f32.mrb[0].mxu0
        %4898 = vmatprep.mubr.bf16.mxu0 0
        %4899 = vmatmul.mubr.bf16.gmra.mrb[0].mxu0 %v4404
        %v4900 = vpop.f32.mrb[0].mxu0
        %v4901 = vadd.f32 0.0, %v4900
        %v4902 = vpop.f32.mrb[0].mxu0
        %v4903 = vpop.f32.mrb[0].mxu0
        %v4904 = vadd.f32 0.0, %v4903
        %v4905 = vpop.f32.mrb[0].mxu0
        %4906 = vmatprep.mubr.bf16.mxu0 0
        %4907 = vmatmul.mubr.bf16.gmra.mrb[0].mxu0 %v4406
        %v4908 = vpop.f32.mrb[0].mxu0
        %v4909 = vadd.f32 0.0, %v4908
        %v4910 = vpop.f32.mrb[0].mxu0
        %v4911 = vpop.f32.mrb[0].mxu0
        %v4912 = vadd.f32 0.0, %v4911
        %v4913 = vpop.f32.mrb[0].mxu0
        %4914 = vmatprep.mubr.bf16.mxu0 0
        %4915 = vmatmul.mubr.bf16.gmra.mrb[0].mxu0 %v4408
        %v4916 = vpop.f32.mrb[0].mxu0
        %v4917 = vadd.f32 0.0, %v4916
        %v4918 = vpop.f32.mrb[0].mxu0
        %v4919 = vpop.f32.mrb[0].mxu0
        %v4920 = vadd.f32 0.0, %v4919
        %v4921 = vpop.f32.mrb[0].mxu0
        %4922 = vmatprep.mubr.bf16.mxu0 0
        %4923 = vmatmul.mubr.bf16.gmra.mrb[0].mxu0 %v4410
        %v4924 = vpop.f32.mrb[0].mxu0
        %v4925 = vadd.f32 0.0, %v4924
        %v4926 = vpop.f32.mrb[0].mxu0
        %v4927 = vpop.f32.mrb[0].mxu0
        %v4928 = vadd.f32 0.0, %v4927
        %v4929 = vpop.f32.mrb[0].mxu0
        %4930 = vmatprep.mubr.bf16.mxu0 0
        %4931 = vmatmul.mubr.bf16.gmra.mrb[0].mxu0 %v4412
        %v4932 = vpop.f32.mrb[0].mxu0
        %v4933 = vadd.f32 0.0, %v4932
        %v4934 = vpop.f32.mrb[0].mxu0
        %v4935 = vpop.f32.mrb[0].mxu0
        %v4936 = vadd.f32 0.0, %v4935
        %v4937 = vpop.f32.mrb[0].mxu0
        %4938 = vmatprep.mubr.bf16.mxu0 0
        %4939 = vmatmul.mubr.bf16.gmra.mrb[0].mxu0 %v4414
        %v4940 = vpop.f32.mrb[0].mxu0
        %v4941 = vadd.f32 0.0, %v4940
        %v4942 = vpop.f32.mrb[0].mxu0
        %v4943 = vpop.f32.mrb[0].mxu0
        %v4944 = vadd.f32 0.0, %v4943
        %v4945 = vpop.f32.mrb[0].mxu0
        %4946 = vmatprep.mubr.bf16.mxu0 0
        %4947 = vmatmul.mubr.bf16.gmra.mrb[0].mxu0 %v4416
        %v4948 = vpop.f32.mrb[0].mxu0
        %v4949 = vadd.f32 0.0, %v4948
        %v4950 = vpop.f32.mrb[0].mxu0
        %v4951 = vpop.f32.mrb[0].mxu0
        %v4952 = vadd.f32 0.0, %v4951
        %v4953 = vpop.f32.mrb[0].mxu0
        %4954 = vmatprep.mubr.bf16.mxu0 0
        %4955 = vmatmul.mubr.bf16.gmra.mrb[0].mxu0 %v4418
        %v4956 = vpop.f32.mrb[0].mxu0
        %v4957 = vadd.f32 0.0, %v4956
        %v4958 = vpop.f32.mrb[0].mxu0
        %v4959 = vpop.f32.mrb[0].mxu0
        %v4960 = vadd.f32 0.0, %v4959
        %v4961 = vpop.f32.mrb[0].mxu0
        %4962 = vmatprep.mubr.bf16.mxu0 0
        %4963 = vmatmul.mubr.bf16.gmra.mrb[0].mxu0 %v4420
        %v4964 = vpop.f32.mrb[0].mxu0
        %v4965 = vadd.f32 0.0, %v4964
        %v4966 = vpop.f32.mrb[0].mxu0
        %v4967 = vpop.f32.mrb[0].mxu0
        %v4968 = vadd.f32 0.0, %v4967
        %v4969 = vpop.f32.mrb[0].mxu0
        %4970 = vmatprep.mubr.bf16.mxu0 0
        %4971 = vmatmul.mubr.bf16.gmra.mrb[0].mxu0 %v4422
        %v4972 = vpop.f32.mrb[0].mxu0
        %v4973 = vadd.f32 0.0, %v4972
        %v4974 = vpop.f32.mrb[0].mxu0
        %v4975 = vpop.f32.mrb[0].mxu0
        %v4976 = vadd.f32 0.0, %v4975
        %v4977 = vpop.f32.mrb[0].mxu0
        %4978 = vmatprep.mubr.bf16.mxu0 0
        %4979 = vmatmul.mubr.bf16.gmra.mrb[0].mxu0 %v4424
        %v4980 = vpop.f32.mrb[0].mxu0
        %v4981 = vadd.f32 0.0, %v4980
        %v4982 = vpop.f32.mrb[0].mxu0
        %v4983 = vpop.f32.mrb[0].mxu0
        %v4984 = vadd.f32 0.0, %v4983
        %v4985 = vpop.f32.mrb[0].mxu0
        %4986 = vmatprep.mubr.bf16.mxu0 0
        %4987 = vmatmul.mubr.bf16.gmra.mrb[0].mxu0 %v4829
        %v4988 = vpop.f32.mrb[0].mxu0
        %v4989 = vadd.f32 0.0, %v4988
        %v4990 = vpop.f32.mrb[0].mxu0
        %v4991 = vpop.f32.mrb[0].mxu0
        %v4992 = vadd.f32 0.0, %v4991
        %v4993 = vpop.f32.mrb[0].mxu0
        %4994 = vdwg.mxu0
        %v4995 = vadd.f32 %v4639, %v4869
        %v4996 = vadd.f32 %v4642, %v4872
        %v4997 = vadd.f32 %v4647, %v4877
        %v4998 = vadd.f32 %v4650, %v4880
        %v4999 = vadd.f32 %v4655, %v4885
        %v5000 = vadd.f32 %v4658, %v4888
        %v5001 = vadd.f32 %v4663, %v4893
        %v5002 = vadd.f32 %v4666, %v4896
        %v5003 = vadd.f32 %v4671, %v4901
        %v5004 = vadd.f32 %v4674, %v4904
        %v5005 = vadd.f32 %v4679, %v4909
        %v5006 = vadd.f32 %v4682, %v4912
        %v5007 = vadd.f32 %v4687, %v4917
        %v5008 = vadd.f32 %v4690, %v4920
        %v5009 = vadd.f32 %v4695, %v4925
        %v5010 = vadd.f32 %v4698, %v4928
        %v5011 = vadd.f32 %v4703, %v4933
        %v5012 = vadd.f32 %v4706, %v4936
        %v5013 = vadd.f32 %v4711, %v4941
        %v5014 = vadd.f32 %v4714, %v4944
        %v5015 = vadd.f32 %v4719, %v4949
        %v5016 = vadd.f32 %v4722, %v4952
        %v5017 = vadd.f32 %v4727, %v4957
        %v5018 = vadd.f32 %v4730, %v4960
        %v5019 = vadd.f32 %v4735, %v4965
        %v5020 = vadd.f32 %v4738, %v4968
        %v5021 = vadd.f32 %v4743, %v4973
        %v5022 = vadd.f32 %v4746, %v4976
        %v5023 = vadd.f32 %v4751, %v4981
        %v5024 = vadd.f32 %v4754, %v4984
        %v5025 = vadd.f32 %v4759, %v4989
        %v5026 = vadd.f32 %v4762, %v4992
        %v5029 = vunpack.c.l.b16 %v3501
        %v5030 = vunpack.c.l.b16 %v3502
        %v5031 = vpack.c.b16 %v5030, %v5029
        %v5033 = vunpack.c.l.b16 %v3503
        %v5034 = vpack.c.b16 %v5033, %v5033
        %v5036 = vshrl.u32 %v5031, 16
        %v5038 = vshll.u32 %v5031, 16
        %v5040 = vrot.slane %v5038, 1
        %v5041 = vor.u32 %v5036, %v5040
        %v5043 = vshll.u32 %v5034, 16
        %v5045 = vrot.slane %v5043, 1
        %v5046 = vsel %vm2065, %v5041, %v5045
        %5047 = vrot.lane.b32.xlu0 %v5046, 4
        %v5048 = vpop.permute.xlu0 %5047
        %v5049 = vrot.slane %v5031, 1
        %v5050 = vrot.slane %v5034, 1
        %v5051 = vsel %vm2290, %v5049, %v5050
        %5052 = vrot.lane.b32.xlu0 %v5051, 8
        %v5053 = vpop.permute.xlu0 %5052
        %v5054 = vrot.slane %v5036, 1
        %v5055 = vrot.slane %v5038, 2
        %v5056 = vor.u32 %v5054, %v5055
        %v5057 = vshrl.u32 %v5034, 16
        %v5059 = vrot.slane %v5057, 1
        %v5060 = vrot.slane %v5043, 2
        %v5061 = vor.u32 %v5059, %v5060
        %v5062 = vsel %vm3939, %v5056, %v5061
        %5063 = vrot.lane.b32.xlu0 %v5062, 12
        %v5064 = vpop.permute.xlu0 %5063
        %v5065 = vrot.slane %v5031, 2
        %v5066 = vrot.slane %v5034, 2
        %v5067 = vsel %vm4116, %v5065, %v5066
        %5068 = vrot.lane.b32.xlu0 %v5067, 16
        %v5069 = vpop.permute.xlu0 %5068
        %v5071 = vsel %vm829, %v5031, %v5048
        %v5073 = vsel %vm2371, %v5071, %v5053
        %v5075 = vsel %vm4261, %v5073, %v5064
        %v5077 = vsel %vm2404, %v5075, %v5069
        %s5078 = scalar_lea.vmem %s5, 36
        %v5079 = vld [vmem:[%s5078] sm:$0xf]
        %v5080 = vld [vmem:[%s5078 + $0x4] sm:$0xf]
        %v5081 = vld [vmem:[%s5078 + $0x8] sm:$0x3]
        %v5085 = vunpack.c.l.b16 %v5079
        %v5086 = vunpack.c.l.b16 %v5080
        %v5087 = vunpack.c.l.b16 %v5081
        %v5088 = vpack.c.b16 %v5086, %v5085
        %v5089 = vpack.c.b16 %v5087, %v5087
        %v5091 = vsel %vm4393, %v5077, 0
        %v5094 = vsel %vm878, %v5089, 0
        %5096 = vmatprep.subr.bf16.mxu0 0
        %5097 = vmatpush1.bf16.msra.mxu0 %v5088
        %5098 = vmatprep.subr.bf16.mxu0 0
        %5099 = vmatpush1.bf16.msra.mxu0 %v5094
        %5100 = vmatprep.subr.bf16.mxu0 0
        %5101 = vmatpush1.bf16.msra.mxu0 0
        %5102 = vmatprep.subr.bf16.mxu0 0
        %5103 = vmatpush1.bf16.msra.mxu0 0
        %5104 = vmatprep.subr.bf16.mxu0 0
        %5105 = vmatpush1.bf16.msra.mxu0 0
        %5106 = vmatprep.subr.bf16.mxu0 0
        %5107 = vmatpush1.bf16.msra.mxu0 0
        %5108 = vmatprep.subr.bf16.mxu0 0
        %5109 = vmatpush1.bf16.msra.mxu0 0
        %5110 = vmatprep.subr.bf16.mxu0 0
        %5111 = vmatpush1.bf16.msra.mxu0 0
        %5112 = vmatprep.subr.bf16.mxu0 0
        %5113 = vmatpush1.bf16.msra.mxu0 0
        %5114 = vmatprep.subr.bf16.mxu0 0
        %5115 = vmatpush1.bf16.msra.mxu0 0
        %5116 = vmatprep.subr.bf16.mxu0 0
        %5117 = vmatpush1.bf16.msra.mxu0 0
        %5118 = vmatprep.subr.bf16.mxu0 0
        %5119 = vmatpush1.bf16.msra.mxu0 0
        %5120 = vmatprep.subr.bf16.mxu0 0
        %5121 = vmatpush1.bf16.msra.mxu0 0
        %5122 = vmatprep.subr.bf16.mxu0 0
        %5123 = vmatpush1.bf16.msra.mxu0 0
        %5124 = vmatprep.subr.bf16.mxu0 0
        %5125 = vmatpush1.bf16.msra.mxu0 0
        %5126 = vmatprep.subr.bf16.mxu0 0
        %5127 = vmatpush1.bf16.msra.mxu0 0
        %5128 = vmatprep.mubr.bf16.mxu0 0
        %5129 = vmatmul.mubr.bf16.gmra.mrb[0].mxu0 %v4398
        %v5130 = vpop.f32.mrb[0].mxu0
        %v5131 = vadd.f32 0.0, %v5130
        %v5132 = vpop.f32.mrb[0].mxu0
        %v5133 = vpop.f32.mrb[0].mxu0
        %v5134 = vadd.f32 0.0, %v5133
        %v5135 = vpop.f32.mrb[0].mxu0
        %5136 = vmatprep.mubr.bf16.mxu0 0
        %5137 = vmatmul.mubr.bf16.gmra.mrb[0].mxu0 %v4400
        %v5138 = vpop.f32.mrb[0].mxu0
        %v5139 = vadd.f32 0.0, %v5138
        %v5140 = vpop.f32.mrb[0].mxu0
        %v5141 = vpop.f32.mrb[0].mxu0
        %v5142 = vadd.f32 0.0, %v5141
        %v5143 = vpop.f32.mrb[0].mxu0
        %5144 = vmatprep.mubr.bf16.mxu0 0
        %5145 = vmatmul.mubr.bf16.gmra.mrb[0].mxu0 %v4402
        %v5146 = vpop.f32.mrb[0].mxu0
        %v5147 = vadd.f32 0.0, %v5146
        %v5148 = vpop.f32.mrb[0].mxu0
        %v5149 = vpop.f32.mrb[0].mxu0
        %v5150 = vadd.f32 0.0, %v5149
        %v5151 = vpop.f32.mrb[0].mxu0
        %5152 = vmatprep.mubr.bf16.mxu0 0
        %5153 = vmatmul.mubr.bf16.gmra.mrb[0].mxu0 %v4404
        %v5154 = vpop.f32.mrb[0].mxu0
        %v5155 = vadd.f32 0.0, %v5154
        %v5156 = vpop.f32.mrb[0].mxu0
        %v5157 = vpop.f32.mrb[0].mxu0
        %v5158 = vadd.f32 0.0, %v5157
        %v5159 = vpop.f32.mrb[0].mxu0
        %5160 = vmatprep.mubr.bf16.mxu0 0
        %5161 = vmatmul.mubr.bf16.gmra.mrb[0].mxu0 %v4406
        %v5162 = vpop.f32.mrb[0].mxu0
        %v5163 = vadd.f32 0.0, %v5162
        %v5164 = vpop.f32.mrb[0].mxu0
        %v5165 = vpop.f32.mrb[0].mxu0
        %v5166 = vadd.f32 0.0, %v5165
        %v5167 = vpop.f32.mrb[0].mxu0
        %5168 = vmatprep.mubr.bf16.mxu0 0
        %5169 = vmatmul.mubr.bf16.gmra.mrb[0].mxu0 %v4408
        %v5170 = vpop.f32.mrb[0].mxu0
        %v5171 = vadd.f32 0.0, %v5170
        %v5172 = vpop.f32.mrb[0].mxu0
        %v5173 = vpop.f32.mrb[0].mxu0
        %v5174 = vadd.f32 0.0, %v5173
        %v5175 = vpop.f32.mrb[0].mxu0
        %5176 = vmatprep.mubr.bf16.mxu0 0
        %5177 = vmatmul.mubr.bf16.gmra.mrb[0].mxu0 %v4410
        %v5178 = vpop.f32.mrb[0].mxu0
        %v5179 = vadd.f32 0.0, %v5178
        %v5180 = vpop.f32.mrb[0].mxu0
        %v5181 = vpop.f32.mrb[0].mxu0
        %v5182 = vadd.f32 0.0, %v5181
        %v5183 = vpop.f32.mrb[0].mxu0
        %5184 = vmatprep.mubr.bf16.mxu0 0
        %5185 = vmatmul.mubr.bf16.gmra.mrb[0].mxu0 %v4412
        %v5186 = vpop.f32.mrb[0].mxu0
        %v5187 = vadd.f32 0.0, %v5186
        %v5188 = vpop.f32.mrb[0].mxu0
        %v5189 = vpop.f32.mrb[0].mxu0
        %v5190 = vadd.f32 0.0, %v5189
        %v5191 = vpop.f32.mrb[0].mxu0
        %5192 = vmatprep.mubr.bf16.mxu0 0
        %5193 = vmatmul.mubr.bf16.gmra.mrb[0].mxu0 %v4414
        %v5194 = vpop.f32.mrb[0].mxu0
        %v5195 = vadd.f32 0.0, %v5194
        %v5196 = vpop.f32.mrb[0].mxu0
        %v5197 = vpop.f32.mrb[0].mxu0
        %v5198 = vadd.f32 0.0, %v5197
        %v5199 = vpop.f32.mrb[0].mxu0
        %5200 = vmatprep.mubr.bf16.mxu0 0
        %5201 = vmatmul.mubr.bf16.gmra.mrb[0].mxu0 %v4416
        %v5202 = vpop.f32.mrb[0].mxu0
        %v5203 = vadd.f32 0.0, %v5202
        %v5204 = vpop.f32.mrb[0].mxu0
        %v5205 = vpop.f32.mrb[0].mxu0
        %v5206 = vadd.f32 0.0, %v5205
        %v5207 = vpop.f32.mrb[0].mxu0
        %5208 = vmatprep.mubr.bf16.mxu0 0
        %5209 = vmatmul.mubr.bf16.gmra.mrb[0].mxu0 %v4418
        %v5210 = vpop.f32.mrb[0].mxu0
        %v5211 = vadd.f32 0.0, %v5210
        %v5212 = vpop.f32.mrb[0].mxu0
        %v5213 = vpop.f32.mrb[0].mxu0
        %v5214 = vadd.f32 0.0, %v5213
        %v5215 = vpop.f32.mrb[0].mxu0
        %5216 = vmatprep.mubr.bf16.mxu0 0
        %5217 = vmatmul.mubr.bf16.gmra.mrb[0].mxu0 %v4420
        %v5218 = vpop.f32.mrb[0].mxu0
        %v5219 = vadd.f32 0.0, %v5218
        %v5220 = vpop.f32.mrb[0].mxu0
        %v5221 = vpop.f32.mrb[0].mxu0
        %v5222 = vadd.f32 0.0, %v5221
        %v5223 = vpop.f32.mrb[0].mxu0
        %5224 = vmatprep.mubr.bf16.mxu0 0
        %5225 = vmatmul.mubr.bf16.gmra.mrb[0].mxu0 %v4422
        %v5226 = vpop.f32.mrb[0].mxu0
        %v5227 = vadd.f32 0.0, %v5226
        %v5228 = vpop.f32.mrb[0].mxu0
        %v5229 = vpop.f32.mrb[0].mxu0
        %v5230 = vadd.f32 0.0, %v5229
        %v5231 = vpop.f32.mrb[0].mxu0
        %5232 = vmatprep.mubr.bf16.mxu0 0
        %5233 = vmatmul.mubr.bf16.gmra.mrb[0].mxu0 %v4424
        %v5234 = vpop.f32.mrb[0].mxu0
        %v5235 = vadd.f32 0.0, %v5234
        %v5236 = vpop.f32.mrb[0].mxu0
        %v5237 = vpop.f32.mrb[0].mxu0
        %v5238 = vadd.f32 0.0, %v5237
        %v5239 = vpop.f32.mrb[0].mxu0
        %5240 = vmatprep.mubr.bf16.mxu0 0
        %5241 = vmatmul.mubr.bf16.gmra.mrb[0].mxu0 %v4829
        %v5242 = vpop.f32.mrb[0].mxu0
        %v5243 = vadd.f32 0.0, %v5242
        %v5244 = vpop.f32.mrb[0].mxu0
        %v5245 = vpop.f32.mrb[0].mxu0
        %v5246 = vadd.f32 0.0, %v5245
        %v5247 = vpop.f32.mrb[0].mxu0
        %5248 = vmatprep.mubr.bf16.mxu0 0
        %5249 = vmatmul.mubr.bf16.gmra.mrb[0].mxu0 %v5091
        %v5250 = vpop.f32.mrb[0].mxu0
        %v5251 = vadd.f32 0.0, %v5250
        %v5252 = vpop.f32.mrb[0].mxu0
        %v5253 = vpop.f32.mrb[0].mxu0
        %v5254 = vadd.f32 0.0, %v5253
        %v5255 = vpop.f32.mrb[0].mxu0
        %5256 = vdwg.mxu0
        %v5257 = vadd.f32 %v4995, %v5131
        %v5258 = vadd.f32 %v4996, %v5134
        %v5259 = vadd.f32 %v4997, %v5139
        %v5260 = vadd.f32 %v4998, %v5142
        %v5261 = vadd.f32 %v4999, %v5147
        %v5262 = vadd.f32 %v5000, %v5150
        %v5263 = vadd.f32 %v5001, %v5155
        %v5264 = vadd.f32 %v5002, %v5158
        %v5265 = vadd.f32 %v5003, %v5163
        %v5266 = vadd.f32 %v5004, %v5166
        %v5267 = vadd.f32 %v5005, %v5171
        %v5268 = vadd.f32 %v5006, %v5174
        %v5269 = vadd.f32 %v5007, %v5179
        %v5270 = vadd.f32 %v5008, %v5182
        %v5271 = vadd.f32 %v5009, %v5187
        %v5272 = vadd.f32 %v5010, %v5190
        %v5273 = vadd.f32 %v5011, %v5195
        %v5274 = vadd.f32 %v5012, %v5198
        %v5275 = vadd.f32 %v5013, %v5203
        %v5276 = vadd.f32 %v5014, %v5206
        %v5277 = vadd.f32 %v5015, %v5211
        %v5278 = vadd.f32 %v5016, %v5214
        %v5279 = vadd.f32 %v5017, %v5219
        %v5280 = vadd.f32 %v5018, %v5222
        %v5281 = vadd.f32 %v5019, %v5227
        %v5282 = vadd.f32 %v5020, %v5230
        %v5283 = vadd.f32 %v5021, %v5235
        %v5284 = vadd.f32 %v5022, %v5238
        %v5285 = vadd.f32 %v5023, %v5243
        %v5286 = vadd.f32 %v5024, %v5246
        %v5287 = vadd.f32 %v5025, %v5251
        %v5288 = vadd.f32 %v5026, %v5254
        %v5291 = vunpack.c.l.b16 %v3504
        %v5292 = vunpack.c.l.b16 %v3505
        %v5293 = vpack.c.b16 %v5292, %v5291
        %v5295 = vunpack.c.l.b16 %v3506
        %v5296 = vpack.c.b16 %v5295, %v5295
        %v5298 = vshrl.u32 %v5293, 16
        %v5300 = vshll.u32 %v5293, 16
        %v5302 = vrot.slane %v5300, 1
        %v5303 = vor.u32 %v5298, %v5302
        %v5305 = vshll.u32 %v5296, 16
        %v5307 = vrot.slane %v5305, 1
        %v5308 = vsel %vm2065, %v5303, %v5307
        %5309 = vrot.lane.b32.xlu0 %v5308, 4
        %v5310 = vpop.permute.xlu0 %5309
        %v5311 = vrot.slane %v5293, 1
        %v5312 = vrot.slane %v5296, 1
        %v5313 = vsel %vm2290, %v5311, %v5312
        %5314 = vrot.lane.b32.xlu0 %v5313, 8
        %v5315 = vpop.permute.xlu0 %5314
        %v5316 = vrot.slane %v5298, 1
        %v5317 = vrot.slane %v5300, 2
        %v5318 = vor.u32 %v5316, %v5317
        %v5319 = vshrl.u32 %v5296, 16
        %v5321 = vrot.slane %v5319, 1
        %v5322 = vrot.slane %v5305, 2
        %v5323 = vor.u32 %v5321, %v5322
        %v5324 = vsel %vm3939, %v5318, %v5323
        %5325 = vrot.lane.b32.xlu0 %v5324, 12
        %v5326 = vpop.permute.xlu0 %5325
        %v5327 = vrot.slane %v5293, 2
        %v5328 = vrot.slane %v5296, 2
        %v5329 = vsel %vm4116, %v5327, %v5328
        %5330 = vrot.lane.b32.xlu0 %v5329, 16
        %v5331 = vpop.permute.xlu0 %5330
        %v5333 = vsel %vm829, %v5293, %v5310
        %v5335 = vsel %vm2371, %v5333, %v5315
        %v5337 = vsel %vm4261, %v5335, %v5326
        %v5339 = vsel %vm2404, %v5337, %v5331
        %s5340 = scalar_lea.vmem %s5, 48
        %v5341 = vld [vmem:[%s5340] sm:$0xf]
        %v5342 = vld [vmem:[%s5340 + $0x4] sm:$0xf]
        %v5343 = vld [vmem:[%s5340 + $0x8] sm:$0x3]
        %v5347 = vunpack.c.l.b16 %v5341
        %v5348 = vunpack.c.l.b16 %v5342
        %v5349 = vunpack.c.l.b16 %v5343
        %v5350 = vpack.c.b16 %v5348, %v5347
        %v5351 = vpack.c.b16 %v5349, %v5349
        %v5353 = vsel %vm4393, %v5339, 0
        %v5356 = vsel %vm878, %v5351, 0
        %5358 = vmatprep.subr.bf16.mxu0 0
        %5359 = vmatpush1.bf16.msra.mxu0 %v5350
        %5360 = vmatprep.subr.bf16.mxu0 0
        %5361 = vmatpush1.bf16.msra.mxu0 %v5356
        %5362 = vmatprep.subr.bf16.mxu0 0
        %5363 = vmatpush1.bf16.msra.mxu0 0
        %5364 = vmatprep.subr.bf16.mxu0 0
        %5365 = vmatpush1.bf16.msra.mxu0 0
        %5366 = vmatprep.subr.bf16.mxu0 0
        %5367 = vmatpush1.bf16.msra.mxu0 0
        %5368 = vmatprep.subr.bf16.mxu0 0
        %5369 = vmatpush1.bf16.msra.mxu0 0
        %5370 = vmatprep.subr.bf16.mxu0 0
        %5371 = vmatpush1.bf16.msra.mxu0 0
        %5372 = vmatprep.subr.bf16.mxu0 0
        %5373 = vmatpush1.bf16.msra.mxu0 0
        %5374 = vmatprep.subr.bf16.mxu0 0
        %5375 = vmatpush1.bf16.msra.mxu0 0
        %5376 = vmatprep.subr.bf16.mxu0 0
        %5377 = vmatpush1.bf16.msra.mxu0 0
        %5378 = vmatprep.subr.bf16.mxu0 0
        %5379 = vmatpush1.bf16.msra.mxu0 0
        %5380 = vmatprep.subr.bf16.mxu0 0
        %5381 = vmatpush1.bf16.msra.mxu0 0
        %5382 = vmatprep.subr.bf16.mxu0 0
        %5383 = vmatpush1.bf16.msra.mxu0 0
        %5384 = vmatprep.subr.bf16.mxu0 0
        %5385 = vmatpush1.bf16.msra.mxu0 0
        %5386 = vmatprep.subr.bf16.mxu0 0
        %5387 = vmatpush1.bf16.msra.mxu0 0
        %5388 = vmatprep.subr.bf16.mxu0 0
        %5389 = vmatpush1.bf16.msra.mxu0 0
        %5390 = vmatprep.mubr.bf16.mxu0 0
        %5391 = vmatmul.mubr.bf16.gmra.mrb[0].mxu0 %v4400
        %v5392 = vpop.f32.mrb[0].mxu0
        %v5393 = vadd.f32 0.0, %v5392
        %v5394 = vpop.f32.mrb[0].mxu0
        %v5395 = vpop.f32.mrb[0].mxu0
        %v5396 = vadd.f32 0.0, %v5395
        %v5397 = vpop.f32.mrb[0].mxu0
        %5398 = vmatprep.mubr.bf16.mxu0 0
        %5399 = vmatmul.mubr.bf16.gmra.mrb[0].mxu0 %v4402
        %v5400 = vpop.f32.mrb[0].mxu0
        %v5401 = vadd.f32 0.0, %v5400
        %v5402 = vpop.f32.mrb[0].mxu0
        %v5403 = vpop.f32.mrb[0].mxu0
        %v5404 = vadd.f32 0.0, %v5403
        %v5405 = vpop.f32.mrb[0].mxu0
        %5406 = vmatprep.mubr.bf16.mxu0 0
        %5407 = vmatmul.mubr.bf16.gmra.mrb[0].mxu0 %v4404
        %v5408 = vpop.f32.mrb[0].mxu0
        %v5409 = vadd.f32 0.0, %v5408
        %v5410 = vpop.f32.mrb[0].mxu0
        %v5411 = vpop.f32.mrb[0].mxu0
        %v5412 = vadd.f32 0.0, %v5411
        %v5413 = vpop.f32.mrb[0].mxu0
        %5414 = vmatprep.mubr.bf16.mxu0 0
        %5415 = vmatmul.mubr.bf16.gmra.mrb[0].mxu0 %v4406
        %v5416 = vpop.f32.mrb[0].mxu0
        %v5417 = vadd.f32 0.0, %v5416
        %v5418 = vpop.f32.mrb[0].mxu0
        %v5419 = vpop.f32.mrb[0].mxu0
        %v5420 = vadd.f32 0.0, %v5419
        %v5421 = vpop.f32.mrb[0].mxu0
        %5422 = vmatprep.mubr.bf16.mxu0 0
        %5423 = vmatmul.mubr.bf16.gmra.mrb[0].mxu0 %v4408
        %v5424 = vpop.f32.mrb[0].mxu0
        %v5425 = vadd.f32 0.0, %v5424
        %v5426 = vpop.f32.mrb[0].mxu0
        %v5427 = vpop.f32.mrb[0].mxu0
        %v5428 = vadd.f32 0.0, %v5427
        %v5429 = vpop.f32.mrb[0].mxu0
        %5430 = vmatprep.mubr.bf16.mxu0 0
        %5431 = vmatmul.mubr.bf16.gmra.mrb[0].mxu0 %v4410
        %v5432 = vpop.f32.mrb[0].mxu0
        %v5433 = vadd.f32 0.0, %v5432
        %v5434 = vpop.f32.mrb[0].mxu0
        %v5435 = vpop.f32.mrb[0].mxu0
        %v5436 = vadd.f32 0.0, %v5435
        %v5437 = vpop.f32.mrb[0].mxu0
        %5438 = vmatprep.mubr.bf16.mxu0 0
        %5439 = vmatmul.mubr.bf16.gmra.mrb[0].mxu0 %v4412
        %v5440 = vpop.f32.mrb[0].mxu0
        %v5441 = vadd.f32 0.0, %v5440
        %v5442 = vpop.f32.mrb[0].mxu0
        %v5443 = vpop.f32.mrb[0].mxu0
        %v5444 = vadd.f32 0.0, %v5443
        %v5445 = vpop.f32.mrb[0].mxu0
        %5446 = vmatprep.mubr.bf16.mxu0 0
        %5447 = vmatmul.mubr.bf16.gmra.mrb[0].mxu0 %v4414
        %v5448 = vpop.f32.mrb[0].mxu0
        %v5449 = vadd.f32 0.0, %v5448
        %v5450 = vpop.f32.mrb[0].mxu0
        %v5451 = vpop.f32.mrb[0].mxu0
        %v5452 = vadd.f32 0.0, %v5451
        %v5453 = vpop.f32.mrb[0].mxu0
        %5454 = vmatprep.mubr.bf16.mxu0 0
        %5455 = vmatmul.mubr.bf16.gmra.mrb[0].mxu0 %v4416
        %v5456 = vpop.f32.mrb[0].mxu0
        %v5457 = vadd.f32 0.0, %v5456
        %v5458 = vpop.f32.mrb[0].mxu0
        %v5459 = vpop.f32.mrb[0].mxu0
        %v5460 = vadd.f32 0.0, %v5459
        %v5461 = vpop.f32.mrb[0].mxu0
        %5462 = vmatprep.mubr.bf16.mxu0 0
        %5463 = vmatmul.mubr.bf16.gmra.mrb[0].mxu0 %v4418
        %v5464 = vpop.f32.mrb[0].mxu0
        %v5465 = vadd.f32 0.0, %v5464
        %v5466 = vpop.f32.mrb[0].mxu0
        %v5467 = vpop.f32.mrb[0].mxu0
        %v5468 = vadd.f32 0.0, %v5467
        %v5469 = vpop.f32.mrb[0].mxu0
        %5470 = vmatprep.mubr.bf16.mxu0 0
        %5471 = vmatmul.mubr.bf16.gmra.mrb[0].mxu0 %v4420
        %v5472 = vpop.f32.mrb[0].mxu0
        %v5473 = vadd.f32 0.0, %v5472
        %v5474 = vpop.f32.mrb[0].mxu0
        %v5475 = vpop.f32.mrb[0].mxu0
        %v5476 = vadd.f32 0.0, %v5475
        %v5477 = vpop.f32.mrb[0].mxu0
        %5478 = vmatprep.mubr.bf16.mxu0 0
        %5479 = vmatmul.mubr.bf16.gmra.mrb[0].mxu0 %v4422
        %v5480 = vpop.f32.mrb[0].mxu0
        %v5481 = vadd.f32 0.0, %v5480
        %v5482 = vpop.f32.mrb[0].mxu0
        %v5483 = vpop.f32.mrb[0].mxu0
        %v5484 = vadd.f32 0.0, %v5483
        %v5485 = vpop.f32.mrb[0].mxu0
        %5486 = vmatprep.mubr.bf16.mxu0 0
        %5487 = vmatmul.mubr.bf16.gmra.mrb[0].mxu0 %v4424
        %v5488 = vpop.f32.mrb[0].mxu0
        %v5489 = vadd.f32 0.0, %v5488
        %v5490 = vpop.f32.mrb[0].mxu0
        %v5491 = vpop.f32.mrb[0].mxu0
        %v5492 = vadd.f32 0.0, %v5491
        %v5493 = vpop.f32.mrb[0].mxu0
        %5494 = vmatprep.mubr.bf16.mxu0 0
        %5495 = vmatmul.mubr.bf16.gmra.mrb[0].mxu0 %v4829
        %v5496 = vpop.f32.mrb[0].mxu0
        %v5497 = vadd.f32 0.0, %v5496
        %v5498 = vpop.f32.mrb[0].mxu0
        %v5499 = vpop.f32.mrb[0].mxu0
        %v5500 = vadd.f32 0.0, %v5499
        %v5501 = vpop.f32.mrb[0].mxu0
        %5502 = vmatprep.mubr.bf16.mxu0 0
        %5503 = vmatmul.mubr.bf16.gmra.mrb[0].mxu0 %v5091
        %v5504 = vpop.f32.mrb[0].mxu0
        %v5505 = vadd.f32 0.0, %v5504
        %v5506 = vpop.f32.mrb[0].mxu0
        %v5507 = vpop.f32.mrb[0].mxu0
        %v5508 = vadd.f32 0.0, %v5507
        %v5509 = vpop.f32.mrb[0].mxu0
        %5510 = vmatprep.mubr.bf16.mxu0 0
        %5511 = vmatmul.mubr.bf16.gmra.mrb[0].mxu0 %v5353
        %v5512 = vpop.f32.mrb[0].mxu0
        %v5513 = vadd.f32 0.0, %v5512
        %v5514 = vpop.f32.mrb[0].mxu0
        %v5515 = vpop.f32.mrb[0].mxu0
        %v5516 = vadd.f32 0.0, %v5515
        %v5517 = vpop.f32.mrb[0].mxu0
        %5518 = vdwg.mxu0
        %v5519 = vadd.f32 %v5257, %v5393
        %v5520 = vadd.f32 %v5258, %v5396
        %v5521 = vadd.f32 %v5259, %v5401
        %v5522 = vadd.f32 %v5260, %v5404
        %v5523 = vadd.f32 %v5261, %v5409
        %v5524 = vadd.f32 %v5262, %v5412
        %v5525 = vadd.f32 %v5263, %v5417
        %v5526 = vadd.f32 %v5264, %v5420
        %v5527 = vadd.f32 %v5265, %v5425
        %v5528 = vadd.f32 %v5266, %v5428
        %v5529 = vadd.f32 %v5267, %v5433
        %v5530 = vadd.f32 %v5268, %v5436
        %v5531 = vadd.f32 %v5269, %v5441
        %v5532 = vadd.f32 %v5270, %v5444
        %v5533 = vadd.f32 %v5271, %v5449
        %v5534 = vadd.f32 %v5272, %v5452
        %v5535 = vadd.f32 %v5273, %v5457
        %v5536 = vadd.f32 %v5274, %v5460
        %v5537 = vadd.f32 %v5275, %v5465
        %v5538 = vadd.f32 %v5276, %v5468
        %v5539 = vadd.f32 %v5277, %v5473
        %v5540 = vadd.f32 %v5278, %v5476
        %v5541 = vadd.f32 %v5279, %v5481
        %v5542 = vadd.f32 %v5280, %v5484
        %v5543 = vadd.f32 %v5281, %v5489
        %v5544 = vadd.f32 %v5282, %v5492
        %v5545 = vadd.f32 %v5283, %v5497
        %v5546 = vadd.f32 %v5284, %v5500
        %v5547 = vadd.f32 %v5285, %v5505
        %v5548 = vadd.f32 %v5286, %v5508
        %v5549 = vadd.f32 %v5287, %v5513
        %v5550 = vadd.f32 %v5288, %v5516
        %v5551 = vld [vmem:[%s6] sm:$0x1]
        %v5553 = vlaneseq
        %v5554 = vshrl.u32 %v5553, 7
        %v5555 = vsub.s32 0, %v5554
        %v5556 = vrot.slane %v5551, %v5555
        %v5558 = vadd.f32 %v5519, %v5556
        %v5559 = vadd.f32 %v5520, %v5556
        %v5560 = vadd.f32 %v5521, %v5556
        %v5561 = vadd.f32 %v5522, %v5556
        %v5562 = vadd.f32 %v5523, %v5556
        %v5563 = vadd.f32 %v5524, %v5556
        %v5564 = vadd.f32 %v5525, %v5556
        %v5565 = vadd.f32 %v5526, %v5556
        %v5566 = vadd.f32 %v5527, %v5556
        %v5567 = vadd.f32 %v5528, %v5556
        %v5568 = vadd.f32 %v5529, %v5556
        %v5569 = vadd.f32 %v5530, %v5556
        %v5570 = vadd.f32 %v5531, %v5556
        %v5571 = vadd.f32 %v5532, %v5556
        %v5572 = vadd.f32 %v5533, %v5556
        %v5573 = vadd.f32 %v5534, %v5556
        %v5574 = vadd.f32 %v5535, %v5556
        %v5575 = vadd.f32 %v5536, %v5556
        %v5576 = vadd.f32 %v5537, %v5556
        %v5577 = vadd.f32 %v5538, %v5556
        %v5578 = vadd.f32 %v5539, %v5556
        %v5579 = vadd.f32 %v5540, %v5556
        %v5580 = vadd.f32 %v5541, %v5556
        %v5581 = vadd.f32 %v5542, %v5556
        %v5582 = vadd.f32 %v5543, %v5556
        %v5583 = vadd.f32 %v5544, %v5556
        %v5584 = vadd.f32 %v5545, %v5556
        %v5585 = vadd.f32 %v5546, %v5556
        %v5586 = vadd.f32 %v5547, %v5556
        %v5587 = vadd.f32 %v5548, %v5556
        %v5588 = vadd.f32 %v5549, %v5556
        %v5589 = vadd.f32 %v5550, %v5556
        %v5590 = vmax.f32 %v5558, 0.0
        %v5591 = vmax.f32 %v5559, 0.0
        %v5592 = vmax.f32 %v5560, 0.0
        %v5593 = vmax.f32 %v5561, 0.0
        %v5594 = vmax.f32 %v5562, 0.0
        %v5595 = vmax.f32 %v5563, 0.0
        %v5596 = vmax.f32 %v5564, 0.0
        %v5597 = vmax.f32 %v5565, 0.0
        %v5598 = vmax.f32 %v5566, 0.0
        %v5599 = vmax.f32 %v5567, 0.0
        %v5600 = vmax.f32 %v5568, 0.0
        %v5601 = vmax.f32 %v5569, 0.0
        %v5602 = vmax.f32 %v5570, 0.0
        %v5603 = vmax.f32 %v5571, 0.0
        %v5604 = vmax.f32 %v5572, 0.0
        %v5605 = vmax.f32 %v5573, 0.0
        %v5606 = vmax.f32 %v5574, 0.0
        %v5607 = vmax.f32 %v5575, 0.0
        %v5608 = vmax.f32 %v5576, 0.0
        %v5609 = vmax.f32 %v5577, 0.0
        %v5610 = vmax.f32 %v5578, 0.0
        %v5611 = vmax.f32 %v5579, 0.0
        %v5612 = vmax.f32 %v5580, 0.0
        %v5613 = vmax.f32 %v5581, 0.0
        %v5614 = vmax.f32 %v5582, 0.0
        %v5615 = vmax.f32 %v5583, 0.0
        %v5616 = vmax.f32 %v5584, 0.0
        %v5617 = vmax.f32 %v5585, 0.0
        %v5618 = vmax.f32 %v5586, 0.0
        %v5619 = vmax.f32 %v5587, 0.0
        %v5620 = vmax.f32 %v5588, 0.0
        %v5621 = vmax.f32 %v5589, 0.0
        %v5623 = vshrl.u32 %v332, 16
        %v5625 = vrot.slane %v5623, 4
        %v5626 = vshll.u32 %v332, 16
        %v5628 = vrot.slane %v5626, 5
        %v5629 = vor.u32 %v5625, %v5628
        %v5630 = vrot.slane %v5629, 4
        %v5632 = vshll.u32 %v333, 16
        %v5634 = vrot.slane %v5632, 5
        %v5635 = vsel %vm388, %v5630, %v5634
        %v5636 = vshrl.u32 %v333, 16
        %v5638 = vrot.slane %v5636, 4
        %v5639 = vor.u32 %v5638, %v5634
        %v5640 = vrot.slane %v5639, 4
        %v5642 = vshll.u32 %v334, 16
        %v5644 = vrot.slane %v5642, 5
        %v5645 = vsel %vm388, %v5640, %v5644
        %v5647 = vshrl.u32 %v383, 16
        %v5649 = vrot.slane %v5647, 4
        %v5650 = vshll.u32 %v383, 16
        %v5652 = vrot.slane %v5650, 5
        %v5653 = vor.u32 %v5649, %v5652
        %v5654 = vrot.slane %v5653, 4
        %v5656 = vshll.u32 %v384, 16
        %v5658 = vrot.slane %v5656, 5
        %v5659 = vsel %vm388, %v5654, %v5658
        %v5660 = vshrl.u32 %v384, 16
        %v5662 = vrot.slane %v5660, 4
        %v5663 = vor.u32 %v5662, %v5658
        %v5664 = vrot.slane %v5663, 4
        %v5666 = vshll.u32 %v385, 16
        %v5668 = vrot.slane %v5666, 5
        %v5669 = vsel %vm388, %v5664, %v5668
        %v5706 = vmax.bf16 %v332, %v5635
        %v5707 = vmax.bf16 %v333, %v5645
        %v5708 = vmax.bf16 %v335, %v402
        %v5709 = vmax.bf16 %v336, %v412
        %v5710 = vmax.bf16 %v338, %v426
        %v5711 = vmax.bf16 %v339, %v436
        %v5712 = vmax.bf16 %v341, %v450
        %v5713 = vmax.bf16 %v342, %v460
        %v5714 = vmax.bf16 %v344, %v474
        %v5715 = vmax.bf16 %v345, %v484
        %v5716 = vmax.bf16 %v347, %v498
        %v5717 = vmax.bf16 %v348, %v508
        %v5718 = vmax.bf16 %v350, %v522
        %v5719 = vmax.bf16 %v351, %v532
        %v5720 = vmax.bf16 %v353, %v546
        %v5721 = vmax.bf16 %v354, %v556
        %v5722 = vmax.bf16 %v356, %v570
        %v5723 = vmax.bf16 %v357, %v580
        %v5724 = vmax.bf16 %v359, %v594
        %v5725 = vmax.bf16 %v360, %v604
        %v5726 = vmax.bf16 %v362, %v618
        %v5727 = vmax.bf16 %v363, %v628
        %v5728 = vmax.bf16 %v365, %v642
        %v5729 = vmax.bf16 %v366, %v652
        %v5730 = vmax.bf16 %v368, %v666
        %v5731 = vmax.bf16 %v369, %v676
        %v5732 = vmax.bf16 %v371, %v690
        %v5733 = vmax.bf16 %v372, %v700
        %v5734 = vmax.bf16 %v374, %v714
        %v5735 = vmax.bf16 %v375, %v724
        %v5736 = vmax.bf16 %v377, %v738
        %v5737 = vmax.bf16 %v378, %v748
        %v5738 = vmax.bf16 %v380, %v762
        %v5739 = vmax.bf16 %v381, %v772
        %v5740 = vmax.bf16 %v383, %v5659
        %v5741 = vmax.bf16 %v384, %v5669
        %vm5796 = vcmask 1042432
        %vm5797 = vcmask 1046532
        %vm5798 = vmor %vm5796, %vm5797
        %v5799 = vrot.slane %v332, 5
        %v5800 = vrot.slane %v5799, 4
        %v5801 = vrot.slane %v333, 5
        %v5802 = vsel %vm5798, %v5800, %v5801
        %v5803 = vrot.slane %v5801, 4
        %v5804 = vrot.slane %v334, 5
        %v5805 = vsel %vm5798, %v5803, %v5804
        %v5806 = vrot.slane %v335, 5
        %v5807 = vrot.slane %v5806, 4
        %v5808 = vrot.slane %v336, 5
        %v5809 = vsel %vm5798, %v5807, %v5808
        %v5810 = vrot.slane %v5808, 4
        %v5811 = vrot.slane %v337, 5
        %v5812 = vsel %vm5798, %v5810, %v5811
        %v5813 = vrot.slane %v338, 5
        %v5814 = vrot.slane %v5813, 4
        %v5815 = vrot.slane %v339, 5
        %v5816 = vsel %vm5798, %v5814, %v5815
        %v5817 = vrot.slane %v5815, 4
        %v5818 = vrot.slane %v340, 5
        %v5819 = vsel %vm5798, %v5817, %v5818
        %v5820 = vrot.slane %v341, 5
        %v5821 = vrot.slane %v5820, 4
        %v5822 = vrot.slane %v342, 5
        %v5823 = vsel %vm5798, %v5821, %v5822
        %v5824 = vrot.slane %v5822, 4
        %v5825 = vrot.slane %v343, 5
        %v5826 = vsel %vm5798, %v5824, %v5825
        %v5827 = vrot.slane %v344, 5
        %v5828 = vrot.slane %v5827, 4
        %v5829 = vrot.slane %v345, 5
        %v5830 = vsel %vm5798, %v5828, %v5829
        %v5831 = vrot.slane %v5829, 4
        %v5832 = vrot.slane %v346, 5
        %v5833 = vsel %vm5798, %v5831, %v5832
        %v5834 = vrot.slane %v347, 5
        %v5835 = vrot.slane %v5834, 4
        %v5836 = vrot.slane %v348, 5
        %v5837 = vsel %vm5798, %v5835, %v5836
        %v5838 = vrot.slane %v5836, 4
        %v5839 = vrot.slane %v349, 5
        %v5840 = vsel %vm5798, %v5838, %v5839
        %v5841 = vrot.slane %v350, 5
        %v5842 = vrot.slane %v5841, 4
        %v5843 = vrot.slane %v351, 5
        %v5844 = vsel %vm5798, %v5842, %v5843
        %v5845 = vrot.slane %v5843, 4
        %v5846 = vrot.slane %v352, 5
        %v5847 = vsel %vm5798, %v5845, %v5846
        %v5848 = vrot.slane %v353, 5
        %v5849 = vrot.slane %v5848, 4
        %v5850 = vrot.slane %v354, 5
        %v5851 = vsel %vm5798, %v5849, %v5850
        %v5852 = vrot.slane %v5850, 4
        %v5853 = vrot.slane %v355, 5
        %v5854 = vsel %vm5798, %v5852, %v5853
        %v5855 = vrot.slane %v356, 5
        %v5856 = vrot.slane %v5855, 4
        %v5857 = vrot.slane %v357, 5
        %v5858 = vsel %vm5798, %v5856, %v5857
        %v5859 = vrot.slane %v5857, 4
        %v5860 = vrot.slane %v358, 5
        %v5861 = vsel %vm5798, %v5859, %v5860
        %v5862 = vrot.slane %v359, 5
        %v5863 = vrot.slane %v5862, 4
        %v5864 = vrot.slane %v360, 5
        %v5865 = vsel %vm5798, %v5863, %v5864
        %v5866 = vrot.slane %v5864, 4
        %v5867 = vrot.slane %v361, 5
        %v5868 = vsel %vm5798, %v5866, %v5867
        %v5869 = vrot.slane %v362, 5
        %v5870 = vrot.slane %v5869, 4
        %v5871 = vrot.slane %v363, 5
        %v5872 = vsel %vm5798, %v5870, %v5871
        %v5873 = vrot.slane %v5871, 4
        %v5874 = vrot.slane %v364, 5
        %v5875 = vsel %vm5798, %v5873, %v5874
        %v5876 = vrot.slane %v365, 5
        %v5877 = vrot.slane %v5876, 4
        %v5878 = vrot.slane %v366, 5
        %v5879 = vsel %vm5798, %v5877, %v5878
        %v5880 = vrot.slane %v5878, 4
        %v5881 = vrot.slane %v367, 5
        %v5882 = vsel %vm5798, %v5880, %v5881
        %v5883 = vrot.slane %v368, 5
        %v5884 = vrot.slane %v5883, 4
        %v5885 = vrot.slane %v369, 5
        %v5886 = vsel %vm5798, %v5884, %v5885
        %v5887 = vrot.slane %v5885, 4
        %v5888 = vrot.slane %v370, 5
        %v5889 = vsel %vm5798, %v5887, %v5888
        %v5890 = vrot.slane %v371, 5
        %v5891 = vrot.slane %v5890, 4
        %v5892 = vrot.slane %v372, 5
        %v5893 = vsel %vm5798, %v5891, %v5892
        %v5894 = vrot.slane %v5892, 4
        %v5895 = vrot.slane %v373, 5
        %v5896 = vsel %vm5798, %v5894, %v5895
        %v5897 = vrot.slane %v374, 5
        %v5898 = vrot.slane %v5897, 4
        %v5899 = vrot.slane %v375, 5
        %v5900 = vsel %vm5798, %v5898, %v5899
        %v5901 = vrot.slane %v5899, 4
        %v5902 = vrot.slane %v376, 5
        %v5903 = vsel %vm5798, %v5901, %v5902
        %v5904 = vrot.slane %v377, 5
        %v5905 = vrot.slane %v5904, 4
        %v5906 = vrot.slane %v378, 5
        %v5907 = vsel %vm5798, %v5905, %v5906
        %v5908 = vrot.slane %v5906, 4
        %v5909 = vrot.slane %v379, 5
        %v5910 = vsel %vm5798, %v5908, %v5909
        %v5911 = vrot.slane %v380, 5
        %v5912 = vrot.slane %v5911, 4
        %v5913 = vrot.slane %v381, 5
        %v5914 = vsel %vm5798, %v5912, %v5913
        %v5915 = vrot.slane %v5913, 4
        %v5916 = vrot.slane %v382, 5
        %v5917 = vsel %vm5798, %v5915, %v5916
        %v5918 = vrot.slane %v383, 5
        %v5919 = vrot.slane %v5918, 4
        %v5920 = vrot.slane %v384, 5
        %v5921 = vsel %vm5798, %v5919, %v5920
        %v5922 = vrot.slane %v5920, 4
        %v5923 = vrot.slane %v385, 5
        %v5924 = vsel %vm5798, %v5922, %v5923
        %v5961 = vmax.bf16 %v5706, %v5802
        %v5962 = vmax.bf16 %v5707, %v5805
        %v5963 = vmax.bf16 %v5708, %v5809
        %v5964 = vmax.bf16 %v5709, %v5812
        %v5965 = vmax.bf16 %v5710, %v5816
        %v5966 = vmax.bf16 %v5711, %v5819
        %v5967 = vmax.bf16 %v5712, %v5823
        %v5968 = vmax.bf16 %v5713, %v5826
        %v5969 = vmax.bf16 %v5714, %v5830
        %v5970 = vmax.bf16 %v5715, %v5833
        %v5971 = vmax.bf16 %v5716, %v5837
        %v5972 = vmax.bf16 %v5717, %v5840
        %v5973 = vmax.bf16 %v5718, %v5844
        %v5974 = vmax.bf16 %v5719, %v5847
        %v5975 = vmax.bf16 %v5720, %v5851
        %v5976 = vmax.bf16 %v5721, %v5854
        %v5977 = vmax.bf16 %v5722, %v5858
        %v5978 = vmax.bf16 %v5723, %v5861
        %v5979 = vmax.bf16 %v5724, %v5865
        %v5980 = vmax.bf16 %v5725, %v5868
        %v5981 = vmax.bf16 %v5726, %v5872
        %v5982 = vmax.bf16 %v5727, %v5875
        %v5983 = vmax.bf16 %v5728, %v5879
        %v5984 = vmax.bf16 %v5729, %v5882
        %v5985 = vmax.bf16 %v5730, %v5886
        %v5986 = vmax.bf16 %v5731, %v5889
        %v5987 = vmax.bf16 %v5732, %v5893
        %v5988 = vmax.bf16 %v5733, %v5896
        %v5989 = vmax.bf16 %v5734, %v5900
        %v5990 = vmax.bf16 %v5735, %v5903
        %v5991 = vmax.bf16 %v5736, %v5907
        %v5992 = vmax.bf16 %v5737, %v5910
        %v5993 = vmax.bf16 %v5738, %v5914
        %v5994 = vmax.bf16 %v5739, %v5917
        %v5995 = vmax.bf16 %v5740, %v5921
        %v5996 = vmax.bf16 %v5741, %v5924
        %v5997 = vmax.bf16 %v5961, %v5963
        %v5998 = vmax.bf16 %v5962, %v5964
        %v5999 = vmax.bf16 %v5963, %v5965
        %v6000 = vmax.bf16 %v5964, %v5966
        %v6001 = vmax.bf16 %v5965, %v5967
        %v6002 = vmax.bf16 %v5966, %v5968
        %v6003 = vmax.bf16 %v5967, %v5969
        %v6004 = vmax.bf16 %v5968, %v5970
        %v6005 = vmax.bf16 %v5969, %v5971
        %v6006 = vmax.bf16 %v5970, %v5972
        %v6007 = vmax.bf16 %v5971, %v5973
        %v6008 = vmax.bf16 %v5972, %v5974
        %v6009 = vmax.bf16 %v5973, %v5975
        %v6010 = vmax.bf16 %v5974, %v5976
        %v6011 = vmax.bf16 %v5975, %v5977
        %v6012 = vmax.bf16 %v5976, %v5978
        %v6013 = vmax.bf16 %v5977, %v5979
        %v6014 = vmax.bf16 %v5978, %v5980
        %v6015 = vmax.bf16 %v5979, %v5981
        %v6016 = vmax.bf16 %v5980, %v5982
        %v6017 = vmax.bf16 %v5981, %v5983
        %v6018 = vmax.bf16 %v5982, %v5984
        %v6019 = vmax.bf16 %v5983, %v5985
        %v6020 = vmax.bf16 %v5984, %v5986
        %v6021 = vmax.bf16 %v5985, %v5987
        %v6022 = vmax.bf16 %v5986, %v5988
        %v6023 = vmax.bf16 %v5987, %v5989
        %v6024 = vmax.bf16 %v5988, %v5990
        %v6025 = vmax.bf16 %v5989, %v5991
        %v6026 = vmax.bf16 %v5990, %v5992
        %v6027 = vmax.bf16 %v5991, %v5993
        %v6028 = vmax.bf16 %v5992, %v5994
        %v6029 = vmax.bf16 %v5997, %v5965
        %v6030 = vmax.bf16 %v5998, %v5966
        %v6031 = vmax.bf16 %v5999, %v5967
        %v6032 = vmax.bf16 %v6000, %v5968
        %v6033 = vmax.bf16 %v6001, %v5969
        %v6034 = vmax.bf16 %v6002, %v5970
        %v6035 = vmax.bf16 %v6003, %v5971
        %v6036 = vmax.bf16 %v6004, %v5972
        %v6037 = vmax.bf16 %v6005, %v5973
        %v6038 = vmax.bf16 %v6006, %v5974
        %v6039 = vmax.bf16 %v6007, %v5975
        %v6040 = vmax.bf16 %v6008, %v5976
        %v6041 = vmax.bf16 %v6009, %v5977
        %v6042 = vmax.bf16 %v6010, %v5978
        %v6043 = vmax.bf16 %v6011, %v5979
        %v6044 = vmax.bf16 %v6012, %v5980
        %v6045 = vmax.bf16 %v6013, %v5981
        %v6046 = vmax.bf16 %v6014, %v5982
        %v6047 = vmax.bf16 %v6015, %v5983
        %v6048 = vmax.bf16 %v6016, %v5984
        %v6049 = vmax.bf16 %v6017, %v5985
        %v6050 = vmax.bf16 %v6018, %v5986
        %v6051 = vmax.bf16 %v6019, %v5987
        %v6052 = vmax.bf16 %v6020, %v5988
        %v6053 = vmax.bf16 %v6021, %v5989
        %v6054 = vmax.bf16 %v6022, %v5990
        %v6055 = vmax.bf16 %v6023, %v5991
        %v6056 = vmax.bf16 %v6024, %v5992
        %v6057 = vmax.bf16 %v6025, %v5993
        %v6058 = vmax.bf16 %v6026, %v5994
        %v6059 = vmax.bf16 %v6027, %v5995
        %v6060 = vmax.bf16 %v6028, %v5996
        %v6061 = vld [vmem:[%s7] sm:$0x3]
        %v6062 = vld [vmem:[%s8] sm:$0x1]
        %v6064 = vlaneseq
        %v6065 = vshrl.u32 %v6064, 7
        %v6066 = vsub.s32 0, %v6065
        %v6067 = vrot.slane %v6062, %v6066
        %v6101 = vunpack.c.l.b16 %v6029
        %v6102 = vunpack.c.l.b16 %v6030
        %v6103 = vunpack.c.l.b16 %v6031
        %v6104 = vunpack.c.l.b16 %v6032
        %v6105 = vunpack.c.l.b16 %v6033
        %v6106 = vunpack.c.l.b16 %v6034
        %v6107 = vunpack.c.l.b16 %v6035
        %v6108 = vunpack.c.l.b16 %v6036
        %v6109 = vunpack.c.l.b16 %v6037
        %v6110 = vunpack.c.l.b16 %v6038
        %v6111 = vunpack.c.l.b16 %v6039
        %v6112 = vunpack.c.l.b16 %v6040
        %v6113 = vunpack.c.l.b16 %v6041
        %v6114 = vunpack.c.l.b16 %v6042
        %v6115 = vunpack.c.l.b16 %v6043
        %v6116 = vunpack.c.l.b16 %v6044
        %v6117 = vunpack.c.l.b16 %v6045
        %v6118 = vunpack.c.l.b16 %v6046
        %v6119 = vunpack.c.l.b16 %v6047
        %v6120 = vunpack.c.l.b16 %v6048
        %v6121 = vunpack.c.l.b16 %v6049
        %v6122 = vunpack.c.l.b16 %v6050
        %v6123 = vunpack.c.l.b16 %v6051
        %v6124 = vunpack.c.l.b16 %v6052
        %v6125 = vunpack.c.l.b16 %v6053
        %v6126 = vunpack.c.l.b16 %v6054
        %v6127 = vunpack.c.l.b16 %v6055
        %v6128 = vunpack.c.l.b16 %v6056
        %v6129 = vunpack.c.l.b16 %v6057
        %v6130 = vunpack.c.l.b16 %v6058
        %v6131 = vunpack.c.l.b16 %v6059
        %v6132 = vunpack.c.l.b16 %v6060
        %v6133 = vpack.c.b16 %v6102, %v6101
        %v6134 = vpack.c.b16 %v6104, %v6103
        %v6135 = vpack.c.b16 %v6106, %v6105
        %v6136 = vpack.c.b16 %v6108, %v6107
        %v6137 = vpack.c.b16 %v6110, %v6109
        %v6138 = vpack.c.b16 %v6112, %v6111
        %v6139 = vpack.c.b16 %v6114, %v6113
        %v6140 = vpack.c.b16 %v6116, %v6115
        %v6141 = vpack.c.b16 %v6118, %v6117
        %v6142 = vpack.c.b16 %v6120, %v6119
        %v6143 = vpack.c.b16 %v6122, %v6121
        %v6144 = vpack.c.b16 %v6124, %v6123
        %v6145 = vpack.c.b16 %v6126, %v6125
        %v6146 = vpack.c.b16 %v6128, %v6127
        %v6147 = vpack.c.b16 %v6130, %v6129
        %v6148 = vpack.c.b16 %v6132, %v6131
        %v6150 = vsel %vm829, %v6133, 0
        %v6153 = vsel %vm829, %v6134, 0
        %v6156 = vsel %vm829, %v6135, 0
        %v6159 = vsel %vm829, %v6136, 0
        %v6162 = vsel %vm829, %v6137, 0
        %v6165 = vsel %vm829, %v6138, 0
        %v6168 = vsel %vm829, %v6139, 0
        %v6171 = vsel %vm829, %v6140, 0
        %v6174 = vsel %vm829, %v6141, 0
        %v6177 = vsel %vm829, %v6142, 0
        %v6180 = vsel %vm829, %v6143, 0
        %v6183 = vsel %vm829, %v6144, 0
        %v6186 = vsel %vm829, %v6145, 0
        %v6189 = vsel %vm829, %v6146, 0
        %v6192 = vsel %vm829, %v6147, 0
        %v6195 = vsel %vm829, %v6148, 0
        %v6198 = vsel %vm878, %v6061, 0
        %6200 = vmatprep.subr.bf16.mxu0 0
        %6201 = vmatpush1.bf16.msra.mxu0 %v6198
        %6202 = vmatprep.subr.bf16.mxu0 0
        %6203 = vmatpush1.bf16.msra.mxu0 0
        %6204 = vmatprep.subr.bf16.mxu0 0
        %6205 = vmatpush1.bf16.msra.mxu0 0
        %6206 = vmatprep.subr.bf16.mxu0 0
        %6207 = vmatpush1.bf16.msra.mxu0 0
        %6208 = vmatprep.subr.bf16.mxu0 0
        %6209 = vmatpush1.bf16.msra.mxu0 0
        %6210 = vmatprep.subr.bf16.mxu0 0
        %6211 = vmatpush1.bf16.msra.mxu0 0
        %6212 = vmatprep.subr.bf16.mxu0 0
        %6213 = vmatpush1.bf16.msra.mxu0 0
        %6214 = vmatprep.subr.bf16.mxu0 0
        %6215 = vmatpush1.bf16.msra.mxu0 0
        %6216 = vmatprep.subr.bf16.mxu0 0
        %6217 = vmatpush1.bf16.msra.mxu0 0
        %6218 = vmatprep.subr.bf16.mxu0 0
        %6219 = vmatpush1.bf16.msra.mxu0 0
        %6220 = vmatprep.subr.bf16.mxu0 0
        %6221 = vmatpush1.bf16.msra.mxu0 0
        %6222 = vmatprep.subr.bf16.mxu0 0
        %6223 = vmatpush1.bf16.msra.mxu0 0
        %6224 = vmatprep.subr.bf16.mxu0 0
        %6225 = vmatpush1.bf16.msra.mxu0 0
        %6226 = vmatprep.subr.bf16.mxu0 0
        %6227 = vmatpush1.bf16.msra.mxu0 0
        %6228 = vmatprep.subr.bf16.mxu0 0
        %6229 = vmatpush1.bf16.msra.mxu0 0
        %6230 = vmatprep.subr.bf16.mxu0 0
        %6231 = vmatpush1.bf16.msra.mxu0 0
        %6232 = vmatprep.mubr.bf16.mxu0 0
        %6233 = vmatmul.mubr.bf16.gmra.mrb[0].mxu0 %v6150
        %v6234 = vpop.f32.mrb[0].mxu0
        %v6235 = vadd.f32 %v6067, %v6234
        %v6236 = vpop.f32.mrb[0].mxu0
        %v6237 = vpop.f32.mrb[0].mxu0
        %v6238 = vadd.f32 %v6067, %v6237
        %v6239 = vpop.f32.mrb[0].mxu0
        %6240 = vmatprep.mubr.bf16.mxu0 0
        %6241 = vmatmul.mubr.bf16.gmra.mrb[0].mxu0 %v6153
        %v6242 = vpop.f32.mrb[0].mxu0
        %v6243 = vadd.f32 %v6067, %v6242
        %v6244 = vpop.f32.mrb[0].mxu0
        %v6245 = vpop.f32.mrb[0].mxu0
        %v6246 = vadd.f32 %v6067, %v6245
        %v6247 = vpop.f32.mrb[0].mxu0
        %6248 = vmatprep.mubr.bf16.mxu0 0
        %6249 = vmatmul.mubr.bf16.gmra.mrb[0].mxu0 %v6156
        %v6250 = vpop.f32.mrb[0].mxu0
        %v6251 = vadd.f32 %v6067, %v6250
        %v6252 = vpop.f32.mrb[0].mxu0
        %v6253 = vpop.f32.mrb[0].mxu0
        %v6254 = vadd.f32 %v6067, %v6253
        %v6255 = vpop.f32.mrb[0].mxu0
        %6256 = vmatprep.mubr.bf16.mxu0 0
        %6257 = vmatmul.mubr.bf16.gmra.mrb[0].mxu0 %v6159
        %v6258 = vpop.f32.mrb[0].mxu0
        %v6259 = vadd.f32 %v6067, %v6258
        %v6260 = vpop.f32.mrb[0].mxu0
        %v6261 = vpop.f32.mrb[0].mxu0
        %v6262 = vadd.f32 %v6067, %v6261
        %v6263 = vpop.f32.mrb[0].mxu0
        %6264 = vmatprep.mubr.bf16.mxu0 0
        %6265 = vmatmul.mubr.bf16.gmra.mrb[0].mxu0 %v6162
        %v6266 = vpop.f32.mrb[0].mxu0
        %v6267 = vadd.f32 %v6067, %v6266
        %v6268 = vpop.f32.mrb[0].mxu0
        %v6269 = vpop.f32.mrb[0].mxu0
        %v6270 = vadd.f32 %v6067, %v6269
        %v6271 = vpop.f32.mrb[0].mxu0
        %6272 = vmatprep.mubr.bf16.mxu0 0
        %6273 = vmatmul.mubr.bf16.gmra.mrb[0].mxu0 %v6165
        %v6274 = vpop.f32.mrb[0].mxu0
        %v6275 = vadd.f32 %v6067, %v6274
        %v6276 = vpop.f32.mrb[0].mxu0
        %v6277 = vpop.f32.mrb[0].mxu0
        %v6278 = vadd.f32 %v6067, %v6277
        %v6279 = vpop.f32.mrb[0].mxu0
        %6280 = vmatprep.mubr.bf16.mxu0 0
        %6281 = vmatmul.mubr.bf16.gmra.mrb[0].mxu0 %v6168
        %v6282 = vpop.f32.mrb[0].mxu0
        %v6283 = vadd.f32 %v6067, %v6282
        %v6284 = vpop.f32.mrb[0].mxu0
        %v6285 = vpop.f32.mrb[0].mxu0
        %v6286 = vadd.f32 %v6067, %v6285
        %v6287 = vpop.f32.mrb[0].mxu0
        %6288 = vmatprep.mubr.bf16.mxu0 0
        %6289 = vmatmul.mubr.bf16.gmra.mrb[0].mxu0 %v6171
        %v6290 = vpop.f32.mrb[0].mxu0
        %v6291 = vadd.f32 %v6067, %v6290
        %v6292 = vpop.f32.mrb[0].mxu0
        %v6293 = vpop.f32.mrb[0].mxu0
        %v6294 = vadd.f32 %v6067, %v6293
        %v6295 = vpop.f32.mrb[0].mxu0
        %6296 = vmatprep.mubr.bf16.mxu0 0
        %6297 = vmatmul.mubr.bf16.gmra.mrb[0].mxu0 %v6174
        %v6298 = vpop.f32.mrb[0].mxu0
        %v6299 = vadd.f32 %v6067, %v6298
        %v6300 = vpop.f32.mrb[0].mxu0
        %v6301 = vpop.f32.mrb[0].mxu0
        %v6302 = vadd.f32 %v6067, %v6301
        %v6303 = vpop.f32.mrb[0].mxu0
        %6304 = vmatprep.mubr.bf16.mxu0 0
        %6305 = vmatmul.mubr.bf16.gmra.mrb[0].mxu0 %v6177
        %v6306 = vpop.f32.mrb[0].mxu0
        %v6307 = vadd.f32 %v6067, %v6306
        %v6308 = vpop.f32.mrb[0].mxu0
        %v6309 = vpop.f32.mrb[0].mxu0
        %v6310 = vadd.f32 %v6067, %v6309
        %v6311 = vpop.f32.mrb[0].mxu0
        %6312 = vmatprep.mubr.bf16.mxu0 0
        %6313 = vmatmul.mubr.bf16.gmra.mrb[0].mxu0 %v6180
        %v6314 = vpop.f32.mrb[0].mxu0
        %v6315 = vadd.f32 %v6067, %v6314
        %v6316 = vpop.f32.mrb[0].mxu0
        %v6317 = vpop.f32.mrb[0].mxu0
        %v6318 = vadd.f32 %v6067, %v6317
        %v6319 = vpop.f32.mrb[0].mxu0
        %6320 = vmatprep.mubr.bf16.mxu0 0
        %6321 = vmatmul.mubr.bf16.gmra.mrb[0].mxu0 %v6183
        %v6322 = vpop.f32.mrb[0].mxu0
        %v6323 = vadd.f32 %v6067, %v6322
        %v6324 = vpop.f32.mrb[0].mxu0
        %v6325 = vpop.f32.mrb[0].mxu0
        %v6326 = vadd.f32 %v6067, %v6325
        %v6327 = vpop.f32.mrb[0].mxu0
        %6328 = vmatprep.mubr.bf16.mxu0 0
        %6329 = vmatmul.mubr.bf16.gmra.mrb[0].mxu0 %v6186
        %v6330 = vpop.f32.mrb[0].mxu0
        %v6331 = vadd.f32 %v6067, %v6330
        %v6332 = vpop.f32.mrb[0].mxu0
        %v6333 = vpop.f32.mrb[0].mxu0
        %v6334 = vadd.f32 %v6067, %v6333
        %v6335 = vpop.f32.mrb[0].mxu0
        %6336 = vmatprep.mubr.bf16.mxu0 0
        %6337 = vmatmul.mubr.bf16.gmra.mrb[0].mxu0 %v6189
        %v6338 = vpop.f32.mrb[0].mxu0
        %v6339 = vadd.f32 %v6067, %v6338
        %v6340 = vpop.f32.mrb[0].mxu0
        %v6341 = vpop.f32.mrb[0].mxu0
        %v6342 = vadd.f32 %v6067, %v6341
        %v6343 = vpop.f32.mrb[0].mxu0
        %6344 = vmatprep.mubr.bf16.mxu0 0
        %6345 = vmatmul.mubr.bf16.gmra.mrb[0].mxu0 %v6192
        %v6346 = vpop.f32.mrb[0].mxu0
        %v6347 = vadd.f32 %v6067, %v6346
        %v6348 = vpop.f32.mrb[0].mxu0
        %v6349 = vpop.f32.mrb[0].mxu0
        %v6350 = vadd.f32 %v6067, %v6349
        %v6351 = vpop.f32.mrb[0].mxu0
        %6352 = vmatprep.mubr.bf16.mxu0 0
        %6353 = vmatmul.mubr.bf16.gmra.mrb[0].mxu0 %v6195
        %v6354 = vpop.f32.mrb[0].mxu0
        %v6355 = vadd.f32 %v6067, %v6354
        %v6356 = vpop.f32.mrb[0].mxu0
        %v6357 = vpop.f32.mrb[0].mxu0
        %v6358 = vadd.f32 %v6067, %v6357
        %v6359 = vpop.f32.mrb[0].mxu0
        %6360 = vdwg.mxu0
        %v6361 = vmax.f32 %v6235, 0.0
        %v6362 = vmax.f32 %v6238, 0.0
        %v6363 = vmax.f32 %v6243, 0.0
        %v6364 = vmax.f32 %v6246, 0.0
        %v6365 = vmax.f32 %v6251, 0.0
        %v6366 = vmax.f32 %v6254, 0.0
        %v6367 = vmax.f32 %v6259, 0.0
        %v6368 = vmax.f32 %v6262, 0.0
        %v6369 = vmax.f32 %v6267, 0.0
        %v6370 = vmax.f32 %v6270, 0.0
        %v6371 = vmax.f32 %v6275, 0.0
        %v6372 = vmax.f32 %v6278, 0.0
        %v6373 = vmax.f32 %v6283, 0.0
        %v6374 = vmax.f32 %v6286, 0.0
        %v6375 = vmax.f32 %v6291, 0.0
        %v6376 = vmax.f32 %v6294, 0.0
        %v6377 = vmax.f32 %v6299, 0.0
        %v6378 = vmax.f32 %v6302, 0.0
        %v6379 = vmax.f32 %v6307, 0.0
        %v6380 = vmax.f32 %v6310, 0.0
        %v6381 = vmax.f32 %v6315, 0.0
        %v6382 = vmax.f32 %v6318, 0.0
        %v6383 = vmax.f32 %v6323, 0.0
        %v6384 = vmax.f32 %v6326, 0.0
        %v6385 = vmax.f32 %v6331, 0.0
        %v6386 = vmax.f32 %v6334, 0.0
        %v6387 = vmax.f32 %v6339, 0.0
        %v6388 = vmax.f32 %v6342, 0.0
        %v6389 = vmax.f32 %v6347, 0.0
        %v6390 = vmax.f32 %v6350, 0.0
        %v6391 = vmax.f32 %v6355, 0.0
        %v6392 = vmax.f32 %v6358, 0.0
        %v6393 = vpack.c.bf16 %v3139, %v3138
        %v6394 = vpack.c.bf16 %v3141, %v3140
        %v6395 = vpack.c.bf16 %v3143, %v3142
        %v6396 = vpack.c.bf16 %v3145, %v3144
        %v6397 = vpack.c.bf16 %v3147, %v3146
        %v6398 = vpack.c.bf16 %v3149, %v3148
        %v6399 = vpack.c.bf16 %v3151, %v3150
        %v6400 = vpack.c.bf16 %v3153, %v3152
        %v6401 = vpack.c.bf16 %v3155, %v3154
        %v6402 = vpack.c.bf16 %v3157, %v3156
        %v6403 = vpack.c.bf16 %v3159, %v3158
        %v6404 = vpack.c.bf16 %v3161, %v3160
        %v6405 = vpack.c.bf16 %v3163, %v3162
        %v6406 = vpack.c.bf16 %v3165, %v3164
        %v6407 = vpack.c.bf16 %v3167, %v3166
        %v6408 = vpack.c.bf16 %v3169, %v3168
        %v6409 = vpack.c.bf16 %v5591, %v5590
        %v6410 = vpack.c.bf16 %v5593, %v5592
        %v6411 = vpack.c.bf16 %v5595, %v5594
        %v6412 = vpack.c.bf16 %v5597, %v5596
        %v6413 = vpack.c.bf16 %v5599, %v5598
        %v6414 = vpack.c.bf16 %v5601, %v5600
        %v6415 = vpack.c.bf16 %v5603, %v5602
        %v6416 = vpack.c.bf16 %v5605, %v5604
        %v6417 = vpack.c.bf16 %v5607, %v5606
        %v6418 = vpack.c.bf16 %v5609, %v5608
        %v6419 = vpack.c.bf16 %v5611, %v5610
        %v6420 = vpack.c.bf16 %v5613, %v5612
        %v6421 = vpack.c.bf16 %v5615, %v5614
        %v6422 = vpack.c.bf16 %v5617, %v5616
        %v6423 = vpack.c.bf16 %v5619, %v5618
        %v6424 = vpack.c.bf16 %v5621, %v5620
        %v6425 = vpack.c.bf16 %v6362, %v6361
        %v6426 = vpack.c.bf16 %v6364, %v6363
        %v6427 = vpack.c.bf16 %v6366, %v6365
        %v6428 = vpack.c.bf16 %v6368, %v6367
        %v6429 = vpack.c.bf16 %v6370, %v6369
        %v6430 = vpack.c.bf16 %v6372, %v6371
        %v6431 = vpack.c.bf16 %v6374, %v6373
        %v6432 = vpack.c.bf16 %v6376, %v6375
        %v6433 = vpack.c.bf16 %v6378, %v6377
        %v6434 = vpack.c.bf16 %v6380, %v6379
        %v6435 = vpack.c.bf16 %v6382, %v6381
        %v6436 = vpack.c.bf16 %v6384, %v6383
        %v6437 = vpack.c.bf16 %v6386, %v6385
        %v6438 = vpack.c.bf16 %v6388, %v6387
        %v6439 = vpack.c.bf16 %v6390, %v6389
        %v6440 = vpack.c.bf16 %v6392, %v6391
        %6457 = vrot.lane.b32.xlu0 %v6393, 8
        %v6458 = vpop.permute.xlu0 %6457
        %6459 = vrot.lane.b32.xlu0 %v6394, 8
        %v6460 = vpop.permute.xlu0 %6459
        %6461 = vrot.lane.b32.xlu0 %v6395, 8
        %v6462 = vpop.permute.xlu0 %6461
        %6463 = vrot.lane.b32.xlu0 %v6396, 8
        %v6464 = vpop.permute.xlu0 %6463
        %6465 = vrot.lane.b32.xlu0 %v6397, 8
        %v6466 = vpop.permute.xlu0 %6465
        %6467 = vrot.lane.b32.xlu0 %v6398, 8
        %v6468 = vpop.permute.xlu0 %6467
        %6469 = vrot.lane.b32.xlu0 %v6399, 8
        %v6470 = vpop.permute.xlu0 %6469
        %6471 = vrot.lane.b32.xlu0 %v6400, 8
        %v6472 = vpop.permute.xlu0 %6471
        %6473 = vrot.lane.b32.xlu0 %v6401, 8
        %v6474 = vpop.permute.xlu0 %6473
        %6475 = vrot.lane.b32.xlu0 %v6402, 8
        %v6476 = vpop.permute.xlu0 %6475
        %6477 = vrot.lane.b32.xlu0 %v6403, 8
        %v6478 = vpop.permute.xlu0 %6477
        %6479 = vrot.lane.b32.xlu0 %v6404, 8
        %v6480 = vpop.permute.xlu0 %6479
        %6481 = vrot.lane.b32.xlu0 %v6405, 8
        %v6482 = vpop.permute.xlu0 %6481
        %6483 = vrot.lane.b32.xlu0 %v6406, 8
        %v6484 = vpop.permute.xlu0 %6483
        %6485 = vrot.lane.b32.xlu0 %v6407, 8
        %v6486 = vpop.permute.xlu0 %6485
        %6487 = vrot.lane.b32.xlu0 %v6408, 8
        %v6488 = vpop.permute.xlu0 %6487
        %6505 = vrot.lane.b32.xlu0 %v6409, 24
        %v6506 = vpop.permute.xlu0 %6505
        %6507 = vrot.lane.b32.xlu0 %v6410, 24
        %v6508 = vpop.permute.xlu0 %6507
        %6509 = vrot.lane.b32.xlu0 %v6411, 24
        %v6510 = vpop.permute.xlu0 %6509
        %6511 = vrot.lane.b32.xlu0 %v6412, 24
        %v6512 = vpop.permute.xlu0 %6511
        %6513 = vrot.lane.b32.xlu0 %v6413, 24
        %v6514 = vpop.permute.xlu0 %6513
        %6515 = vrot.lane.b32.xlu0 %v6414, 24
        %v6516 = vpop.permute.xlu0 %6515
        %6517 = vrot.lane.b32.xlu0 %v6415, 24
        %v6518 = vpop.permute.xlu0 %6517
        %6519 = vrot.lane.b32.xlu0 %v6416, 24
        %v6520 = vpop.permute.xlu0 %6519
        %6521 = vrot.lane.b32.xlu0 %v6417, 24
        %v6522 = vpop.permute.xlu0 %6521
        %6523 = vrot.lane.b32.xlu0 %v6418, 24
        %v6524 = vpop.permute.xlu0 %6523
        %6525 = vrot.lane.b32.xlu0 %v6419, 24
        %v6526 = vpop.permute.xlu0 %6525
        %6527 = vrot.lane.b32.xlu0 %v6420, 24
        %v6528 = vpop.permute.xlu0 %6527
        %6529 = vrot.lane.b32.xlu0 %v6421, 24
        %v6530 = vpop.permute.xlu0 %6529
        %6531 = vrot.lane.b32.xlu0 %v6422, 24
        %v6532 = vpop.permute.xlu0 %6531
        %6533 = vrot.lane.b32.xlu0 %v6423, 24
        %v6534 = vpop.permute.xlu0 %6533
        %6535 = vrot.lane.b32.xlu0 %v6424, 24
        %v6536 = vpop.permute.xlu0 %6535
        %6553 = vrot.lane.b32.xlu0 %v6425, 32
        %v6554 = vpop.permute.xlu0 %6553
        %6555 = vrot.lane.b32.xlu0 %v6426, 32
        %v6556 = vpop.permute.xlu0 %6555
        %6557 = vrot.lane.b32.xlu0 %v6427, 32
        %v6558 = vpop.permute.xlu0 %6557
        %6559 = vrot.lane.b32.xlu0 %v6428, 32
        %v6560 = vpop.permute.xlu0 %6559
        %6561 = vrot.lane.b32.xlu0 %v6429, 32
        %v6562 = vpop.permute.xlu0 %6561
        %6563 = vrot.lane.b32.xlu0 %v6430, 32
        %v6564 = vpop.permute.xlu0 %6563
        %6565 = vrot.lane.b32.xlu0 %v6431, 32
        %v6566 = vpop.permute.xlu0 %6565
        %6567 = vrot.lane.b32.xlu0 %v6432, 32
        %v6568 = vpop.permute.xlu0 %6567
        %6569 = vrot.lane.b32.xlu0 %v6433, 32
        %v6570 = vpop.permute.xlu0 %6569
        %6571 = vrot.lane.b32.xlu0 %v6434, 32
        %v6572 = vpop.permute.xlu0 %6571
        %6573 = vrot.lane.b32.xlu0 %v6435, 32
        %v6574 = vpop.permute.xlu0 %6573
        %6575 = vrot.lane.b32.xlu0 %v6436, 32
        %v6576 = vpop.permute.xlu0 %6575
        %6577 = vrot.lane.b32.xlu0 %v6437, 32
        %v6578 = vpop.permute.xlu0 %6577
        %6579 = vrot.lane.b32.xlu0 %v6438, 32
        %v6580 = vpop.permute.xlu0 %6579
        %6581 = vrot.lane.b32.xlu0 %v6439, 32
        %v6582 = vpop.permute.xlu0 %6581
        %6583 = vrot.lane.b32.xlu0 %v6440, 32
        %v6584 = vpop.permute.xlu0 %6583
        %v6587 = vsel %vm2371, %v1254, %v6458
        %v6590 = vsel %vm2371, %v1255, %v6460
        %v6593 = vsel %vm2371, %v1256, %v6462
        %v6596 = vsel %vm2371, %v1257, %v6464
        %v6599 = vsel %vm2371, %v1258, %v6466
        %v6602 = vsel %vm2371, %v1259, %v6468
        %v6605 = vsel %vm2371, %v1260, %v6470
        %v6608 = vsel %vm2371, %v1261, %v6472
        %v6611 = vsel %vm2371, %v1262, %v6474
        %v6614 = vsel %vm2371, %v1263, %v6476
        %v6617 = vsel %vm2371, %v1264, %v6478
        %v6620 = vsel %vm2371, %v1265, %v6480
        %v6623 = vsel %vm2371, %v1266, %v6482
        %v6626 = vsel %vm2371, %v1267, %v6484
        %v6629 = vsel %vm2371, %v1268, %v6486
        %v6632 = vsel %vm2371, %v1269, %v6488
        %v6634 = vsel %vm2484, %v6587, %v6506
        %v6636 = vsel %vm2484, %v6590, %v6508
        %v6638 = vsel %vm2484, %v6593, %v6510
        %v6640 = vsel %vm2484, %v6596, %v6512
        %v6642 = vsel %vm2484, %v6599, %v6514
        %v6644 = vsel %vm2484, %v6602, %v6516
        %v6646 = vsel %vm2484, %v6605, %v6518
        %v6648 = vsel %vm2484, %v6608, %v6520
        %v6650 = vsel %vm2484, %v6611, %v6522
        %v6652 = vsel %vm2484, %v6614, %v6524
        %v6654 = vsel %vm2484, %v6617, %v6526
        %v6656 = vsel %vm2484, %v6620, %v6528
        %v6658 = vsel %vm2484, %v6623, %v6530
        %v6660 = vsel %vm2484, %v6626, %v6532
        %v6662 = vsel %vm2484, %v6629, %v6534
        %v6664 = vsel %vm2484, %v6632, %v6536
        %vm6665 = vcmask 261120
        %v6667 = vsel %vm6665, %v6634, %v6554
        %v6669 = vsel %vm6665, %v6636, %v6556
        %v6671 = vsel %vm6665, %v6638, %v6558
        %v6673 = vsel %vm6665, %v6640, %v6560
        %v6675 = vsel %vm6665, %v6642, %v6562
        %v6677 = vsel %vm6665, %v6644, %v6564
        %v6679 = vsel %vm6665, %v6646, %v6566
        %v6681 = vsel %vm6665, %v6648, %v6568
        %v6683 = vsel %vm6665, %v6650, %v6570
        %v6685 = vsel %vm6665, %v6652, %v6572
        %v6687 = vsel %vm6665, %v6654, %v6574
        %v6689 = vsel %vm6665, %v6656, %v6576
        %v6691 = vsel %vm6665, %v6658, %v6578
        %v6693 = vsel %vm6665, %v6660, %v6580
        %v6695 = vsel %vm6665, %v6662, %v6582
        %v6697 = vsel %vm6665, %v6664, %v6584
        %vm6698 = vcmask 326656
        %v6700 = vsel %vm6698, %v6667, 0
        %v6701 = vsel %vm6698, %v6669, 0
        %v6702 = vsel %vm6698, %v6671, 0
        %v6703 = vsel %vm6698, %v6673, 0
        %v6704 = vsel %vm6698, %v6675, 0
        %v6705 = vsel %vm6698, %v6677, 0
        %v6706 = vsel %vm6698, %v6679, 0
        %v6707 = vsel %vm6698, %v6681, 0
        %v6708 = vsel %vm6698, %v6683, 0
        %v6709 = vsel %vm6698, %v6685, 0
        %v6710 = vsel %vm6698, %v6687, 0
        %v6711 = vsel %vm6698, %v6689, 0
        %v6712 = vsel %vm6698, %v6691, 0
        %v6713 = vsel %vm6698, %v6693, 0
        %v6714 = vsel %vm6698, %v6695, 0
        %v6715 = vsel %vm6698, %v6697, 0
        %v6732 = vunpack.c.l.b16 %v6700
        %v6733 = vunpack.c.h.b16 %v6700
        %v6734 = vunpack.c.l.b16 %v6701
        %v6735 = vunpack.c.h.b16 %v6701
        %v6736 = vunpack.c.l.b16 %v6702
        %v6737 = vunpack.c.h.b16 %v6702
        %v6738 = vunpack.c.l.b16 %v6703
        %v6739 = vunpack.c.h.b16 %v6703
        %v6740 = vunpack.c.l.b16 %v6704
        %v6741 = vunpack.c.h.b16 %v6704
        %v6742 = vunpack.c.l.b16 %v6705
        %v6743 = vunpack.c.h.b16 %v6705
        %v6744 = vunpack.c.l.b16 %v6706
        %v6745 = vunpack.c.h.b16 %v6706
        %v6746 = vunpack.c.l.b16 %v6707
        %v6747 = vunpack.c.h.b16 %v6707
        %v6748 = vunpack.c.l.b16 %v6708
        %v6749 = vunpack.c.h.b16 %v6708
        %v6750 = vunpack.c.l.b16 %v6709
        %v6751 = vunpack.c.h.b16 %v6709
        %v6752 = vunpack.c.l.b16 %v6710
        %v6753 = vunpack.c.h.b16 %v6710
        %v6754 = vunpack.c.l.b16 %v6711
        %v6755 = vunpack.c.h.b16 %v6711
        %v6756 = vunpack.c.l.b16 %v6712
        %v6757 = vunpack.c.h.b16 %v6712
        %v6758 = vunpack.c.l.b16 %v6713
        %v6759 = vunpack.c.h.b16 %v6713
        %v6760 = vunpack.c.l.b16 %v6714
        %v6761 = vunpack.c.h.b16 %v6714
        %v6762 = vunpack.c.l.b16 %v6715
        %v6763 = vunpack.c.h.b16 %v6715
        %v6764 = vpack.c.b16 %v6732, %v6732
        %v6765 = vpack.c.b16 %v6733, %v6733
        %v6766 = vpack.c.b16 %v6734, %v6734
        %v6767 = vpack.c.b16 %v6735, %v6735
        %v6768 = vpack.c.b16 %v6736, %v6736
        %v6769 = vpack.c.b16 %v6737, %v6737
        %v6770 = vpack.c.b16 %v6738, %v6738
        %v6771 = vpack.c.b16 %v6739, %v6739
        %v6772 = vpack.c.b16 %v6740, %v6740
        %v6773 = vpack.c.b16 %v6741, %v6741
        %v6774 = vpack.c.b16 %v6742, %v6742
        %v6775 = vpack.c.b16 %v6743, %v6743
        %v6776 = vpack.c.b16 %v6744, %v6744
        %v6777 = vpack.c.b16 %v6745, %v6745
        %v6778 = vpack.c.b16 %v6746, %v6746
        %v6779 = vpack.c.b16 %v6747, %v6747
        %v6780 = vpack.c.b16 %v6748, %v6748
        %v6781 = vpack.c.b16 %v6749, %v6749
        %v6782 = vpack.c.b16 %v6750, %v6750
        %v6783 = vpack.c.b16 %v6751, %v6751
        %v6784 = vpack.c.b16 %v6752, %v6752
        %v6785 = vpack.c.b16 %v6753, %v6753
        %v6786 = vpack.c.b16 %v6754, %v6754
        %v6787 = vpack.c.b16 %v6755, %v6755
        %v6788 = vpack.c.b16 %v6756, %v6756
        %v6789 = vpack.c.b16 %v6757, %v6757
        %v6790 = vpack.c.b16 %v6758, %v6758
        %v6791 = vpack.c.b16 %v6759, %v6759
        %v6792 = vpack.c.b16 %v6760, %v6760
        %v6793 = vpack.c.b16 %v6761, %v6761
        %v6794 = vpack.c.b16 %v6762, %v6762
        %v6795 = vpack.c.b16 %v6763, %v6763
        %6828 = vst [vmem:[%s325] sm:$0xf] %v6764
        %6829 = vst [vmem:[%s325 + $0x4] sm:$0xf] %v6765
        %6830 = vst [vmem:[%s325 + $0x8] sm:$0xf] %v6766
        %6831 = vst [vmem:[%s325 + $0xc] sm:$0xf] %v6767
        %6832 = vst [vmem:[%s325 + $0x10] sm:$0xf] %v6768
        %6833 = vst [vmem:[%s325 + $0x14] sm:$0xf] %v6769
        %6834 = vst [vmem:[%s325 + $0x18] sm:$0xf] %v6770
        %6835 = vst [vmem:[%s325 + $0x1c] sm:$0xf] %v6771
        %6836 = vst [vmem:[%s325 + $0x20] sm:$0xf] %v6772
        %6837 = vst [vmem:[%s325 + $0x24] sm:$0xf] %v6773
        %6838 = vst [vmem:[%s325 + $0x28] sm:$0xf] %v6774
        %6839 = vst [vmem:[%s325 + $0x2c] sm:$0xf] %v6775
        %6840 = vst [vmem:[%s325 + $0x30] sm:$0xf] %v6776
        %6841 = vst [vmem:[%s325 + $0x34] sm:$0xf] %v6777
        %6842 = vst [vmem:[%s325 + $0x38] sm:$0xf] %v6778
        %6843 = vst [vmem:[%s325 + $0x3c] sm:$0xf] %v6779
        %6844 = vst [vmem:[%s325 + $0x40] sm:$0xf] %v6780
        %6845 = vst [vmem:[%s325 + $0x44] sm:$0xf] %v6781
        %6846 = vst [vmem:[%s325 + $0x48] sm:$0xf] %v6782
        %6847 = vst [vmem:[%s325 + $0x4c] sm:$0xf] %v6783
        %6848 = vst [vmem:[%s325 + $0x50] sm:$0xf] %v6784
        %6849 = vst [vmem:[%s325 + $0x54] sm:$0xf] %v6785
        %6850 = vst [vmem:[%s325 + $0x58] sm:$0xf] %v6786
        %6851 = vst [vmem:[%s325 + $0x5c] sm:$0xf] %v6787
        %6852 = vst [vmem:[%s325 + $0x60] sm:$0xf] %v6788
        %6853 = vst [vmem:[%s325 + $0x64] sm:$0xf] %v6789
        %6854 = vst [vmem:[%s325 + $0x68] sm:$0xf] %v6790
        %6855 = vst [vmem:[%s325 + $0x6c] sm:$0xf] %v6791
        %6856 = vst [vmem:[%s325 + $0x70] sm:$0xf] %v6792
        %6857 = vst [vmem:[%s325 + $0x74] sm:$0xf] %v6793
        %6858 = vst [vmem:[%s325 + $0x78] sm:$0xf] %v6794
        %6859 = vst [vmem:[%s325 + $0x7c] sm:$0xf] %v6795
        %s6860 = sand.u32 %s225, 1
        %s6861 = scalar_lea.sflag [#allocation5], %s6860
        %s6862 = sand.u32 %s225, 1
        %s6863 = smul.addr %s6862, 128
        %s6864 = scalar_lea.vmem [#allocation4], %s6863
        // Predicated region
        $region57: #{tpu_custom_call.1} parent=55 // pred_check
          %p6865 = pneg %p235
        $region58: #{tpu_custom_call.1} parent=55 // pred_check_branch
          %6867 = sbr.rel (%p6865) target = $region60
        $region59: #{tpu_custom_call.1} parent=55 // pred_region
          %s6869 = ssub.s32 2048, 2048
          %6870 = vsyncadd %s6861, %s6869
          %s6871 = smul.addr %s23, 32
          %s6872 = smul.addr %s6871, 64
          %s6873 = scalar_lea.hbm %s9, %s6872
          %s6874 = sshll.u32 %s6864, 4
          %s6875 = int_to_ptr.vmem [resolvable:$true] %s6874
          %6880 = dma.vmem_to_hbm [thread:$0]  %s6875, 2048, %s6873, %s6861, 64, 64, 4
        $region60: #{tpu_custom_call.1} parent=55 // pred_fallthru
          _
      $region56: #{tpu_custom_call.1} parent=5 // pred_fallthru
        _
      %p6881 = scmp.le.s32.totalorder 2, %s18
      // Predicated region
      $region61: #{tpu_custom_call.1} parent=5 // pred_check
        %p6882 = pneg %p6881
      $region62: #{tpu_custom_call.1} parent=5 // pred_check_branch
        %6884 = sbr.rel (%p6882) target = $region64
      $region63: #{tpu_custom_call.1} parent=5 // pred_region
        %s6885 = ssub.s32 %s18, 2
        // Predicated region
        $region65: #{tpu_custom_call.1} parent=63 // pred_check
          %p6886 = pneg %p241
        $region66: #{tpu_custom_call.1} parent=63 // pred_check_branch
          %6888 = sbr.rel (%p6886) target = $region68
        $region67: #{tpu_custom_call.1} parent=63 // pred_region
          %s6889 = sand.u32 %s226, 1
          %s6890 = scalar_lea.sflag [#allocation5], %s6889
          %s6891 = sand.u32 %s226, 1
          %s6892 = smul.addr %s6891, 128
          %s6893 = scalar_lea.vmem [#allocation4], %s6892
          %6894 = dma.done %s6890, 2048
        $region68: #{tpu_custom_call.1} parent=63 // pred_fallthru
          _
      $region64: #{tpu_custom_call.1} parent=5 // pred_fallthru
        _
    $region6: #{tpu_custom_call.1} parent=1 // loop_footer
      %s22 = sadd.s32 1, %s18
    $region7: #{tpu_custom_call.1} parent=1 // loop_footer_branch
      %17 = sbr.rel target = $region3
    $region8: #{tpu_custom_call.1} parent=1 // loop_exit
      _
    %6895 = vsyncpa [#allocation5], 1
    %s6896 = scalar_lea.sflag [#allocation5], 1
    %6897 = vsyncpa %s6896, 1

</llo_original>
